<compile_context>
chip_gen: v6e
topology: v6e:2x2x1
jax: 0.10.0
libtpu: 0.0.40
codegen_flags: <defaults>
</compile_context>

<pallas_src>
import functools

import jax
import jax.numpy as jnp
from jax.experimental import pallas as pl
from jax.experimental.pallas import tpu as pltpu


# ----------------------------- Pallas kernel -------------------------------

def _mhsa_kernel(x_ref, wqkv_ref, ocat_ref, kcat_ref, o_ref, *, heads, d, n_pos):
    # x_ref    : [1, HW, C]        current batch
    # wqkv_ref : [C, 3*heads*d]    fused q|k|v projection (q columns pre-scaled)
    # ocat_ref : [HW, (H+W)*d]     query-position one-hot mask (repeated over d)
    # kcat_ref : [(H+W)*d, HW]     absolute rel-position embedding table
    # o_ref    : [1, HW, heads*d]
    C = heads * d
    x = x_ref[0]                                                        # [HW, C]

    # fused projection: one wide MXU matmul for q, k, v of all heads
    qkv = jnp.dot(x, wqkv_ref[...], preferred_element_type=jnp.float32)  # [HW, 3C]

    ocat = ocat_ref[...]                                                # [HW, n_pos*d]
    kcat = kcat_ref[...]                                                # [n_pos*d, HW]

    outs = []
    for h in range(heads):
        q = qkv[:, h * d:(h + 1) * d]                    # [HW, d] (already scaled)
        k = qkv[:, C + h * d:C + (h + 1) * d]            # [HW, d]
        v = qkv[:, 2 * C + h * d:2 * C + (h + 1) * d]    # [HW, d]

        # content logits (MXU)
        logits = jnp.dot(q, k.T, preferred_element_type=jnp.float32)    # [HW, HW]

        # relative-position logits (MXU): mask q by its own (row, col) one-hot,
        # then contract against the absolute rel-embedding table.
        qrel = jnp.tile(q, (1, n_pos)) * ocat                           # [HW, n_pos*d]
        logits = logits + jnp.dot(qrel, kcat,
                                  preferred_element_type=jnp.float32)   # [HW, HW]

        # softmax over keys (f32); reciprocal on the EUP (approx) instead of a
        # VALU divide.
        m = jnp.max(logits, axis=-1, keepdims=True)
        p = jnp.exp(logits - m)
        inv = pl.reciprocal(jnp.sum(p, axis=-1, keepdims=True), approx=True)
        w = p * inv

        outs.append(jnp.dot(w, v, preferred_element_type=jnp.float32))  # [HW, d]

    # single lane-dense store of all heads
    o_ref[0] = jnp.concatenate(outs, axis=-1)                           # [HW, heads*d]


# ------------------------------- wrapper ------------------------------------

def mhsa_pallas(x_nchw, w_q, w_k, w_v, rel_emb_h, rel_emb_w, heads):
    B, C, H, W = x_nchw.shape
    d = C // heads
    HW = H * W
    n_pos = H + W

    # NCHW -> [B, HW, C], float32 (matches .permute(0,2,3,1).float())
    x = jnp.transpose(x_nchw, (0, 2, 3, 1)).astype(jnp.float32).reshape(B, HW, C)

    # fused projection weights: [C, heads, d] -> [C, heads*d]; fold the 1/sqrt(d)
    # attention scale into the q weights (reference scales q before BOTH the
    # content and the relative logits, so this is exact).
    scale = float(d) ** -0.5
    wq_f = w_q.astype(jnp.float32).reshape(C, heads * d) * scale
    wk_f = w_k.astype(jnp.float32).reshape(C, heads * d)
    wv_f = w_v.astype(jnp.float32).reshape(C, heads * d)
    wqkv = jnp.concatenate([wq_f, wk_f, wv_f], axis=1)                  # [C, 3C]

    # query/key spatial coordinates (row-major flattening i = hq*W + wq)
    pos = jnp.arange(HW)
    hq = pos // W
    wq = pos % W

    # Ocat: one-hot of the query's own row / column, each repeated d times along
    # the lane dim so it aligns with tile(q, (1, H+W)).
    oh = (hq[:, None] == jnp.arange(H)[None, :]).astype(jnp.float32)    # [HW, H]
    ow = (wq[:, None] == jnp.arange(W)[None, :]).astype(jnp.float32)    # [HW, W]
    ocat = jnp.concatenate([jnp.repeat(oh, d, axis=1),
                            jnp.repeat(ow, d, axis=1)], axis=1)         # [HW, n_pos*d]

    # Kcat: absolute rel-embedding table.
    #   Kcat[hq'*d + d', j]       = rel_emb_h[hk_j - hq' + H - 1, d']
    #   Kcat[H*d + wq'*d + d', j] = rel_emb_w[wk_j - wq' + W - 1, d']
    idx_h = hq[None, :] - jnp.arange(H)[:, None] + (H - 1)              # [H, HW]
    idx_w = wq[None, :] - jnp.arange(W)[:, None] + (W - 1)              # [W, HW]
    kh = rel_emb_h.astype(jnp.float32)[idx_h]                           # [H, HW, d]
    kw = rel_emb_w.astype(jnp.float32)[idx_w]                           # [W, HW, d]
    kh = jnp.transpose(kh, (0, 2, 1)).reshape(H * d, HW)
    kw = jnp.transpose(kw, (0, 2, 1)).reshape(W * d, HW)
    kcat = jnp.concatenate([kh, kw], axis=0)                            # [n_pos*d, HW]

    out = pl.pallas_call(
        functools.partial(_mhsa_kernel, heads=heads, d=d, n_pos=n_pos),
        out_shape=jax.ShapeDtypeStruct((B, HW, heads * d), jnp.float32),
        grid_spec=pl.GridSpec(
            grid=(B,),
            in_specs=[
                pl.BlockSpec((1, HW, C), lambda b: (b, 0, 0)),
                pl.BlockSpec((C, 3 * C), lambda b: (0, 0)),
                pl.BlockSpec((HW, n_pos * d), lambda b: (0, 0)),
                pl.BlockSpec((n_pos * d, HW), lambda b: (0, 0)),
            ],
            out_specs=pl.BlockSpec((1, HW, heads * d), lambda b: (b, 0, 0)),
        ),
        compiler_params=pltpu.CompilerParams(
            dimension_semantics=("parallel",)),
    )(x, wqkv, ocat, kcat)

    # [B, HW, heads*d] -> [B, H, W, heads*d]  (pure reshape, no transpose)
    return out.reshape(B, H, W, heads * d)


# ----------------------- pure-JAX reference (PyTorch mirror) -----------------

def _rel_to_abs(x):
    bs, heads, length, _ = x.shape
    x = jnp.concatenate([x, jnp.zeros((bs, heads, length, 1), x.dtype)], axis=3)
    flat_x = x.reshape(bs, heads, -1)
    flat_x = jnp.concatenate(
        [flat_x, jnp.zeros((bs, heads, length - 1), x.dtype)], axis=2)
    final = flat_x.reshape(bs, heads, length + 1, 2 * length - 1)
    return final[:, :, :length, length - 1:]


def _relative_logits_1d(q, rel_k, transpose_mask):
    bs, heads, h, w, dim = q.shape
    rel_logits = jnp.einsum('bhxyd,md->bhxym', q, rel_k)
    rel_logits = rel_logits.reshape(-1, heads * h, w, 2 * w - 1)
    rel_logits = _rel_to_abs(rel_logits)
    rel_logits = rel_logits.reshape(-1, heads, h, w, w)
    rel_logits = jnp.expand_dims(rel_logits, 3)
    rel_logits = jnp.tile(rel_logits, (1, 1, 1, h, 1, 1))
    return jnp.transpose(rel_logits, transpose_mask)


def _relative_logits(q, rel_emb_h, rel_emb_w):
    rel_w = _relative_logits_1d(q, rel_emb_w, (0, 1, 2, 4, 3, 5))
    rel_h = _relative_logits_1d(
        jnp.transpose(q, (0, 1, 3, 2, 4)), rel_emb_h, (0, 1, 4, 2, 5, 3))
    return rel_h + rel_w


def mhsa_reference(x_nchw, w_q, w_k, w_v, rel_emb_h, rel_emb_w, heads):
    B, C, H, W = x_nchw.shape
    d = C // heads
    xp = jnp.transpose(x_nchw, (0, 2, 3, 1)).astype(jnp.float32)
    q = jnp.einsum('bhwc,cnp->bnhwp', xp, w_q.astype(jnp.float32))
    k = jnp.einsum('bhwc,cnp->bnhwp', xp, w_k.astype(jnp.float32))
    v = jnp.einsum('bhwc,cnp->bnhwp', xp, w_v.astype(jnp.float32))
    q = q * d ** (-0.5)
    logits = jnp.einsum('bnhwd,bnpqd->bnhwpq', q, k)
    logits = logits + _relative_logits(q, rel_emb_h.astype(jnp.float32),
                                       rel_emb_w.astype(jnp.float32))
    weights = jax.nn.softmax(logits.reshape(B, heads, H, W, H * W), axis=-1)
    weights = weights.reshape(B, heads, H, W, H, W)
    attn = jnp.einsum('bnhwpq,bnpqd->bhwnd', weights, v)
    return attn.reshape(B, H, W, heads * d)


# --------------------------------- main --------------------------------------

if __name__ == "__main__":
    B, C, H, W = 2, 32, 8, 8
    heads = 4
    d = C // heads

    key = jax.random.PRNGKey(0)
    kx, kq, kk, kv, krh, krw = jax.random.split(key, 6)

    x = jax.random.normal(kx, (B, C, H, W), dtype=jnp.float32)
    # GroupPointWise weights: [in_channels, heads, proj_channels // heads], std=0.01
    w_q = 0.01 * jax.random.normal(kq, (C, heads, d), dtype=jnp.float32)
    w_k = 0.01 * jax.random.normal(kk, (C, heads, d), dtype=jnp.float32)
    w_v = 0.01 * jax.random.normal(kv, (C, heads, d), dtype=jnp.float32)
    # relative embeddings: [2*H-1, d] / [2*W-1, d], std = d ** -0.5
    rel_emb_h = (d ** -0.5) * jax.random.normal(krh, (2 * H - 1, d), dtype=jnp.float32)
    rel_emb_w = (d ** -0.5) * jax.random.normal(krw, (2 * W - 1, d), dtype=jnp.float32)

    out = mhsa_pallas(x, w_q, w_k, w_v, rel_emb_h, rel_emb_w, heads)
    out = jax.block_until_ready(out)

    ref = mhsa_reference(x, w_q, w_k, w_v, rel_emb_h, rel_emb_w, heads)
    ref = jax.block_until_ready(ref)

    assert out.shape == (B, H, W, heads * d), out.shape
    # small extra atol margin for the EUP approx-reciprocal softmax denominator
    assert jnp.allclose(out, ref, atol=2e-4, rtol=1e-3), (
        float(jnp.max(jnp.abs(out - ref))))

    print("KERNEL_OK")
</pallas_src>

<mosaic_0001>
module attributes {stable_mosaic.version = 11 : i64} {
  func.func @_mhsa_kernel(%arg0: i32, %arg1: memref<1x64x32xf32, #tpu.memory_space<vmem>>, %arg2: memref<32x96xf32, #tpu.memory_space<vmem>>, %arg3: memref<64x128xf32, #tpu.memory_space<vmem>>, %arg4: memref<128x64xf32, #tpu.memory_space<vmem>>, %arg5: memref<1x64x32xf32, #tpu.memory_space<vmem>>) attributes {dimension_semantics = [#tpu.dimension_semantics<parallel>], iteration_bounds = array<i64: 2>, scalar_prefetch = 0 : i64, scratch_operands = 0 : i64, tpu.core_type = #tpu.core_type<tc>, window_params = [{transform_indices = @transform_0, window_bounds = array<i64: 1, 64, 32>}, {pipeline_mode = #tpu.pipeline_mode<synchronous>, transform_indices = @transform_1, window_bounds = array<i64: 32, 96>}, {pipeline_mode = #tpu.pipeline_mode<synchronous>, transform_indices = @transform_2, window_bounds = array<i64: 64, 128>}, {pipeline_mode = #tpu.pipeline_mode<synchronous>, transform_indices = @transform_3, window_bounds = array<i64: 128, 64>}, {transform_indices = @transform_4, window_bounds = array<i64: 1, 64, 32>}]} {
    %c0 = arith.constant 0 : index
    %c0_0 = arith.constant 0 : index
    %c0_1 = arith.constant 0 : index
    %0 = vector.load %arg1[%c0, %c0_0, %c0_1] : memref<1x64x32xf32, #tpu.memory_space<vmem>>, vector<1x64x32xf32>
    %1 = vector.shape_cast %0 : vector<1x64x32xf32> to vector<64x32xf32>
    %c0_2 = arith.constant 0 : index
    %c0_3 = arith.constant 0 : index
    %2 = vector.load %arg2[%c0_2, %c0_3] : memref<32x96xf32, #tpu.memory_space<vmem>>, vector<32x96xf32>
    %cst = arith.constant dense<0.000000e+00> : vector<64x96xf32>
    %3 = tpu.matmul %1, %2, %cst {dimension_numbers = #tpu.dot_dimension_numbers<[1], [0], [0], [1], [0, 0, 1, 1], [], []>} : vector<64x32xf32>, vector<32x96xf32>, vector<64x96xf32> -> vector<64x96xf32>
    %c0_4 = arith.constant 0 : index
    %c0_5 = arith.constant 0 : index
    %4 = vector.load %arg3[%c0_4, %c0_5] : memref<64x128xf32, #tpu.memory_space<vmem>>, vector<64x128xf32>
    %c0_6 = arith.constant 0 : index
    %c0_7 = arith.constant 0 : index
    %5 = vector.load %arg4[%c0_6, %c0_7] : memref<128x64xf32, #tpu.memory_space<vmem>>, vector<128x64xf32>
    %6 = vector.extract_strided_slice %3 {offsets = [0, 0], sizes = [64, 8], strides = [1, 1]} : vector<64x96xf32> to vector<64x8xf32>
    %7 = vector.extract_strided_slice %3 {offsets = [0, 32], sizes = [64, 8], strides = [1, 1]} : vector<64x96xf32> to vector<64x8xf32>
    %8 = vector.extract_strided_slice %3 {offsets = [0, 64], sizes = [64, 8], strides = [1, 1]} : vector<64x96xf32> to vector<64x8xf32>
    %9 = tpu.transpose %7, [1, 0] : vector<64x8xf32> -> vector<8x64xf32>
    %cst_8 = arith.constant dense<0.000000e+00> : vector<64x64xf32>
    %10 = tpu.matmul %6, %9, %cst_8 {dimension_numbers = #tpu.dot_dimension_numbers<[1], [0], [0], [1], [0, 0, 1, 1], [], []>} : vector<64x8xf32>, vector<8x64xf32>, vector<64x64xf32> -> vector<64x64xf32>
    %11 = tpu.concatenate %6, %6, %6, %6, %6, %6, %6, %6, %6, %6, %6, %6, %6, %6, %6, %6 in 1 : vector<64x8xf32>, vector<64x8xf32>, vector<64x8xf32>, vector<64x8xf32>, vector<64x8xf32>, vector<64x8xf32>, vector<64x8xf32>, vector<64x8xf32>, vector<64x8xf32>, vector<64x8xf32>, vector<64x8xf32>, vector<64x8xf32>, vector<64x8xf32>, vector<64x8xf32>, vector<64x8xf32>, vector<64x8xf32> -> vector<64x128xf32>
    %12 = arith.mulf %11, %4 : vector<64x128xf32>
    %cst_9 = arith.constant dense<0.000000e+00> : vector<64x64xf32>
    %13 = tpu.matmul %12, %5, %cst_9 {dimension_numbers = #tpu.dot_dimension_numbers<[1], [0], [0], [1], [0, 0, 1, 1], [], []>} : vector<64x128xf32>, vector<128x64xf32>, vector<64x64xf32> -> vector<64x64xf32>
    %14 = arith.addf %10, %13 : vector<64x64xf32>
    %cst_10 = arith.constant dense<0xFF800000> : vector<64xf32>
    %15 = vector.multi_reduction <maximumf>, %14, %cst_10 [1] : vector<64x64xf32> to vector<64xf32>
    %16 = vector.shape_cast %15 : vector<64xf32> to vector<64x1xf32>
    %17 = vector.broadcast %16 : vector<64x1xf32> to vector<64x64xf32>
    %18 = arith.subf %14, %17 : vector<64x64xf32>
    %19 = math.exp %18 : vector<64x64xf32>
    %cst_11 = arith.constant dense<0.000000e+00> : vector<64xf32>
    %20 = vector.multi_reduction <add>, %19, %cst_11 [1] : vector<64x64xf32> to vector<64xf32>
    %21 = vector.shape_cast %20 : vector<64xf32> to vector<64x1xf32>
    %22 = tpu.reciprocal %21 {approx = true} : vector<64x1xf32> -> vector<64x1xf32>
    %23 = vector.broadcast %22 : vector<64x1xf32> to vector<64x64xf32>
    %24 = arith.mulf %19, %23 : vector<64x64xf32>
    %cst_12 = arith.constant dense<0.000000e+00> : vector<64x8xf32>
    %25 = tpu.matmul %24, %8, %cst_12 {dimension_numbers = #tpu.dot_dimension_numbers<[1], [0], [0], [1], [0, 0, 1, 1], [], []>} : vector<64x64xf32>, vector<64x8xf32>, vector<64x8xf32> -> vector<64x8xf32>
    %26 = vector.extract_strided_slice %3 {offsets = [0, 8], sizes = [64, 8], strides = [1, 1]} : vector<64x96xf32> to vector<64x8xf32>
    %27 = vector.extract_strided_slice %3 {offsets = [0, 40], sizes = [64, 8], strides = [1, 1]} : vector<64x96xf32> to vector<64x8xf32>
    %28 = vector.extract_strided_slice %3 {offsets = [0, 72], sizes = [64, 8], strides = [1, 1]} : vector<64x96xf32> to vector<64x8xf32>
    %29 = tpu.transpose %27, [1, 0] : vector<64x8xf32> -> vector<8x64xf32>
    %cst_13 = arith.constant dense<0.000000e+00> : vector<64x64xf32>
    %30 = tpu.matmul %26, %29, %cst_13 {dimension_numbers = #tpu.dot_dimension_numbers<[1], [0], [0], [1], [0, 0, 1, 1], [], []>} : vector<64x8xf32>, vector<8x64xf32>, vector<64x64xf32> -> vector<64x64xf32>
    %31 = tpu.concatenate %26, %26, %26, %26, %26, %26, %26, %26, %26, %26, %26, %26, %26, %26, %26, %26 in 1 : vector<64x8xf32>, vector<64x8xf32>, vector<64x8xf32>, vector<64x8xf32>, vector<64x8xf32>, vector<64x8xf32>, vector<64x8xf32>, vector<64x8xf32>, vector<64x8xf32>, vector<64x8xf32>, vector<64x8xf32>, vector<64x8xf32>, vector<64x8xf32>, vector<64x8xf32>, vector<64x8xf32>, vector<64x8xf32> -> vector<64x128xf32>
    %32 = arith.mulf %31, %4 : vector<64x128xf32>
    %cst_14 = arith.constant dense<0.000000e+00> : vector<64x64xf32>
    %33 = tpu.matmul %32, %5, %cst_14 {dimension_numbers = #tpu.dot_dimension_numbers<[1], [0], [0], [1], [0, 0, 1, 1], [], []>} : vector<64x128xf32>, vector<128x64xf32>, vector<64x64xf32> -> vector<64x64xf32>
    %34 = arith.addf %30, %33 : vector<64x64xf32>
    %cst_15 = arith.constant dense<0xFF800000> : vector<64xf32>
    %35 = vector.multi_reduction <maximumf>, %34, %cst_15 [1] : vector<64x64xf32> to vector<64xf32>
    %36 = vector.shape_cast %35 : vector<64xf32> to vector<64x1xf32>
    %37 = vector.broadcast %36 : vector<64x1xf32> to vector<64x64xf32>
    %38 = arith.subf %34, %37 : vector<64x64xf32>
    %39 = math.exp %38 : vector<64x64xf32>
    %cst_16 = arith.constant dense<0.000000e+00> : vector<64xf32>
    %40 = vector.multi_reduction <add>, %39, %cst_16 [1] : vector<64x64xf32> to vector<64xf32>
    %41 = vector.shape_cast %40 : vector<64xf32> to vector<64x1xf32>
    %42 = tpu.reciprocal %41 {approx = true} : vector<64x1xf32> -> vector<64x1xf32>
    %43 = vector.broadcast %42 : vector<64x1xf32> to vector<64x64xf32>
    %44 = arith.mulf %39, %43 : vector<64x64xf32>
    %cst_17 = arith.constant dense<0.000000e+00> : vector<64x8xf32>
    %45 = tpu.matmul %44, %28, %cst_17 {dimension_numbers = #tpu.dot_dimension_numbers<[1], [0], [0], [1], [0, 0, 1, 1], [], []>} : vector<64x64xf32>, vector<64x8xf32>, vector<64x8xf32> -> vector<64x8xf32>
    %46 = vector.extract_strided_slice %3 {offsets = [0, 16], sizes = [64, 8], strides = [1, 1]} : vector<64x96xf32> to vector<64x8xf32>
    %47 = vector.extract_strided_slice %3 {offsets = [0, 48], sizes = [64, 8], strides = [1, 1]} : vector<64x96xf32> to vector<64x8xf32>
    %48 = vector.extract_strided_slice %3 {offsets = [0, 80], sizes = [64, 8], strides = [1, 1]} : vector<64x96xf32> to vector<64x8xf32>
    %49 = tpu.transpose %47, [1, 0] : vector<64x8xf32> -> vector<8x64xf32>
    %cst_18 = arith.constant dense<0.000000e+00> : vector<64x64xf32>
    %50 = tpu.matmul %46, %49, %cst_18 {dimension_numbers = #tpu.dot_dimension_numbers<[1], [0], [0], [1], [0, 0, 1, 1], [], []>} : vector<64x8xf32>, vector<8x64xf32>, vector<64x64xf32> -> vector<64x64xf32>
    %51 = tpu.concatenate %46, %46, %46, %46, %46, %46, %46, %46, %46, %46, %46, %46, %46, %46, %46, %46 in 1 : vector<64x8xf32>, vector<64x8xf32>, vector<64x8xf32>, vector<64x8xf32>, vector<64x8xf32>, vector<64x8xf32>, vector<64x8xf32>, vector<64x8xf32>, vector<64x8xf32>, vector<64x8xf32>, vector<64x8xf32>, vector<64x8xf32>, vector<64x8xf32>, vector<64x8xf32>, vector<64x8xf32>, vector<64x8xf32> -> vector<64x128xf32>
    %52 = arith.mulf %51, %4 : vector<64x128xf32>
    %cst_19 = arith.constant dense<0.000000e+00> : vector<64x64xf32>
    %53 = tpu.matmul %52, %5, %cst_19 {dimension_numbers = #tpu.dot_dimension_numbers<[1], [0], [0], [1], [0, 0, 1, 1], [], []>} : vector<64x128xf32>, vector<128x64xf32>, vector<64x64xf32> -> vector<64x64xf32>
    %54 = arith.addf %50, %53 : vector<64x64xf32>
    %cst_20 = arith.constant dense<0xFF800000> : vector<64xf32>
    %55 = vector.multi_reduction <maximumf>, %54, %cst_20 [1] : vector<64x64xf32> to vector<64xf32>
    %56 = vector.shape_cast %55 : vector<64xf32> to vector<64x1xf32>
    %57 = vector.broadcast %56 : vector<64x1xf32> to vector<64x64xf32>
    %58 = arith.subf %54, %57 : vector<64x64xf32>
    %59 = math.exp %58 : vector<64x64xf32>
    %cst_21 = arith.constant dense<0.000000e+00> : vector<64xf32>
    %60 = vector.multi_reduction <add>, %59, %cst_21 [1] : vector<64x64xf32> to vector<64xf32>
    %61 = vector.shape_cast %60 : vector<64xf32> to vector<64x1xf32>
    %62 = tpu.reciprocal %61 {approx = true} : vector<64x1xf32> -> vector<64x1xf32>
    %63 = vector.broadcast %62 : vector<64x1xf32> to vector<64x64xf32>
    %64 = arith.mulf %59, %63 : vector<64x64xf32>
    %cst_22 = arith.constant dense<0.000000e+00> : vector<64x8xf32>
    %65 = tpu.matmul %64, %48, %cst_22 {dimension_numbers = #tpu.dot_dimension_numbers<[1], [0], [0], [1], [0, 0, 1, 1], [], []>} : vector<64x64xf32>, vector<64x8xf32>, vector<64x8xf32> -> vector<64x8xf32>
    %66 = vector.extract_strided_slice %3 {offsets = [0, 24], sizes = [64, 8], strides = [1, 1]} : vector<64x96xf32> to vector<64x8xf32>
    %67 = vector.extract_strided_slice %3 {offsets = [0, 56], sizes = [64, 8], strides = [1, 1]} : vector<64x96xf32> to vector<64x8xf32>
    %68 = vector.extract_strided_slice %3 {offsets = [0, 88], sizes = [64, 8], strides = [1, 1]} : vector<64x96xf32> to vector<64x8xf32>
    %69 = tpu.transpose %67, [1, 0] : vector<64x8xf32> -> vector<8x64xf32>
    %cst_23 = arith.constant dense<0.000000e+00> : vector<64x64xf32>
    %70 = tpu.matmul %66, %69, %cst_23 {dimension_numbers = #tpu.dot_dimension_numbers<[1], [0], [0], [1], [0, 0, 1, 1], [], []>} : vector<64x8xf32>, vector<8x64xf32>, vector<64x64xf32> -> vector<64x64xf32>
    %71 = tpu.concatenate %66, %66, %66, %66, %66, %66, %66, %66, %66, %66, %66, %66, %66, %66, %66, %66 in 1 : vector<64x8xf32>, vector<64x8xf32>, vector<64x8xf32>, vector<64x8xf32>, vector<64x8xf32>, vector<64x8xf32>, vector<64x8xf32>, vector<64x8xf32>, vector<64x8xf32>, vector<64x8xf32>, vector<64x8xf32>, vector<64x8xf32>, vector<64x8xf32>, vector<64x8xf32>, vector<64x8xf32>, vector<64x8xf32> -> vector<64x128xf32>
    %72 = arith.mulf %71, %4 : vector<64x128xf32>
    %cst_24 = arith.constant dense<0.000000e+00> : vector<64x64xf32>
    %73 = tpu.matmul %72, %5, %cst_24 {dimension_numbers = #tpu.dot_dimension_numbers<[1], [0], [0], [1], [0, 0, 1, 1], [], []>} : vector<64x128xf32>, vector<128x64xf32>, vector<64x64xf32> -> vector<64x64xf32>
    %74 = arith.addf %70, %73 : vector<64x64xf32>
    %cst_25 = arith.constant dense<0xFF800000> : vector<64xf32>
    %75 = vector.multi_reduction <maximumf>, %74, %cst_25 [1] : vector<64x64xf32> to vector<64xf32>
    %76 = vector.shape_cast %75 : vector<64xf32> to vector<64x1xf32>
    %77 = vector.broadcast %76 : vector<64x1xf32> to vector<64x64xf32>
    %78 = arith.subf %74, %77 : vector<64x64xf32>
    %79 = math.exp %78 : vector<64x64xf32>
    %cst_26 = arith.constant dense<0.000000e+00> : vector<64xf32>
    %80 = vector.multi_reduction <add>, %79, %cst_26 [1] : vector<64x64xf32> to vector<64xf32>
    %81 = vector.shape_cast %80 : vector<64xf32> to vector<64x1xf32>
    %82 = tpu.reciprocal %81 {approx = true} : vector<64x1xf32> -> vector<64x1xf32>
    %83 = vector.broadcast %82 : vector<64x1xf32> to vector<64x64xf32>
    %84 = arith.mulf %79, %83 : vector<64x64xf32>
    %cst_27 = arith.constant dense<0.000000e+00> : vector<64x8xf32>
    %85 = tpu.matmul %84, %68, %cst_27 {dimension_numbers = #tpu.dot_dimension_numbers<[1], [0], [0], [1], [0, 0, 1, 1], [], []>} : vector<64x64xf32>, vector<64x8xf32>, vector<64x8xf32> -> vector<64x8xf32>
    %86 = tpu.concatenate %25, %45, %65, %85 in 1 : vector<64x8xf32>, vector<64x8xf32>, vector<64x8xf32>, vector<64x8xf32> -> vector<64x32xf32>
    %c0_28 = arith.constant 0 : index
    %c0_29 = arith.constant 0 : index
    %c0_30 = arith.constant 0 : index
    %87 = vector.load %arg5[%c0_28, %c0_29, %c0_30] : memref<1x64x32xf32, #tpu.memory_space<vmem>>, vector<1x64x32xf32>
    %88 = vector.shape_cast %87 : vector<1x64x32xf32> to vector<64x32xf32>
    %89 = vector.shape_cast %86 : vector<64x32xf32> to vector<1x64x32xf32>
    tpu.vector_store %arg5[%c0_28, %c0_29, %c0_30], %89 {strides = array<i32>} : memref<1x64x32xf32, #tpu.memory_space<vmem>>, vector<1x64x32xf32>,
    return
  }
  func.func @transform_0(%arg0: i32) -> (i32, i32, i32) {
    %c0_i32 = arith.constant 0 : i32
    %c0_i32_0 = arith.constant 0 : i32
    %c0_i32_1 = arith.constant 0 : i32
    return %arg0, %c0_i32, %c0_i32_0 : i32, i32, i32
  }
  func.func @transform_1(%arg0: i32) -> (i32, i32) {
    %c0_i32 = arith.constant 0 : i32
    %c0_i32_0 = arith.constant 0 : i32
    %c0_i32_1 = arith.constant 0 : i32
    return %c0_i32, %c0_i32_0 : i32, i32
  }
  func.func @transform_2(%arg0: i32) -> (i32, i32) {
    %c0_i32 = arith.constant 0 : i32
    %c0_i32_0 = arith.constant 0 : i32
    %c0_i32_1 = arith.constant 0 : i32
    return %c0_i32, %c0_i32_0 : i32, i32
  }
  func.func @transform_3(%arg0: i32) -> (i32, i32) {
    %c0_i32 = arith.constant 0 : i32
    %c0_i32_0 = arith.constant 0 : i32
    %c0_i32_1 = arith.constant 0 : i32
    return %c0_i32, %c0_i32_0 : i32, i32
  }
  func.func @transform_4(%arg0: i32) -> (i32, i32, i32) {
    %c0_i32 = arith.constant 0 : i32
    %c0_i32_0 = arith.constant 0 : i32
    %c0_i32_1 = arith.constant 0 : i32
    return %arg0, %c0_i32, %c0_i32_0 : i32, i32, i32
  }
}

</mosaic_0001>

<llo_original>
// kernel: tpu_custom_call.1
$region0: #{tpu_custom_call.1}
  #allocation0 [shape = 'u32[]', space=smem, size = 0x4, offset = 0x4, fixed_abs, tag = 'smem constant byte address 0x4 - core index']
  #allocation1 [shape = 'u32[144,128]{1,0:T(1,128)}', space=vmem, size = 0x12000, scoped, tag = 'internal scratch']
  %s0 = inlined_call_operand.vmem [shape: f32[2,64,32], index: 0, kind: input, shape index: {}]
  %s1 = inlined_call_operand.vmem [shape: f32[32,96], index: 1, kind: input, shape index: {}]
  %s2 = inlined_call_operand.vmem [shape: f32[64,128], index: 2, kind: input, shape index: {}]
  %s3 = inlined_call_operand.vmem [shape: f32[128,64], index: 3, kind: input, shape index: {}]
  %s4 = inlined_call_operand.vmem [shape: f32[2,64,32], index: 4, kind: output, shape index: {}]
  %s5 = sld [smem:[#allocation0]]
  $region49: #{tpu_custom_call.1} parent=0
    _
  %s7 = ssub.s32 1, %s5
  %s8 = scalar_select 0, %s7, %s5
  loop: start=0, step=1, limit=4
  $region2: #{tpu_custom_call.1} parent=0 // loop_pre_header
    _
  $region3: #{tpu_custom_call.1} parent=0 // loop_header
    %s10 = sphi 0, %s14
    %p11 = scmp.ge.s32.totalorder %s10, 4
    %s20 = sphi 0, %s22
    %s23 = sphi 0, %s20
    %s24 = sphi 0, %s23
    %s40 = sphi 0, %s24
    %s44 = sphi 0, %s44
    %s46 = sphi 0, %s44
    %s47 = sphi 0, %s46
    %s61 = sphi 0, %s47
    %s65 = sphi 0, %s65
    %s67 = sphi 0, %s65
    %s68 = sphi 0, %s67
    %s82 = sphi 0, %s68
    %s86 = sphi 0, %s86
    %s88 = sphi 0, %s86
    %s89 = sphi 0, %s88
    %s103 = sphi 0, %s89
    %s109 = sphi 0, %s111
    %s112 = sphi 0, %s109
    %s113 = sphi 0, %s112
    %s129 = sphi 0, %s113
  $region4: #{tpu_custom_call.1} parent=0 // loop_header_branch
    %13 = sbr.rel (%p11) target = $region8
  $region5: #{tpu_custom_call.1} parent=0 // loop_body
    %s15 = ssub.s32 %s10, 1
    %s16 = ssub.s32 %s10, 2
    %s17 = sadd.s32 %s10, 1
    %s18 = ssub.s32 %s10, %s17
    %p19 = scmp.eq.s32.totalorder %s18, 0
    %s21 = sadd.s32 %s20, 1
    %s22 = scalar_select %p19, %s20, %s21
    %p25 = pneg %p19
    %p26 = scmp.eq.s32.totalorder %s10, 1
    %p27 = por %p25, %p26
    %p28 = scmp.ne.s32.totalorder %s20, %s23
    %p29 = scmp.eq.s32.totalorder %s10, 0
    %p30 = por %p28, %p29
    %p31 = scmp.ne.s32.totalorder %s20, %s23
    %p32 = scmp.eq.s32.totalorder %s15, 1
    %p33 = por %p31, %p32
    %p34 = scmp.ne.s32.totalorder %s23, %s24
    %p35 = scmp.eq.s32.totalorder %s15, 0
    %p36 = por %p34, %p35
    %p37 = scmp.ne.s32.totalorder %s23, %s24
    %p38 = scmp.eq.s32.totalorder %s16, 1
    %p39 = por %p37, %p38
    %p41 = scmp.ne.s32.totalorder %s24, %s40
    %p42 = scmp.eq.s32.totalorder %s16, 0
    %p43 = por %p41, %p42
    %s45 = sadd.s32 %s44, 1
    %p48 = scmp.eq.s32.totalorder %s10, 1
    %p49 = scmp.ne.s32.totalorder %s44, %s46
    %p50 = scmp.eq.s32.totalorder %s10, 0
    %p51 = por %p49, %p50
    %p52 = scmp.ne.s32.totalorder %s44, %s46
    %p53 = scmp.eq.s32.totalorder %s15, 1
    %p54 = por %p52, %p53
    %p55 = scmp.ne.s32.totalorder %s46, %s47
    %p56 = scmp.eq.s32.totalorder %s15, 0
    %p57 = por %p55, %p56
    %p58 = scmp.ne.s32.totalorder %s46, %s47
    %p59 = scmp.eq.s32.totalorder %s16, 1
    %p60 = por %p58, %p59
    %p62 = scmp.ne.s32.totalorder %s47, %s61
    %p63 = scmp.eq.s32.totalorder %s16, 0
    %p64 = por %p62, %p63
    %s66 = sadd.s32 %s65, 1
    %p69 = scmp.eq.s32.totalorder %s10, 1
    %p70 = scmp.ne.s32.totalorder %s65, %s67
    %p71 = scmp.eq.s32.totalorder %s10, 0
    %p72 = por %p70, %p71
    %p73 = scmp.ne.s32.totalorder %s65, %s67
    %p74 = scmp.eq.s32.totalorder %s15, 1
    %p75 = por %p73, %p74
    %p76 = scmp.ne.s32.totalorder %s67, %s68
    %p77 = scmp.eq.s32.totalorder %s15, 0
    %p78 = por %p76, %p77
    %p79 = scmp.ne.s32.totalorder %s67, %s68
    %p80 = scmp.eq.s32.totalorder %s16, 1
    %p81 = por %p79, %p80
    %p83 = scmp.ne.s32.totalorder %s68, %s82
    %p84 = scmp.eq.s32.totalorder %s16, 0
    %p85 = por %p83, %p84
    %s87 = sadd.s32 %s86, 1
    %p90 = scmp.eq.s32.totalorder %s10, 1
    %p91 = scmp.ne.s32.totalorder %s86, %s88
    %p92 = scmp.eq.s32.totalorder %s10, 0
    %p93 = por %p91, %p92
    %p94 = scmp.ne.s32.totalorder %s86, %s88
    %p95 = scmp.eq.s32.totalorder %s15, 1
    %p96 = por %p94, %p95
    %p97 = scmp.ne.s32.totalorder %s88, %s89
    %p98 = scmp.eq.s32.totalorder %s15, 0
    %p99 = por %p97, %p98
    %p100 = scmp.ne.s32.totalorder %s88, %s89
    %p101 = scmp.eq.s32.totalorder %s16, 1
    %p102 = por %p100, %p101
    %p104 = scmp.ne.s32.totalorder %s89, %s103
    %p105 = scmp.eq.s32.totalorder %s16, 0
    %p106 = por %p104, %p105
    %s107 = ssub.s32 %s10, %s17
    %p108 = scmp.eq.s32.totalorder %s107, 0
    %s110 = sadd.s32 %s109, 1
    %s111 = scalar_select %p108, %s109, %s110
    %p114 = pneg %p108
    %p115 = scmp.eq.s32.totalorder %s10, 1
    %p116 = por %p114, %p115
    %p117 = scmp.ne.s32.totalorder %s109, %s112
    %p118 = scmp.eq.s32.totalorder %s10, 0
    %p119 = por %p117, %p118
    %p120 = scmp.ne.s32.totalorder %s109, %s112
    %p121 = scmp.eq.s32.totalorder %s15, 1
    %p122 = por %p120, %p121
    %p123 = scmp.ne.s32.totalorder %s112, %s113
    %p124 = scmp.eq.s32.totalorder %s15, 0
    %p125 = por %p123, %p124
    %p126 = scmp.ne.s32.totalorder %s112, %s113
    %p127 = scmp.eq.s32.totalorder %s16, 1
    %p128 = por %p126, %p127
    %p130 = scmp.ne.s32.totalorder %s113, %s129
    %p131 = scmp.eq.s32.totalorder %s16, 0
    %p132 = por %p130, %p131
    %p133 = scmp.le.s32.totalorder 1, %s10
    %p134 = scmp.lt.s32.totalorder %s10, 3
    %p135 = pnand %p133, %p134
    %p136 = pneg %p135
    // Predicated region
    $region9: #{tpu_custom_call.1} parent=5 // pred_check
      _
    $region10: #{tpu_custom_call.1} parent=5 // pred_check_branch
      %138 = sbr.rel (%p135) target = $region12
    $region11: #{tpu_custom_call.1} parent=5 // pred_region
      %s139 = ssub.s32 %s10, 1
      // Predicated region
      $region13: #{tpu_custom_call.1} parent=11 // pred_check
        %p140 = pneg %p57
      $region14: #{tpu_custom_call.1} parent=11 // pred_check_branch
        %142 = sbr.rel (%p140) target = $region16
      $region15: #{tpu_custom_call.1} parent=11 // pred_region
        _
      $region16: #{tpu_custom_call.1} parent=11 // pred_fallthru
        _
      // Predicated region
      $region17: #{tpu_custom_call.1} parent=11 // pred_check
        %p143 = pneg %p78
      $region18: #{tpu_custom_call.1} parent=11 // pred_check_branch
        %145 = sbr.rel (%p143) target = $region20
      $region19: #{tpu_custom_call.1} parent=11 // pred_region
        _
      $region20: #{tpu_custom_call.1} parent=11 // pred_fallthru
        _
      // Predicated region
      $region21: #{tpu_custom_call.1} parent=11 // pred_check
        %p146 = pneg %p99
      $region22: #{tpu_custom_call.1} parent=11 // pred_check_branch
        %148 = sbr.rel (%p146) target = $region24
      $region23: #{tpu_custom_call.1} parent=11 // pred_region
        _
      $region24: #{tpu_custom_call.1} parent=11 // pred_fallthru
        _
    $region12: #{tpu_custom_call.1} parent=5 // pred_fallthru
      _
    %p149 = scmp.lt.s32.totalorder %s10, 2
    // Predicated region
    $region25: #{tpu_custom_call.1} parent=5 // pred_check
      %p150 = pneg %p149
    $region26: #{tpu_custom_call.1} parent=5 // pred_check_branch
      %152 = sbr.rel (%p150) target = $region28
    $region27: #{tpu_custom_call.1} parent=5 // pred_region
      // Predicated region
      $region29: #{tpu_custom_call.1} parent=27 // pred_check
        %p153 = pneg %p30
      $region30: #{tpu_custom_call.1} parent=27 // pred_check_branch
        %155 = sbr.rel (%p153) target = $region32
      $region31: #{tpu_custom_call.1} parent=27 // pred_region
        %p156 = scmp.lt.s32.totalorder %s10, 1
        %s157 = scalar_select %p156, %s10, 1
        %s158 = smul.addr %s157, 8
        %s159 = smul.addr %s158, 8
        %s160 = scalar_lea.vmem %s0, %s159
      $region32: #{tpu_custom_call.1} parent=27 // pred_fallthru
        _
    $region28: #{tpu_custom_call.1} parent=5 // pred_fallthru
      _
    %p161 = scmp.le.s32.totalorder 1, %s10
    %p162 = scmp.lt.s32.totalorder %s10, 3
    %p163 = pnand %p161, %p162
    %p164 = pneg %p163
    // Predicated region
    $region33: #{tpu_custom_call.1} parent=5 // pred_check
      _
    $region34: #{tpu_custom_call.1} parent=5 // pred_check_branch
      %166 = sbr.rel (%p163) target = $region36
    $region35: #{tpu_custom_call.1} parent=5 // pred_region
      %s167 = ssub.s32 %s10, 1
      %p168 = scmp.lt.s32.totalorder %s15, 1
      %s169 = scalar_select %p168, %s15, 1
      %s170 = smul.addr %s169, 8
      %s171 = smul.addr %s170, 8
      %s172 = scalar_lea.vmem %s0, %s171
      %p173 = pneg %p36
      %p174 = pneg %p33
      %p175 = pneg %p57
      %p176 = pneg %p54
      %p177 = pneg %p78
      %p178 = pneg %p75
      %p179 = pneg %p99
      %p180 = pneg %p96
      %p181 = pneg %p125
      %p182 = pneg %p122
      %p183 = scmp.lt.s32.totalorder %s15, 1
      %s184 = scalar_select %p183, %s15, 1
      %s185 = smul.addr %s184, 8
      %s186 = smul.addr %s185, 8
      %s187 = scalar_lea.vmem %s4, %s186
      %p188 = scmp.lt.s32.totalorder %s15, 1
      %s189 = scalar_select %p188, %s15, 1
      %s190 = smul.addr %s189, 8
      %s191 = smul.addr %s190, 8
      %s192 = scalar_lea.vmem %s0, %s191
      %p193 = scmp.lt.s32.totalorder %s15, 1
      %s194 = scalar_select %p193, %s15, 1
      %s195 = smul.addr %s194, 8
      %s196 = smul.addr %s195, 8
      %s197 = scalar_lea.vmem %s4, %s196
      %v198 = vld [vmem:[%s192] sm:$0xff]
      %v199 = vld [vmem:[%s192 + $0x8] sm:$0xff]
      %v200 = vld [vmem:[%s192 + $0x10] sm:$0xff]
      %v201 = vld [vmem:[%s192 + $0x18] sm:$0xff]
      %v202 = vld [vmem:[%s192 + $0x20] sm:$0xff]
      %v203 = vld [vmem:[%s192 + $0x28] sm:$0xff]
      %v204 = vld [vmem:[%s192 + $0x30] sm:$0xff]
      %v205 = vld [vmem:[%s192 + $0x38] sm:$0xff]
      %v206 = vld [vmem:[%s1] sm:$0xff]
      %v207 = vld [vmem:[%s1 + $0x8] sm:$0xff]
      %v208 = vld [vmem:[%s1 + $0x10] sm:$0xff]
      %v209 = vld [vmem:[%s1 + $0x18] sm:$0xff]
      %vm210 = vcmask 261120
      %v212 = vsel %vm210, %v198, 0
      %v215 = vsel %vm210, %v199, 0
      %v218 = vsel %vm210, %v200, 0
      %v221 = vsel %vm210, %v201, 0
      %v224 = vsel %vm210, %v202, 0
      %v227 = vsel %vm210, %v203, 0
      %v230 = vsel %vm210, %v204, 0
      %v233 = vsel %vm210, %v205, 0
      %235 = vmatprep.subr.mxu0 0.0
      %236 = vmatpush1.msra.mxu0 0.0
      %237 = vmatprep.subr.mxu0 0.0
      %238 = vmatpush1.msra.mxu0 0.0
      %239 = vmatprep.subr.mxu0 0.0
      %240 = vmatpush1.msra.mxu0 0.0
      %241 = vmatprep.subr.mxu0 0.0
      %242 = vmatpush1.msra.mxu0 0.0
      %243 = vmatprep.subr.mxu0 0.0
      %244 = vmatpush1.msra.mxu0 0.0
      %245 = vmatprep.subr.mxu0 0.0
      %246 = vmatpush1.msra.mxu0 0.0
      %247 = vmatprep.subr.mxu0 0.0
      %248 = vmatpush1.msra.mxu0 0.0
      %249 = vmatprep.subr.mxu0 0.0
      %250 = vmatpush1.msra.mxu0 0.0
      %251 = vmatprep.subr.mxu0 0.0
      %252 = vmatpush1.msra.mxu0 0.0
      %253 = vmatprep.subr.mxu0 0.0
      %254 = vmatpush1.msra.mxu0 0.0
      %255 = vmatprep.subr.mxu0 0.0
      %256 = vmatpush1.msra.mxu0 0.0
      %257 = vmatprep.subr.mxu0 0.0
      %258 = vmatpush1.msra.mxu0 0.0
      %259 = vmatprep.subr.mxu0 0.0
      %260 = vmatpush1.msra.mxu0 %v209
      %261 = vmatprep.subr.mxu0 0.0
      %262 = vmatpush1.msra.mxu0 %v208
      %263 = vmatprep.subr.mxu0 0.0
      %264 = vmatpush1.msra.mxu0 %v207
      %265 = vmatprep.subr.mxu0 0.0
      %266 = vmatpush1.msra.mxu0 %v206
      %267 = vmatprep.subr.mxu0 0.0
      %268 = vmatpush2.msra.mxu0 0.0
      %269 = vmatprep.subr.mxu0 0.0
      %270 = vmatpush2.msra.mxu0 0.0
      %271 = vmatprep.subr.mxu0 0.0
      %272 = vmatpush2.msra.mxu0 0.0
      %273 = vmatprep.subr.mxu0 0.0
      %274 = vmatpush2.msra.mxu0 0.0
      %275 = vmatprep.subr.mxu0 0.0
      %276 = vmatpush2.msra.mxu0 0.0
      %277 = vmatprep.subr.mxu0 0.0
      %278 = vmatpush2.msra.mxu0 0.0
      %279 = vmatprep.subr.mxu0 0.0
      %280 = vmatpush2.msra.mxu0 0.0
      %281 = vmatprep.subr.mxu0 0.0
      %282 = vmatpush2.msra.mxu0 0.0
      %283 = vmatprep.subr.mxu0 0.0
      %284 = vmatpush2.msra.mxu0 0.0
      %285 = vmatprep.subr.mxu0 0.0
      %286 = vmatpush2.msra.mxu0 0.0
      %287 = vmatprep.subr.mxu0 0.0
      %288 = vmatpush2.msra.mxu0 0.0
      %289 = vmatprep.subr.mxu0 0.0
      %290 = vmatpush2.msra.mxu0 0.0
      %291 = vmatprep.subr.mxu0 0.0
      %292 = vmatpush2.msra.mxu0 0.0
      %293 = vmatprep.subr.mxu0 0.0
      %294 = vmatpush2.msra.mxu0 0.0
      %295 = vmatprep.subr.mxu0 0.0
      %296 = vmatpush2.msra.mxu0 0.0
      %297 = vmatprep.subr.mxu0 0.0
      %298 = vmatpush2.msra.mxu0 0.0
      %299 = vmatprep.mubr.f32.mxu0 0.0
      %300 = vmatmul.mubr.f32.gmra.mxu0 %v212
      %v301 = vpop.f32.mrf.mxu0
      %v302 = vadd.f32 0.0, %v301
      %v303 = vpop.f32.mrf.mxu0
      %304 = vmatprep.mubr.f32.mxu0 0.0
      %305 = vmatmul.mubr.f32.gmra.mxu0 %v215
      %v306 = vpop.f32.mrf.mxu0
      %v307 = vadd.f32 0.0, %v306
      %v308 = vpop.f32.mrf.mxu0
      %309 = vmatprep.mubr.f32.mxu0 0.0
      %310 = vmatmul.mubr.f32.gmra.mxu0 %v218
      %v311 = vpop.f32.mrf.mxu0
      %v312 = vadd.f32 0.0, %v311
      %v313 = vpop.f32.mrf.mxu0
      %314 = vmatprep.mubr.f32.mxu0 0.0
      %315 = vmatmul.mubr.f32.gmra.mxu0 %v221
      %v316 = vpop.f32.mrf.mxu0
      %v317 = vadd.f32 0.0, %v316
      %v318 = vpop.f32.mrf.mxu0
      %319 = vmatprep.mubr.f32.mxu0 0.0
      %320 = vmatmul.mubr.f32.gmra.mxu0 %v224
      %v321 = vpop.f32.mrf.mxu0
      %v322 = vadd.f32 0.0, %v321
      %v323 = vpop.f32.mrf.mxu0
      %324 = vmatprep.mubr.f32.mxu0 0.0
      %325 = vmatmul.mubr.f32.gmra.mxu0 %v227
      %v326 = vpop.f32.mrf.mxu0
      %v327 = vadd.f32 0.0, %v326
      %v328 = vpop.f32.mrf.mxu0
      %329 = vmatprep.mubr.f32.mxu0 0.0
      %330 = vmatmul.mubr.f32.gmra.mxu0 %v230
      %v331 = vpop.f32.mrf.mxu0
      %v332 = vadd.f32 0.0, %v331
      %v333 = vpop.f32.mrf.mxu0
      %334 = vmatprep.mubr.f32.mxu0 0.0
      %335 = vmatmul.mubr.f32.gmra.mxu0 %v233
      %v336 = vpop.f32.mrf.mxu0
      %v337 = vadd.f32 0.0, %v336
      %v338 = vpop.f32.mrf.mxu0
      %339 = vdwg.mxu0
      %v340 = vld [vmem:[%s2] sm:$0xff]
      %v341 = vld [vmem:[%s2 + $0x8] sm:$0xff]
      %v342 = vld [vmem:[%s2 + $0x10] sm:$0xff]
      %v343 = vld [vmem:[%s2 + $0x18] sm:$0xff]
      %v344 = vld [vmem:[%s2 + $0x20] sm:$0xff]
      %v345 = vld [vmem:[%s2 + $0x28] sm:$0xff]
      %v346 = vld [vmem:[%s2 + $0x30] sm:$0xff]
      %v347 = vld [vmem:[%s2 + $0x38] sm:$0xff]
      %v348 = vld [vmem:[%s3] sm:$0xff]
      %v349 = vld [vmem:[%s3 + $0x8] sm:$0xff]
      %v350 = vld [vmem:[%s3 + $0x10] sm:$0xff]
      %v351 = vld [vmem:[%s3 + $0x18] sm:$0xff]
      %v352 = vld [vmem:[%s3 + $0x20] sm:$0xff]
      %v353 = vld [vmem:[%s3 + $0x28] sm:$0xff]
      %v354 = vld [vmem:[%s3 + $0x30] sm:$0xff]
      %v355 = vld [vmem:[%s3 + $0x38] sm:$0xff]
      %v356 = vld [vmem:[%s3 + $0x40] sm:$0xff]
      %v357 = vld [vmem:[%s3 + $0x48] sm:$0xff]
      %v358 = vld [vmem:[%s3 + $0x50] sm:$0xff]
      %v359 = vld [vmem:[%s3 + $0x58] sm:$0xff]
      %v360 = vld [vmem:[%s3 + $0x60] sm:$0xff]
      %v361 = vld [vmem:[%s3 + $0x68] sm:$0xff]
      %v362 = vld [vmem:[%s3 + $0x70] sm:$0xff]
      %v363 = vld [vmem:[%s3 + $0x78] sm:$0xff]
      %372 = vrot.lane.b32.xlu0 %v302, 8
      %v373 = vpop.permute.xlu0 %372
      %374 = vrot.lane.b32.xlu0 %v307, 8
      %v375 = vpop.permute.xlu0 %374
      %376 = vrot.lane.b32.xlu0 %v312, 8
      %v377 = vpop.permute.xlu0 %376
      %378 = vrot.lane.b32.xlu0 %v317, 8
      %v379 = vpop.permute.xlu0 %378
      %380 = vrot.lane.b32.xlu0 %v322, 8
      %v381 = vpop.permute.xlu0 %380
      %382 = vrot.lane.b32.xlu0 %v327, 8
      %v383 = vpop.permute.xlu0 %382
      %384 = vrot.lane.b32.xlu0 %v332, 8
      %v385 = vpop.permute.xlu0 %384
      %386 = vrot.lane.b32.xlu0 %v337, 8
      %v387 = vpop.permute.xlu0 %386
      %396 = vrot.lane.b32.xlu0 %v302, 16
      %v397 = vpop.permute.xlu0 %396
      %398 = vrot.lane.b32.xlu0 %v307, 16
      %v399 = vpop.permute.xlu0 %398
      %400 = vrot.lane.b32.xlu0 %v312, 16
      %v401 = vpop.permute.xlu0 %400
      %402 = vrot.lane.b32.xlu0 %v317, 16
      %v403 = vpop.permute.xlu0 %402
      %404 = vrot.lane.b32.xlu0 %v322, 16
      %v405 = vpop.permute.xlu0 %404
      %406 = vrot.lane.b32.xlu0 %v327, 16
      %v407 = vpop.permute.xlu0 %406
      %408 = vrot.lane.b32.xlu0 %v332, 16
      %v409 = vpop.permute.xlu0 %408
      %410 = vrot.lane.b32.xlu0 %v337, 16
      %v411 = vpop.permute.xlu0 %410
      %420 = vrot.lane.b32.xlu0 %v302, 24
      %v421 = vpop.permute.xlu0 %420
      %422 = vrot.lane.b32.xlu0 %v307, 24
      %v423 = vpop.permute.xlu0 %422
      %424 = vrot.lane.b32.xlu0 %v312, 24
      %v425 = vpop.permute.xlu0 %424
      %426 = vrot.lane.b32.xlu0 %v317, 24
      %v427 = vpop.permute.xlu0 %426
      %428 = vrot.lane.b32.xlu0 %v322, 24
      %v429 = vpop.permute.xlu0 %428
      %430 = vrot.lane.b32.xlu0 %v327, 24
      %v431 = vpop.permute.xlu0 %430
      %432 = vrot.lane.b32.xlu0 %v332, 24
      %v433 = vpop.permute.xlu0 %432
      %434 = vrot.lane.b32.xlu0 %v337, 24
      %v435 = vpop.permute.xlu0 %434
      %444 = vrot.lane.b32.xlu0 %v302, 32
      %v445 = vpop.permute.xlu0 %444
      %446 = vrot.lane.b32.xlu0 %v307, 32
      %v447 = vpop.permute.xlu0 %446
      %448 = vrot.lane.b32.xlu0 %v312, 32
      %v449 = vpop.permute.xlu0 %448
      %450 = vrot.lane.b32.xlu0 %v317, 32
      %v451 = vpop.permute.xlu0 %450
      %452 = vrot.lane.b32.xlu0 %v322, 32
      %v453 = vpop.permute.xlu0 %452
      %454 = vrot.lane.b32.xlu0 %v327, 32
      %v455 = vpop.permute.xlu0 %454
      %456 = vrot.lane.b32.xlu0 %v332, 32
      %v457 = vpop.permute.xlu0 %456
      %458 = vrot.lane.b32.xlu0 %v337, 32
      %v459 = vpop.permute.xlu0 %458
      %468 = vrot.lane.b32.xlu0 %v302, 40
      %v469 = vpop.permute.xlu0 %468
      %470 = vrot.lane.b32.xlu0 %v307, 40
      %v471 = vpop.permute.xlu0 %470
      %472 = vrot.lane.b32.xlu0 %v312, 40
      %v473 = vpop.permute.xlu0 %472
      %474 = vrot.lane.b32.xlu0 %v317, 40
      %v475 = vpop.permute.xlu0 %474
      %476 = vrot.lane.b32.xlu0 %v322, 40
      %v477 = vpop.permute.xlu0 %476
      %478 = vrot.lane.b32.xlu0 %v327, 40
      %v479 = vpop.permute.xlu0 %478
      %480 = vrot.lane.b32.xlu0 %v332, 40
      %v481 = vpop.permute.xlu0 %480
      %482 = vrot.lane.b32.xlu0 %v337, 40
      %v483 = vpop.permute.xlu0 %482
      %492 = vrot.lane.b32.xlu0 %v302, 48
      %v493 = vpop.permute.xlu0 %492
      %494 = vrot.lane.b32.xlu0 %v307, 48
      %v495 = vpop.permute.xlu0 %494
      %496 = vrot.lane.b32.xlu0 %v312, 48
      %v497 = vpop.permute.xlu0 %496
      %498 = vrot.lane.b32.xlu0 %v317, 48
      %v499 = vpop.permute.xlu0 %498
      %500 = vrot.lane.b32.xlu0 %v322, 48
      %v501 = vpop.permute.xlu0 %500
      %502 = vrot.lane.b32.xlu0 %v327, 48
      %v503 = vpop.permute.xlu0 %502
      %504 = vrot.lane.b32.xlu0 %v332, 48
      %v505 = vpop.permute.xlu0 %504
      %506 = vrot.lane.b32.xlu0 %v337, 48
      %v507 = vpop.permute.xlu0 %506
      %516 = vrot.lane.b32.xlu0 %v302, 56
      %v517 = vpop.permute.xlu0 %516
      %518 = vrot.lane.b32.xlu0 %v307, 56
      %v519 = vpop.permute.xlu0 %518
      %520 = vrot.lane.b32.xlu0 %v312, 56
      %v521 = vpop.permute.xlu0 %520
      %522 = vrot.lane.b32.xlu0 %v317, 56
      %v523 = vpop.permute.xlu0 %522
      %524 = vrot.lane.b32.xlu0 %v322, 56
      %v525 = vpop.permute.xlu0 %524
      %526 = vrot.lane.b32.xlu0 %v327, 56
      %v527 = vpop.permute.xlu0 %526
      %528 = vrot.lane.b32.xlu0 %v332, 56
      %v529 = vpop.permute.xlu0 %528
      %530 = vrot.lane.b32.xlu0 %v337, 56
      %v531 = vpop.permute.xlu0 %530
      %540 = vrot.lane.b32.xlu0 %v302, 64
      %v541 = vpop.permute.xlu0 %540
      %542 = vrot.lane.b32.xlu0 %v307, 64
      %v543 = vpop.permute.xlu0 %542
      %544 = vrot.lane.b32.xlu0 %v312, 64
      %v545 = vpop.permute.xlu0 %544
      %546 = vrot.lane.b32.xlu0 %v317, 64
      %v547 = vpop.permute.xlu0 %546
      %548 = vrot.lane.b32.xlu0 %v322, 64
      %v549 = vpop.permute.xlu0 %548
      %550 = vrot.lane.b32.xlu0 %v327, 64
      %v551 = vpop.permute.xlu0 %550
      %552 = vrot.lane.b32.xlu0 %v332, 64
      %v553 = vpop.permute.xlu0 %552
      %554 = vrot.lane.b32.xlu0 %v337, 64
      %v555 = vpop.permute.xlu0 %554
      %564 = vrot.lane.b32.xlu0 %v302, 72
      %v565 = vpop.permute.xlu0 %564
      %566 = vrot.lane.b32.xlu0 %v307, 72
      %v567 = vpop.permute.xlu0 %566
      %568 = vrot.lane.b32.xlu0 %v312, 72
      %v569 = vpop.permute.xlu0 %568
      %570 = vrot.lane.b32.xlu0 %v317, 72
      %v571 = vpop.permute.xlu0 %570
      %572 = vrot.lane.b32.xlu0 %v322, 72
      %v573 = vpop.permute.xlu0 %572
      %574 = vrot.lane.b32.xlu0 %v327, 72
      %v575 = vpop.permute.xlu0 %574
      %576 = vrot.lane.b32.xlu0 %v332, 72
      %v577 = vpop.permute.xlu0 %576
      %578 = vrot.lane.b32.xlu0 %v337, 72
      %v579 = vpop.permute.xlu0 %578
      %588 = vrot.lane.b32.xlu0 %v302, 80
      %v589 = vpop.permute.xlu0 %588
      %590 = vrot.lane.b32.xlu0 %v307, 80
      %v591 = vpop.permute.xlu0 %590
      %592 = vrot.lane.b32.xlu0 %v312, 80
      %v593 = vpop.permute.xlu0 %592
      %594 = vrot.lane.b32.xlu0 %v317, 80
      %v595 = vpop.permute.xlu0 %594
      %596 = vrot.lane.b32.xlu0 %v322, 80
      %v597 = vpop.permute.xlu0 %596
      %598 = vrot.lane.b32.xlu0 %v327, 80
      %v599 = vpop.permute.xlu0 %598
      %600 = vrot.lane.b32.xlu0 %v332, 80
      %v601 = vpop.permute.xlu0 %600
      %602 = vrot.lane.b32.xlu0 %v337, 80
      %v603 = vpop.permute.xlu0 %602
      %612 = vrot.lane.b32.xlu0 %v302, 88
      %v613 = vpop.permute.xlu0 %612
      %614 = vrot.lane.b32.xlu0 %v307, 88
      %v615 = vpop.permute.xlu0 %614
      %616 = vrot.lane.b32.xlu0 %v312, 88
      %v617 = vpop.permute.xlu0 %616
      %618 = vrot.lane.b32.xlu0 %v317, 88
      %v619 = vpop.permute.xlu0 %618
      %620 = vrot.lane.b32.xlu0 %v322, 88
      %v621 = vpop.permute.xlu0 %620
      %622 = vrot.lane.b32.xlu0 %v327, 88
      %v623 = vpop.permute.xlu0 %622
      %624 = vrot.lane.b32.xlu0 %v332, 88
      %v625 = vpop.permute.xlu0 %624
      %626 = vrot.lane.b32.xlu0 %v337, 88
      %v627 = vpop.permute.xlu0 %626
      %636 = vrot.lane.b32.xlu0 %v302, 96
      %v637 = vpop.permute.xlu0 %636
      %638 = vrot.lane.b32.xlu0 %v307, 96
      %v639 = vpop.permute.xlu0 %638
      %640 = vrot.lane.b32.xlu0 %v312, 96
      %v641 = vpop.permute.xlu0 %640
      %642 = vrot.lane.b32.xlu0 %v317, 96
      %v643 = vpop.permute.xlu0 %642
      %644 = vrot.lane.b32.xlu0 %v322, 96
      %v645 = vpop.permute.xlu0 %644
      %646 = vrot.lane.b32.xlu0 %v327, 96
      %v647 = vpop.permute.xlu0 %646
      %648 = vrot.lane.b32.xlu0 %v332, 96
      %v649 = vpop.permute.xlu0 %648
      %650 = vrot.lane.b32.xlu0 %v337, 96
      %v651 = vpop.permute.xlu0 %650
      %660 = vrot.lane.b32.xlu0 %v302, 104
      %v661 = vpop.permute.xlu0 %660
      %662 = vrot.lane.b32.xlu0 %v307, 104
      %v663 = vpop.permute.xlu0 %662
      %664 = vrot.lane.b32.xlu0 %v312, 104
      %v665 = vpop.permute.xlu0 %664
      %666 = vrot.lane.b32.xlu0 %v317, 104
      %v667 = vpop.permute.xlu0 %666
      %668 = vrot.lane.b32.xlu0 %v322, 104
      %v669 = vpop.permute.xlu0 %668
      %670 = vrot.lane.b32.xlu0 %v327, 104
      %v671 = vpop.permute.xlu0 %670
      %672 = vrot.lane.b32.xlu0 %v332, 104
      %v673 = vpop.permute.xlu0 %672
      %674 = vrot.lane.b32.xlu0 %v337, 104
      %v675 = vpop.permute.xlu0 %674
      %684 = vrot.lane.b32.xlu0 %v302, 112
      %v685 = vpop.permute.xlu0 %684
      %686 = vrot.lane.b32.xlu0 %v307, 112
      %v687 = vpop.permute.xlu0 %686
      %688 = vrot.lane.b32.xlu0 %v312, 112
      %v689 = vpop.permute.xlu0 %688
      %690 = vrot.lane.b32.xlu0 %v317, 112
      %v691 = vpop.permute.xlu0 %690
      %692 = vrot.lane.b32.xlu0 %v322, 112
      %v693 = vpop.permute.xlu0 %692
      %694 = vrot.lane.b32.xlu0 %v327, 112
      %v695 = vpop.permute.xlu0 %694
      %696 = vrot.lane.b32.xlu0 %v332, 112
      %v697 = vpop.permute.xlu0 %696
      %698 = vrot.lane.b32.xlu0 %v337, 112
      %v699 = vpop.permute.xlu0 %698
      %708 = vrot.lane.b32.xlu0 %v302, 120
      %v709 = vpop.permute.xlu0 %708
      %710 = vrot.lane.b32.xlu0 %v307, 120
      %v711 = vpop.permute.xlu0 %710
      %712 = vrot.lane.b32.xlu0 %v312, 120
      %v713 = vpop.permute.xlu0 %712
      %714 = vrot.lane.b32.xlu0 %v317, 120
      %v715 = vpop.permute.xlu0 %714
      %716 = vrot.lane.b32.xlu0 %v322, 120
      %v717 = vpop.permute.xlu0 %716
      %718 = vrot.lane.b32.xlu0 %v327, 120
      %v719 = vpop.permute.xlu0 %718
      %720 = vrot.lane.b32.xlu0 %v332, 120
      %v721 = vpop.permute.xlu0 %720
      %722 = vrot.lane.b32.xlu0 %v337, 120
      %v723 = vpop.permute.xlu0 %722
      %vm732 = vcmask 64512
      %v733 = vsel %vm732, %v302, %v373
      %v734 = vsel %vm732, %v307, %v375
      %v735 = vsel %vm732, %v312, %v377
      %v736 = vsel %vm732, %v317, %v379
      %v737 = vsel %vm732, %v322, %v381
      %v738 = vsel %vm732, %v327, %v383
      %v739 = vsel %vm732, %v332, %v385
      %v740 = vsel %vm732, %v337, %v387
      %vm741 = vcmask 130048
      %v742 = vsel %vm741, %v733, %v397
      %v743 = vsel %vm741, %v734, %v399
      %v744 = vsel %vm741, %v735, %v401
      %v745 = vsel %vm741, %v736, %v403
      %v746 = vsel %vm741, %v737, %v405
      %v747 = vsel %vm741, %v738, %v407
      %v748 = vsel %vm741, %v739, %v409
      %v749 = vsel %vm741, %v740, %v411
      %vm750 = vcmask 195584
      %v751 = vsel %vm750, %v742, %v421
      %v752 = vsel %vm750, %v743, %v423
      %v753 = vsel %vm750, %v744, %v425
      %v754 = vsel %vm750, %v745, %v427
      %v755 = vsel %vm750, %v746, %v429
      %v756 = vsel %vm750, %v747, %v431
      %v757 = vsel %vm750, %v748, %v433
      %v758 = vsel %vm750, %v749, %v435
      %v759 = vsel %vm210, %v751, %v445
      %v760 = vsel %vm210, %v752, %v447
      %v761 = vsel %vm210, %v753, %v449
      %v762 = vsel %vm210, %v754, %v451
      %v763 = vsel %vm210, %v755, %v453
      %v764 = vsel %vm210, %v756, %v455
      %v765 = vsel %vm210, %v757, %v457
      %v766 = vsel %vm210, %v758, %v459
      %vm767 = vcmask 326656
      %v768 = vsel %vm767, %v759, %v469
      %v769 = vsel %vm767, %v760, %v471
      %v770 = vsel %vm767, %v761, %v473
      %v771 = vsel %vm767, %v762, %v475
      %v772 = vsel %vm767, %v763, %v477
      %v773 = vsel %vm767, %v764, %v479
      %v774 = vsel %vm767, %v765, %v481
      %v775 = vsel %vm767, %v766, %v483
      %vm776 = vcmask 392192
      %v777 = vsel %vm776, %v768, %v493
      %v778 = vsel %vm776, %v769, %v495
      %v779 = vsel %vm776, %v770, %v497
      %v780 = vsel %vm776, %v771, %v499
      %v781 = vsel %vm776, %v772, %v501
      %v782 = vsel %vm776, %v773, %v503
      %v783 = vsel %vm776, %v774, %v505
      %v784 = vsel %vm776, %v775, %v507
      %vm785 = vcmask 457728
      %v786 = vsel %vm785, %v777, %v517
      %v787 = vsel %vm785, %v778, %v519
      %v788 = vsel %vm785, %v779, %v521
      %v789 = vsel %vm785, %v780, %v523
      %v790 = vsel %vm785, %v781, %v525
      %v791 = vsel %vm785, %v782, %v527
      %v792 = vsel %vm785, %v783, %v529
      %v793 = vsel %vm785, %v784, %v531
      %vm794 = vcmask 523264
      %v795 = vsel %vm794, %v786, %v541
      %v796 = vsel %vm794, %v787, %v543
      %v797 = vsel %vm794, %v788, %v545
      %v798 = vsel %vm794, %v789, %v547
      %v799 = vsel %vm794, %v790, %v549
      %v800 = vsel %vm794, %v791, %v551
      %v801 = vsel %vm794, %v792, %v553
      %v802 = vsel %vm794, %v793, %v555
      %vm803 = vcmask 588800
      %v804 = vsel %vm803, %v795, %v565
      %v805 = vsel %vm803, %v796, %v567
      %v806 = vsel %vm803, %v797, %v569
      %v807 = vsel %vm803, %v798, %v571
      %v808 = vsel %vm803, %v799, %v573
      %v809 = vsel %vm803, %v800, %v575
      %v810 = vsel %vm803, %v801, %v577
      %v811 = vsel %vm803, %v802, %v579
      %vm812 = vcmask 654336
      %v813 = vsel %vm812, %v804, %v589
      %v814 = vsel %vm812, %v805, %v591
      %v815 = vsel %vm812, %v806, %v593
      %v816 = vsel %vm812, %v807, %v595
      %v817 = vsel %vm812, %v808, %v597
      %v818 = vsel %vm812, %v809, %v599
      %v819 = vsel %vm812, %v810, %v601
      %v820 = vsel %vm812, %v811, %v603
      %vm821 = vcmask 719872
      %v822 = vsel %vm821, %v813, %v613
      %v823 = vsel %vm821, %v814, %v615
      %v824 = vsel %vm821, %v815, %v617
      %v825 = vsel %vm821, %v816, %v619
      %v826 = vsel %vm821, %v817, %v621
      %v827 = vsel %vm821, %v818, %v623
      %v828 = vsel %vm821, %v819, %v625
      %v829 = vsel %vm821, %v820, %v627
      %vm830 = vcmask 785408
      %v831 = vsel %vm830, %v822, %v637
      %v832 = vsel %vm830, %v823, %v639
      %v833 = vsel %vm830, %v824, %v641
      %v834 = vsel %vm830, %v825, %v643
      %v835 = vsel %vm830, %v826, %v645
      %v836 = vsel %vm830, %v827, %v647
      %v837 = vsel %vm830, %v828, %v649
      %v838 = vsel %vm830, %v829, %v651
      %vm839 = vcmask 850944
      %v840 = vsel %vm839, %v831, %v661
      %v841 = vsel %vm839, %v832, %v663
      %v842 = vsel %vm839, %v833, %v665
      %v843 = vsel %vm839, %v834, %v667
      %v844 = vsel %vm839, %v835, %v669
      %v845 = vsel %vm839, %v836, %v671
      %v846 = vsel %vm839, %v837, %v673
      %v847 = vsel %vm839, %v838, %v675
      %vm848 = vcmask 916480
      %v849 = vsel %vm848, %v840, %v685
      %v850 = vsel %vm848, %v841, %v687
      %v851 = vsel %vm848, %v842, %v689
      %v852 = vsel %vm848, %v843, %v691
      %v853 = vsel %vm848, %v844, %v693
      %v854 = vsel %vm848, %v845, %v695
      %v855 = vsel %vm848, %v846, %v697
      %v856 = vsel %vm848, %v847, %v699
      %vm857 = vcmask 982016
      %v858 = vsel %vm857, %v849, %v709
      %v859 = vsel %vm857, %v850, %v711
      %v860 = vsel %vm857, %v851, %v713
      %v861 = vsel %vm857, %v852, %v715
      %v862 = vsel %vm857, %v853, %v717
      %v863 = vsel %vm857, %v854, %v719
      %v864 = vsel %vm857, %v855, %v721
      %v865 = vsel %vm857, %v856, %v723
      %v866 = vmul.f32 %v858, %v340
      %v867 = vmul.f32 %v859, %v341
      %v868 = vmul.f32 %v860, %v342
      %v869 = vmul.f32 %v861, %v343
      %v870 = vmul.f32 %v862, %v344
      %v871 = vmul.f32 %v863, %v345
      %v872 = vmul.f32 %v864, %v346
      %v873 = vmul.f32 %v865, %v347
      %874 = vmatprep.subr.mxu0 0.0
      %875 = vmatpush1.msra.mxu0 %v363
      %876 = vmatprep.subr.mxu0 0.0
      %877 = vmatpush1.msra.mxu0 %v362
      %878 = vmatprep.subr.mxu0 0.0
      %879 = vmatpush1.msra.mxu0 %v361
      %880 = vmatprep.subr.mxu0 0.0
      %881 = vmatpush1.msra.mxu0 %v360
      %882 = vmatprep.subr.mxu0 0.0
      %883 = vmatpush1.msra.mxu0 %v359
      %884 = vmatprep.subr.mxu0 0.0
      %885 = vmatpush1.msra.mxu0 %v358
      %886 = vmatprep.subr.mxu0 0.0
      %887 = vmatpush1.msra.mxu0 %v357
      %888 = vmatprep.subr.mxu0 0.0
      %889 = vmatpush1.msra.mxu0 %v356
      %890 = vmatprep.subr.mxu0 0.0
      %891 = vmatpush1.msra.mxu0 %v355
      %892 = vmatprep.subr.mxu0 0.0
      %893 = vmatpush1.msra.mxu0 %v354
      %894 = vmatprep.subr.mxu0 0.0
      %895 = vmatpush1.msra.mxu0 %v353
      %896 = vmatprep.subr.mxu0 0.0
      %897 = vmatpush1.msra.mxu0 %v352
      %898 = vmatprep.subr.mxu0 0.0
      %899 = vmatpush1.msra.mxu0 %v351
      %900 = vmatprep.subr.mxu0 0.0
      %901 = vmatpush1.msra.mxu0 %v350
      %902 = vmatprep.subr.mxu0 0.0
      %903 = vmatpush1.msra.mxu0 %v349
      %904 = vmatprep.subr.mxu0 0.0
      %905 = vmatpush1.msra.mxu0 %v348
      %906 = vmatprep.subr.mxu0 0.0
      %907 = vmatpush2.msra.mxu0 0.0
      %908 = vmatprep.subr.mxu0 0.0
      %909 = vmatpush2.msra.mxu0 0.0
      %910 = vmatprep.subr.mxu0 0.0
      %911 = vmatpush2.msra.mxu0 0.0
      %912 = vmatprep.subr.mxu0 0.0
      %913 = vmatpush2.msra.mxu0 0.0
      %914 = vmatprep.subr.mxu0 0.0
      %915 = vmatpush2.msra.mxu0 0.0
      %916 = vmatprep.subr.mxu0 0.0
      %917 = vmatpush2.msra.mxu0 0.0
      %918 = vmatprep.subr.mxu0 0.0
      %919 = vmatpush2.msra.mxu0 0.0
      %920 = vmatprep.subr.mxu0 0.0
      %921 = vmatpush2.msra.mxu0 0.0
      %922 = vmatprep.subr.mxu0 0.0
      %923 = vmatpush2.msra.mxu0 0.0
      %924 = vmatprep.subr.mxu0 0.0
      %925 = vmatpush2.msra.mxu0 0.0
      %926 = vmatprep.subr.mxu0 0.0
      %927 = vmatpush2.msra.mxu0 0.0
      %928 = vmatprep.subr.mxu0 0.0
      %929 = vmatpush2.msra.mxu0 0.0
      %930 = vmatprep.subr.mxu0 0.0
      %931 = vmatpush2.msra.mxu0 0.0
      %932 = vmatprep.subr.mxu0 0.0
      %933 = vmatpush2.msra.mxu0 0.0
      %934 = vmatprep.subr.mxu0 0.0
      %935 = vmatpush2.msra.mxu0 0.0
      %936 = vmatprep.subr.mxu0 0.0
      %937 = vmatpush2.msra.mxu0 0.0
      %938 = vmatprep.mubr.f32.mxu0 0.0
      %939 = vmatmul.mubr.f32.gmra.mxu0 %v866
      %v940 = vpop.f32.mrf.mxu0
      %v941 = vadd.f32 0.0, %v940
      %v942 = vpop.f32.mrf.mxu0
      %943 = vmatprep.mubr.f32.mxu0 0.0
      %944 = vmatmul.mubr.f32.gmra.mxu0 %v867
      %v945 = vpop.f32.mrf.mxu0
      %v946 = vadd.f32 0.0, %v945
      %v947 = vpop.f32.mrf.mxu0
      %948 = vmatprep.mubr.f32.mxu0 0.0
      %949 = vmatmul.mubr.f32.gmra.mxu0 %v868
      %v950 = vpop.f32.mrf.mxu0
      %v951 = vadd.f32 0.0, %v950
      %v952 = vpop.f32.mrf.mxu0
      %953 = vmatprep.mubr.f32.mxu0 0.0
      %954 = vmatmul.mubr.f32.gmra.mxu0 %v869
      %v955 = vpop.f32.mrf.mxu0
      %v956 = vadd.f32 0.0, %v955
      %v957 = vpop.f32.mrf.mxu0
      %958 = vmatprep.mubr.f32.mxu0 0.0
      %959 = vmatmul.mubr.f32.gmra.mxu0 %v870
      %v960 = vpop.f32.mrf.mxu0
      %v961 = vadd.f32 0.0, %v960
      %v962 = vpop.f32.mrf.mxu0
      %963 = vmatprep.mubr.f32.mxu0 0.0
      %964 = vmatmul.mubr.f32.gmra.mxu0 %v871
      %v965 = vpop.f32.mrf.mxu0
      %v966 = vadd.f32 0.0, %v965
      %v967 = vpop.f32.mrf.mxu0
      %968 = vmatprep.mubr.f32.mxu0 0.0
      %969 = vmatmul.mubr.f32.gmra.mxu0 %v872
      %v970 = vpop.f32.mrf.mxu0
      %v971 = vadd.f32 0.0, %v970
      %v972 = vpop.f32.mrf.mxu0
      %973 = vmatprep.mubr.f32.mxu0 0.0
      %974 = vmatmul.mubr.f32.gmra.mxu0 %v873
      %v975 = vpop.f32.mrf.mxu0
      %v976 = vadd.f32 0.0, %v975
      %v977 = vpop.f32.mrf.mxu0
      %978 = vdwg.mxu0
      %v979 = vsel %vm732, %v302, 0
      %v981 = vsel %vm732, %v307, 0
      %v983 = vsel %vm732, %v312, 0
      %v985 = vsel %vm732, %v317, 0
      %v987 = vsel %vm732, %v322, 0
      %v989 = vsel %vm732, %v327, 0
      %v991 = vsel %vm732, %v332, 0
      %v993 = vsel %vm732, %v337, 0
      %v995 = vsel %vm732, %v637, 0
      %v997 = vsel %vm732, %v639, 0
      %v999 = vsel %vm732, %v641, 0
      %v1001 = vsel %vm732, %v643, 0
      %v1003 = vsel %vm732, %v645, 0
      %v1005 = vsel %vm732, %v647, 0
      %v1007 = vsel %vm732, %v649, 0
      %v1009 = vsel %vm732, %v651, 0
      %1011 = vmatprep.subr.mxu0 0.0
      %1012 = vmatpush1.xpose.msra.mxu0 0.0
      %1013 = vmatprep.subr.mxu0 0.0
      %1014 = vmatpush1.xpose.msra.mxu0 0.0
      %1015 = vmatprep.subr.mxu0 0.0
      %1016 = vmatpush1.xpose.msra.mxu0 0.0
      %1017 = vmatprep.subr.mxu0 0.0
      %1018 = vmatpush1.xpose.msra.mxu0 0.0
      %1019 = vmatprep.subr.mxu0 0.0
      %1020 = vmatpush1.xpose.msra.mxu0 0.0
      %1021 = vmatprep.subr.mxu0 0.0
      %1022 = vmatpush1.xpose.msra.mxu0 0.0
      %1023 = vmatprep.subr.mxu0 0.0
      %1024 = vmatpush1.xpose.msra.mxu0 0.0
      %1025 = vmatprep.subr.mxu0 0.0
      %1026 = vmatpush1.xpose.msra.mxu0 0.0
      %1027 = vmatprep.subr.mxu0 0.0
      %1028 = vmatpush1.xpose.msra.mxu0 %v1009
      %1029 = vmatprep.subr.mxu0 0.0
      %1030 = vmatpush1.xpose.msra.mxu0 %v1007
      %1031 = vmatprep.subr.mxu0 0.0
      %1032 = vmatpush1.xpose.msra.mxu0 %v1005
      %1033 = vmatprep.subr.mxu0 0.0
      %1034 = vmatpush1.xpose.msra.mxu0 %v1003
      %1035 = vmatprep.subr.mxu0 0.0
      %1036 = vmatpush1.xpose.msra.mxu0 %v1001
      %1037 = vmatprep.subr.mxu0 0.0
      %1038 = vmatpush1.xpose.msra.mxu0 %v999
      %1039 = vmatprep.subr.mxu0 0.0
      %1040 = vmatpush1.xpose.msra.mxu0 %v997
      %1041 = vmatprep.subr.mxu0 0.0
      %1042 = vmatpush1.xpose.msra.mxu0 %v995
      %1043 = vmatprep.subr.mxu0 0.0
      %1044 = vmatpush2.xpose.msra.mxu0 0.0
      %1045 = vmatprep.subr.mxu0 0.0
      %1046 = vmatpush2.xpose.msra.mxu0 0.0
      %1047 = vmatprep.subr.mxu0 0.0
      %1048 = vmatpush2.xpose.msra.mxu0 0.0
      %1049 = vmatprep.subr.mxu0 0.0
      %1050 = vmatpush2.xpose.msra.mxu0 0.0
      %1051 = vmatprep.subr.mxu0 0.0
      %1052 = vmatpush2.xpose.msra.mxu0 0.0
      %1053 = vmatprep.subr.mxu0 0.0
      %1054 = vmatpush2.xpose.msra.mxu0 0.0
      %1055 = vmatprep.subr.mxu0 0.0
      %1056 = vmatpush2.xpose.msra.mxu0 0.0
      %1057 = vmatprep.subr.mxu0 0.0
      %1058 = vmatpush2.xpose.msra.mxu0 0.0
      %1059 = vmatprep.subr.mxu0 0.0
      %1060 = vmatpush2.xpose.msra.mxu0 0.0
      %1061 = vmatprep.subr.mxu0 0.0
      %1062 = vmatpush2.xpose.msra.mxu0 0.0
      %1063 = vmatprep.subr.mxu0 0.0
      %1064 = vmatpush2.xpose.msra.mxu0 0.0
      %1065 = vmatprep.subr.mxu0 0.0
      %1066 = vmatpush2.xpose.msra.mxu0 0.0
      %1067 = vmatprep.subr.mxu0 0.0
      %1068 = vmatpush2.xpose.msra.mxu0 0.0
      %1069 = vmatprep.subr.mxu0 0.0
      %1070 = vmatpush2.xpose.msra.mxu0 0.0
      %1071 = vmatprep.subr.mxu0 0.0
      %1072 = vmatpush2.xpose.msra.mxu0 0.0
      %1073 = vmatprep.subr.mxu0 0.0
      %1074 = vmatpush2.xpose.msra.mxu0 0.0
      %1075 = vmatprep.mubr.f32.mxu0 0.0
      %1076 = vmatmul.mubr.f32.gmra.mxu0 %v979
      %v1077 = vpop.f32.mrf.mxu0
      %v1078 = vadd.f32 %v941, %v1077
      %v1079 = vpop.f32.mrf.mxu0
      %1080 = vmatprep.mubr.f32.mxu0 0.0
      %1081 = vmatmul.mubr.f32.gmra.mxu0 %v981
      %v1082 = vpop.f32.mrf.mxu0
      %v1083 = vadd.f32 %v946, %v1082
      %v1084 = vpop.f32.mrf.mxu0
      %1085 = vmatprep.mubr.f32.mxu0 0.0
      %1086 = vmatmul.mubr.f32.gmra.mxu0 %v983
      %v1087 = vpop.f32.mrf.mxu0
      %v1088 = vadd.f32 %v951, %v1087
      %v1089 = vpop.f32.mrf.mxu0
      %1090 = vmatprep.mubr.f32.mxu0 0.0
      %1091 = vmatmul.mubr.f32.gmra.mxu0 %v985
      %v1092 = vpop.f32.mrf.mxu0
      %v1093 = vadd.f32 %v956, %v1092
      %v1094 = vpop.f32.mrf.mxu0
      %1095 = vmatprep.mubr.f32.mxu0 0.0
      %1096 = vmatmul.mubr.f32.gmra.mxu0 %v987
      %v1097 = vpop.f32.mrf.mxu0
      %v1098 = vadd.f32 %v961, %v1097
      %v1099 = vpop.f32.mrf.mxu0
      %1100 = vmatprep.mubr.f32.mxu0 0.0
      %1101 = vmatmul.mubr.f32.gmra.mxu0 %v989
      %v1102 = vpop.f32.mrf.mxu0
      %v1103 = vadd.f32 %v966, %v1102
      %v1104 = vpop.f32.mrf.mxu0
      %1105 = vmatprep.mubr.f32.mxu0 0.0
      %1106 = vmatmul.mubr.f32.gmra.mxu0 %v991
      %v1107 = vpop.f32.mrf.mxu0
      %v1108 = vadd.f32 %v971, %v1107
      %v1109 = vpop.f32.mrf.mxu0
      %1110 = vmatprep.mubr.f32.mxu0 0.0
      %1111 = vmatmul.mubr.f32.gmra.mxu0 %v993
      %v1112 = vpop.f32.mrf.mxu0
      %v1113 = vadd.f32 %v976, %v1112
      %v1114 = vpop.f32.mrf.mxu0
      %1115 = vdwg.mxu0
      %v1116 = vsel %vm794, %v1078, -inf
      %1117 = vmax.xlane.f32.xlu0 %v1116
      %v1118 = vpop.xlane.xlu0 %1117
      %v1119 = vsel %vm794, %v1083, -inf
      %1120 = vmax.xlane.f32.xlu0 %v1119
      %v1121 = vpop.xlane.xlu0 %1120
      %v1122 = vsel %vm794, %v1088, -inf
      %1123 = vmax.xlane.f32.xlu0 %v1122
      %v1124 = vpop.xlane.xlu0 %1123
      %v1125 = vsel %vm794, %v1093, -inf
      %1126 = vmax.xlane.f32.xlu0 %v1125
      %v1127 = vpop.xlane.xlu0 %1126
      %v1128 = vsel %vm794, %v1098, -inf
      %1129 = vmax.xlane.f32.xlu0 %v1128
      %v1130 = vpop.xlane.xlu0 %1129
      %v1131 = vsel %vm794, %v1103, -inf
      %1132 = vmax.xlane.f32.xlu0 %v1131
      %v1133 = vpop.xlane.xlu0 %1132
      %v1134 = vsel %vm794, %v1108, -inf
      %1135 = vmax.xlane.f32.xlu0 %v1134
      %v1136 = vpop.xlane.xlu0 %1135
      %v1137 = vsel %vm794, %v1113, -inf
      %1138 = vmax.xlane.f32.xlu0 %v1137
      %v1139 = vpop.xlane.xlu0 %1138
      %v1140 = vsub.f32 %v1078, %v1118
      %v1141 = vsub.f32 %v1083, %v1121
      %v1142 = vsub.f32 %v1088, %v1124
      %v1143 = vsub.f32 %v1093, %v1127
      %v1144 = vsub.f32 %v1098, %v1130
      %v1145 = vsub.f32 %v1103, %v1133
      %v1146 = vsub.f32 %v1108, %v1136
      %v1147 = vsub.f32 %v1113, %v1139
      %v1148 = vmul.f32 %v1140, 1.442695
      %v1149 = vpow.pop %v1148
      %v1150 = vmul.f32 %v1141, 1.442695
      %v1151 = vpow.pop %v1150
      %v1152 = vmul.f32 %v1142, 1.442695
      %v1153 = vpow.pop %v1152
      %v1154 = vmul.f32 %v1143, 1.442695
      %v1155 = vpow.pop %v1154
      %v1156 = vmul.f32 %v1144, 1.442695
      %v1157 = vpow.pop %v1156
      %v1158 = vmul.f32 %v1145, 1.442695
      %v1159 = vpow.pop %v1158
      %v1160 = vmul.f32 %v1146, 1.442695
      %v1161 = vpow.pop %v1160
      %v1162 = vmul.f32 %v1147, 1.442695
      %v1163 = vpow.pop %v1162
      %v1164 = vsel %vm794, %v1149, 0.0
      %1165 = vadd.xlane.f32.xlu0 %v1164
      %v1166 = vpop.xlane.xlu0 %1165
      %v1167 = vsel %vm794, %v1151, 0.0
      %1168 = vadd.xlane.f32.xlu0 %v1167
      %v1169 = vpop.xlane.xlu0 %1168
      %v1170 = vsel %vm794, %v1153, 0.0
      %1171 = vadd.xlane.f32.xlu0 %v1170
      %v1172 = vpop.xlane.xlu0 %1171
      %v1173 = vsel %vm794, %v1155, 0.0
      %1174 = vadd.xlane.f32.xlu0 %v1173
      %v1175 = vpop.xlane.xlu0 %1174
      %v1176 = vsel %vm794, %v1157, 0.0
      %1177 = vadd.xlane.f32.xlu0 %v1176
      %v1178 = vpop.xlane.xlu0 %1177
      %v1179 = vsel %vm794, %v1159, 0.0
      %1180 = vadd.xlane.f32.xlu0 %v1179
      %v1181 = vpop.xlane.xlu0 %1180
      %v1182 = vsel %vm794, %v1161, 0.0
      %1183 = vadd.xlane.f32.xlu0 %v1182
      %v1184 = vpop.xlane.xlu0 %1183
      %v1185 = vsel %vm794, %v1163, 0.0
      %1186 = vadd.xlane.f32.xlu0 %v1185
      %v1187 = vpop.xlane.xlu0 %1186
      %v1188 = vrcp.pop %v1166
      %v1189 = vrcp.pop %v1169
      %v1190 = vrcp.pop %v1172
      %v1191 = vrcp.pop %v1175
      %v1192 = vrcp.pop %v1178
      %v1193 = vrcp.pop %v1181
      %v1194 = vrcp.pop %v1184
      %v1195 = vrcp.pop %v1187
      %v1196 = vmul.f32 %v1149, %v1188
      %v1197 = vmul.f32 %v1151, %v1189
      %v1198 = vmul.f32 %v1153, %v1190
      %v1199 = vmul.f32 %v1155, %v1191
      %v1200 = vmul.f32 %v1157, %v1192
      %v1201 = vmul.f32 %v1159, %v1193
      %v1202 = vmul.f32 %v1161, %v1194
      %v1203 = vmul.f32 %v1163, %v1195
      %v1205 = vsel %vm794, %v1196, 0
      %v1208 = vsel %vm794, %v1197, 0
      %v1211 = vsel %vm794, %v1198, 0
      %v1214 = vsel %vm794, %v1199, 0
      %v1217 = vsel %vm794, %v1200, 0
      %v1220 = vsel %vm794, %v1201, 0
      %v1223 = vsel %vm794, %v1202, 0
      %v1226 = vsel %vm794, %v1203, 0
      %1228 = vmatprep.subr.mxu0 0.0
      %1229 = vmatpush1.msra.mxu0 0.0
      %1230 = vmatprep.subr.mxu0 0.0
      %1231 = vmatpush1.msra.mxu0 0.0
      %1232 = vmatprep.subr.mxu0 0.0
      %1233 = vmatpush1.msra.mxu0 0.0
      %1234 = vmatprep.subr.mxu0 0.0
      %1235 = vmatpush1.msra.mxu0 0.0
      %1236 = vmatprep.subr.mxu0 0.0
      %1237 = vmatpush1.msra.mxu0 0.0
      %1238 = vmatprep.subr.mxu0 0.0
      %1239 = vmatpush1.msra.mxu0 0.0
      %1240 = vmatprep.subr.mxu0 0.0
      %1241 = vmatpush1.msra.mxu0 0.0
      %1242 = vmatprep.subr.mxu0 0.0
      %1243 = vmatpush1.msra.mxu0 0.0
      %1244 = vmatprep.subr.mxu0 0.0
      %1245 = vmatpush1.msra.mxu0 %v555
      %1246 = vmatprep.subr.mxu0 0.0
      %1247 = vmatpush1.msra.mxu0 %v553
      %1248 = vmatprep.subr.mxu0 0.0
      %1249 = vmatpush1.msra.mxu0 %v551
      %1250 = vmatprep.subr.mxu0 0.0
      %1251 = vmatpush1.msra.mxu0 %v549
      %1252 = vmatprep.subr.mxu0 0.0
      %1253 = vmatpush1.msra.mxu0 %v547
      %1254 = vmatprep.subr.mxu0 0.0
      %1255 = vmatpush1.msra.mxu0 %v545
      %1256 = vmatprep.subr.mxu0 0.0
      %1257 = vmatpush1.msra.mxu0 %v543
      %1258 = vmatprep.subr.mxu0 0.0
      %1259 = vmatpush1.msra.mxu0 %v541
      %1260 = vmatprep.subr.mxu0 0.0
      %1261 = vmatpush2.msra.mxu0 0.0
      %1262 = vmatprep.subr.mxu0 0.0
      %1263 = vmatpush2.msra.mxu0 0.0
      %1264 = vmatprep.subr.mxu0 0.0
      %1265 = vmatpush2.msra.mxu0 0.0
      %1266 = vmatprep.subr.mxu0 0.0
      %1267 = vmatpush2.msra.mxu0 0.0
      %1268 = vmatprep.subr.mxu0 0.0
      %1269 = vmatpush2.msra.mxu0 0.0
      %1270 = vmatprep.subr.mxu0 0.0
      %1271 = vmatpush2.msra.mxu0 0.0
      %1272 = vmatprep.subr.mxu0 0.0
      %1273 = vmatpush2.msra.mxu0 0.0
      %1274 = vmatprep.subr.mxu0 0.0
      %1275 = vmatpush2.msra.mxu0 0.0
      %1276 = vmatprep.subr.mxu0 0.0
      %1277 = vmatpush2.msra.mxu0 0.0
      %1278 = vmatprep.subr.mxu0 0.0
      %1279 = vmatpush2.msra.mxu0 0.0
      %1280 = vmatprep.subr.mxu0 0.0
      %1281 = vmatpush2.msra.mxu0 0.0
      %1282 = vmatprep.subr.mxu0 0.0
      %1283 = vmatpush2.msra.mxu0 0.0
      %1284 = vmatprep.subr.mxu0 0.0
      %1285 = vmatpush2.msra.mxu0 0.0
      %1286 = vmatprep.subr.mxu0 0.0
      %1287 = vmatpush2.msra.mxu0 0.0
      %1288 = vmatprep.subr.mxu0 0.0
      %1289 = vmatpush2.msra.mxu0 0.0
      %1290 = vmatprep.subr.mxu0 0.0
      %1291 = vmatpush2.msra.mxu0 0.0
      %1292 = vmatprep.mubr.f32.mxu0 0.0
      %1293 = vmatmul.mubr.f32.gmra.mxu0 %v1205
      %v1294 = vpop.f32.mrf.mxu0
      %v1295 = vadd.f32 0.0, %v1294
      %v1296 = vpop.f32.mrf.mxu0
      %1297 = vmatprep.mubr.f32.mxu0 0.0
      %1298 = vmatmul.mubr.f32.gmra.mxu0 %v1208
      %v1299 = vpop.f32.mrf.mxu0
      %v1300 = vadd.f32 0.0, %v1299
      %v1301 = vpop.f32.mrf.mxu0
      %1302 = vmatprep.mubr.f32.mxu0 0.0
      %1303 = vmatmul.mubr.f32.gmra.mxu0 %v1211
      %v1304 = vpop.f32.mrf.mxu0
      %v1305 = vadd.f32 0.0, %v1304
      %v1306 = vpop.f32.mrf.mxu0
      %1307 = vmatprep.mubr.f32.mxu0 0.0
      %1308 = vmatmul.mubr.f32.gmra.mxu0 %v1214
      %v1309 = vpop.f32.mrf.mxu0
      %v1310 = vadd.f32 0.0, %v1309
      %v1311 = vpop.f32.mrf.mxu0
      %1312 = vmatprep.mubr.f32.mxu0 0.0
      %1313 = vmatmul.mubr.f32.gmra.mxu0 %v1217
      %v1314 = vpop.f32.mrf.mxu0
      %v1315 = vadd.f32 0.0, %v1314
      %v1316 = vpop.f32.mrf.mxu0
      %1317 = vmatprep.mubr.f32.mxu0 0.0
      %1318 = vmatmul.mubr.f32.gmra.mxu0 %v1220
      %v1319 = vpop.f32.mrf.mxu0
      %v1320 = vadd.f32 0.0, %v1319
      %v1321 = vpop.f32.mrf.mxu0
      %1322 = vmatprep.mubr.f32.mxu0 0.0
      %1323 = vmatmul.mubr.f32.gmra.mxu0 %v1223
      %v1324 = vpop.f32.mrf.mxu0
      %v1325 = vadd.f32 0.0, %v1324
      %v1326 = vpop.f32.mrf.mxu0
      %1327 = vmatprep.mubr.f32.mxu0 0.0
      %1328 = vmatmul.mubr.f32.gmra.mxu0 %v1226
      %v1329 = vpop.f32.mrf.mxu0
      %v1330 = vadd.f32 0.0, %v1329
      %v1331 = vpop.f32.mrf.mxu0
      %1332 = vdwg.mxu0
      %v1333 = vsel %vm732, %v709, %v302
      %v1334 = vsel %vm732, %v711, %v307
      %v1335 = vsel %vm732, %v713, %v312
      %v1336 = vsel %vm732, %v715, %v317
      %v1337 = vsel %vm732, %v717, %v322
      %v1338 = vsel %vm732, %v719, %v327
      %v1339 = vsel %vm732, %v721, %v332
      %v1340 = vsel %vm732, %v723, %v337
      %v1341 = vsel %vm741, %v1333, %v373
      %v1342 = vsel %vm741, %v1334, %v375
      %v1343 = vsel %vm741, %v1335, %v377
      %v1344 = vsel %vm741, %v1336, %v379
      %v1345 = vsel %vm741, %v1337, %v381
      %v1346 = vsel %vm741, %v1338, %v383
      %v1347 = vsel %vm741, %v1339, %v385
      %v1348 = vsel %vm741, %v1340, %v387
      %v1349 = vsel %vm750, %v1341, %v397
      %v1350 = vsel %vm750, %v1342, %v399
      %v1351 = vsel %vm750, %v1343, %v401
      %v1352 = vsel %vm750, %v1344, %v403
      %v1353 = vsel %vm750, %v1345, %v405
      %v1354 = vsel %vm750, %v1346, %v407
      %v1355 = vsel %vm750, %v1347, %v409
      %v1356 = vsel %vm750, %v1348, %v411
      %v1357 = vsel %vm210, %v1349, %v421
      %v1358 = vsel %vm210, %v1350, %v423
      %v1359 = vsel %vm210, %v1351, %v425
      %v1360 = vsel %vm210, %v1352, %v427
      %v1361 = vsel %vm210, %v1353, %v429
      %v1362 = vsel %vm210, %v1354, %v431
      %v1363 = vsel %vm210, %v1355, %v433
      %v1364 = vsel %vm210, %v1356, %v435
      %v1365 = vsel %vm767, %v1357, %v445
      %v1366 = vsel %vm767, %v1358, %v447
      %v1367 = vsel %vm767, %v1359, %v449
      %v1368 = vsel %vm767, %v1360, %v451
      %v1369 = vsel %vm767, %v1361, %v453
      %v1370 = vsel %vm767, %v1362, %v455
      %v1371 = vsel %vm767, %v1363, %v457
      %v1372 = vsel %vm767, %v1364, %v459
      %v1373 = vsel %vm776, %v1365, %v469
      %v1374 = vsel %vm776, %v1366, %v471
      %v1375 = vsel %vm776, %v1367, %v473
      %v1376 = vsel %vm776, %v1368, %v475
      %v1377 = vsel %vm776, %v1369, %v477
      %v1378 = vsel %vm776, %v1370, %v479
      %v1379 = vsel %vm776, %v1371, %v481
      %v1380 = vsel %vm776, %v1372, %v483
      %v1381 = vsel %vm785, %v1373, %v493
      %v1382 = vsel %vm785, %v1374, %v495
      %v1383 = vsel %vm785, %v1375, %v497
      %v1384 = vsel %vm785, %v1376, %v499
      %v1385 = vsel %vm785, %v1377, %v501
      %v1386 = vsel %vm785, %v1378, %v503
      %v1387 = vsel %vm785, %v1379, %v505
      %v1388 = vsel %vm785, %v1380, %v507
      %v1389 = vsel %vm794, %v1381, %v517
      %v1390 = vsel %vm794, %v1382, %v519
      %v1391 = vsel %vm794, %v1383, %v521
      %v1392 = vsel %vm794, %v1384, %v523
      %v1393 = vsel %vm794, %v1385, %v525
      %v1394 = vsel %vm794, %v1386, %v527
      %v1395 = vsel %vm794, %v1387, %v529
      %v1396 = vsel %vm794, %v1388, %v531
      %v1397 = vsel %vm803, %v1389, %v541
      %v1398 = vsel %vm803, %v1390, %v543
      %v1399 = vsel %vm803, %v1391, %v545
      %v1400 = vsel %vm803, %v1392, %v547
      %v1401 = vsel %vm803, %v1393, %v549
      %v1402 = vsel %vm803, %v1394, %v551
      %v1403 = vsel %vm803, %v1395, %v553
      %v1404 = vsel %vm803, %v1396, %v555
      %v1405 = vsel %vm812, %v1397, %v565
      %v1406 = vsel %vm812, %v1398, %v567
      %v1407 = vsel %vm812, %v1399, %v569
      %v1408 = vsel %vm812, %v1400, %v571
      %v1409 = vsel %vm812, %v1401, %v573
      %v1410 = vsel %vm812, %v1402, %v575
      %v1411 = vsel %vm812, %v1403, %v577
      %v1412 = vsel %vm812, %v1404, %v579
      %v1413 = vsel %vm821, %v1405, %v589
      %v1414 = vsel %vm821, %v1406, %v591
      %v1415 = vsel %vm821, %v1407, %v593
      %v1416 = vsel %vm821, %v1408, %v595
      %v1417 = vsel %vm821, %v1409, %v597
      %v1418 = vsel %vm821, %v1410, %v599
      %v1419 = vsel %vm821, %v1411, %v601
      %v1420 = vsel %vm821, %v1412, %v603
      %v1421 = vsel %vm830, %v1413, %v613
      %v1422 = vsel %vm830, %v1414, %v615
      %v1423 = vsel %vm830, %v1415, %v617
      %v1424 = vsel %vm830, %v1416, %v619
      %v1425 = vsel %vm830, %v1417, %v621
      %v1426 = vsel %vm830, %v1418, %v623
      %v1427 = vsel %vm830, %v1419, %v625
      %v1428 = vsel %vm830, %v1420, %v627
      %v1429 = vsel %vm839, %v1421, %v637
      %v1430 = vsel %vm839, %v1422, %v639
      %v1431 = vsel %vm839, %v1423, %v641
      %v1432 = vsel %vm839, %v1424, %v643
      %v1433 = vsel %vm839, %v1425, %v645
      %v1434 = vsel %vm839, %v1426, %v647
      %v1435 = vsel %vm839, %v1427, %v649
      %v1436 = vsel %vm839, %v1428, %v651
      %v1437 = vsel %vm848, %v1429, %v661
      %v1438 = vsel %vm848, %v1430, %v663
      %v1439 = vsel %vm848, %v1431, %v665
      %v1440 = vsel %vm848, %v1432, %v667
      %v1441 = vsel %vm848, %v1433, %v669
      %v1442 = vsel %vm848, %v1434, %v671
      %v1443 = vsel %vm848, %v1435, %v673
      %v1444 = vsel %vm848, %v1436, %v675
      %v1445 = vsel %vm857, %v1437, %v685
      %v1446 = vsel %vm857, %v1438, %v687
      %v1447 = vsel %vm857, %v1439, %v689
      %v1448 = vsel %vm857, %v1440, %v691
      %v1449 = vsel %vm857, %v1441, %v693
      %v1450 = vsel %vm857, %v1442, %v695
      %v1451 = vsel %vm857, %v1443, %v697
      %v1452 = vsel %vm857, %v1444, %v699
      %v1453 = vmul.f32 %v1445, %v340
      %v1454 = vmul.f32 %v1446, %v341
      %v1455 = vmul.f32 %v1447, %v342
      %v1456 = vmul.f32 %v1448, %v343
      %v1457 = vmul.f32 %v1449, %v344
      %v1458 = vmul.f32 %v1450, %v345
      %v1459 = vmul.f32 %v1451, %v346
      %v1460 = vmul.f32 %v1452, %v347
      %1461 = vmatprep.subr.mxu0 0.0
      %1462 = vmatpush1.msra.mxu0 %v363
      %1463 = vmatprep.subr.mxu0 0.0
      %1464 = vmatpush1.msra.mxu0 %v362
      %1465 = vmatprep.subr.mxu0 0.0
      %1466 = vmatpush1.msra.mxu0 %v361
      %1467 = vmatprep.subr.mxu0 0.0
      %1468 = vmatpush1.msra.mxu0 %v360
      %1469 = vmatprep.subr.mxu0 0.0
      %1470 = vmatpush1.msra.mxu0 %v359
      %1471 = vmatprep.subr.mxu0 0.0
      %1472 = vmatpush1.msra.mxu0 %v358
      %1473 = vmatprep.subr.mxu0 0.0
      %1474 = vmatpush1.msra.mxu0 %v357
      %1475 = vmatprep.subr.mxu0 0.0
      %1476 = vmatpush1.msra.mxu0 %v356
      %1477 = vmatprep.subr.mxu0 0.0
      %1478 = vmatpush1.msra.mxu0 %v355
      %1479 = vmatprep.subr.mxu0 0.0
      %1480 = vmatpush1.msra.mxu0 %v354
      %1481 = vmatprep.subr.mxu0 0.0
      %1482 = vmatpush1.msra.mxu0 %v353
      %1483 = vmatprep.subr.mxu0 0.0
      %1484 = vmatpush1.msra.mxu0 %v352
      %1485 = vmatprep.subr.mxu0 0.0
      %1486 = vmatpush1.msra.mxu0 %v351
      %1487 = vmatprep.subr.mxu0 0.0
      %1488 = vmatpush1.msra.mxu0 %v350
      %1489 = vmatprep.subr.mxu0 0.0
      %1490 = vmatpush1.msra.mxu0 %v349
      %1491 = vmatprep.subr.mxu0 0.0
      %1492 = vmatpush1.msra.mxu0 %v348
      %1493 = vmatprep.subr.mxu0 0.0
      %1494 = vmatpush2.msra.mxu0 0.0
      %1495 = vmatprep.subr.mxu0 0.0
      %1496 = vmatpush2.msra.mxu0 0.0
      %1497 = vmatprep.subr.mxu0 0.0
      %1498 = vmatpush2.msra.mxu0 0.0
      %1499 = vmatprep.subr.mxu0 0.0
      %1500 = vmatpush2.msra.mxu0 0.0
      %1501 = vmatprep.subr.mxu0 0.0
      %1502 = vmatpush2.msra.mxu0 0.0
      %1503 = vmatprep.subr.mxu0 0.0
      %1504 = vmatpush2.msra.mxu0 0.0
      %1505 = vmatprep.subr.mxu0 0.0
      %1506 = vmatpush2.msra.mxu0 0.0
      %1507 = vmatprep.subr.mxu0 0.0
      %1508 = vmatpush2.msra.mxu0 0.0
      %1509 = vmatprep.subr.mxu0 0.0
      %1510 = vmatpush2.msra.mxu0 0.0
      %1511 = vmatprep.subr.mxu0 0.0
      %1512 = vmatpush2.msra.mxu0 0.0
      %1513 = vmatprep.subr.mxu0 0.0
      %1514 = vmatpush2.msra.mxu0 0.0
      %1515 = vmatprep.subr.mxu0 0.0
      %1516 = vmatpush2.msra.mxu0 0.0
      %1517 = vmatprep.subr.mxu0 0.0
      %1518 = vmatpush2.msra.mxu0 0.0
      %1519 = vmatprep.subr.mxu0 0.0
      %1520 = vmatpush2.msra.mxu0 0.0
      %1521 = vmatprep.subr.mxu0 0.0
      %1522 = vmatpush2.msra.mxu0 0.0
      %1523 = vmatprep.subr.mxu0 0.0
      %1524 = vmatpush2.msra.mxu0 0.0
      %1525 = vmatprep.mubr.f32.mxu0 0.0
      %1526 = vmatmul.mubr.f32.gmra.mxu0 %v1453
      %v1527 = vpop.f32.mrf.mxu0
      %v1528 = vadd.f32 0.0, %v1527
      %v1529 = vpop.f32.mrf.mxu0
      %1530 = vmatprep.mubr.f32.mxu0 0.0
      %1531 = vmatmul.mubr.f32.gmra.mxu0 %v1454
      %v1532 = vpop.f32.mrf.mxu0
      %v1533 = vadd.f32 0.0, %v1532
      %v1534 = vpop.f32.mrf.mxu0
      %1535 = vmatprep.mubr.f32.mxu0 0.0
      %1536 = vmatmul.mubr.f32.gmra.mxu0 %v1455
      %v1537 = vpop.f32.mrf.mxu0
      %v1538 = vadd.f32 0.0, %v1537
      %v1539 = vpop.f32.mrf.mxu0
      %1540 = vmatprep.mubr.f32.mxu0 0.0
      %1541 = vmatmul.mubr.f32.gmra.mxu0 %v1456
      %v1542 = vpop.f32.mrf.mxu0
      %v1543 = vadd.f32 0.0, %v1542
      %v1544 = vpop.f32.mrf.mxu0
      %1545 = vmatprep.mubr.f32.mxu0 0.0
      %1546 = vmatmul.mubr.f32.gmra.mxu0 %v1457
      %v1547 = vpop.f32.mrf.mxu0
      %v1548 = vadd.f32 0.0, %v1547
      %v1549 = vpop.f32.mrf.mxu0
      %1550 = vmatprep.mubr.f32.mxu0 0.0
      %1551 = vmatmul.mubr.f32.gmra.mxu0 %v1458
      %v1552 = vpop.f32.mrf.mxu0
      %v1553 = vadd.f32 0.0, %v1552
      %v1554 = vpop.f32.mrf.mxu0
      %1555 = vmatprep.mubr.f32.mxu0 0.0
      %1556 = vmatmul.mubr.f32.gmra.mxu0 %v1459
      %v1557 = vpop.f32.mrf.mxu0
      %v1558 = vadd.f32 0.0, %v1557
      %v1559 = vpop.f32.mrf.mxu0
      %1560 = vmatprep.mubr.f32.mxu0 0.0
      %1561 = vmatmul.mubr.f32.gmra.mxu0 %v1460
      %v1562 = vpop.f32.mrf.mxu0
      %v1563 = vadd.f32 0.0, %v1562
      %v1564 = vpop.f32.mrf.mxu0
      %1565 = vdwg.mxu0
      %v1566 = vsel %vm732, %v709, 0
      %v1568 = vsel %vm732, %v711, 0
      %v1570 = vsel %vm732, %v713, 0
      %v1572 = vsel %vm732, %v715, 0
      %v1574 = vsel %vm732, %v717, 0
      %v1576 = vsel %vm732, %v719, 0
      %v1578 = vsel %vm732, %v721, 0
      %v1580 = vsel %vm732, %v723, 0
      %v1582 = vsel %vm732, %v613, 0
      %v1584 = vsel %vm732, %v615, 0
      %v1586 = vsel %vm732, %v617, 0
      %v1588 = vsel %vm732, %v619, 0
      %v1590 = vsel %vm732, %v621, 0
      %v1592 = vsel %vm732, %v623, 0
      %v1594 = vsel %vm732, %v625, 0
      %v1596 = vsel %vm732, %v627, 0
      %1598 = vmatprep.subr.mxu0 0.0
      %1599 = vmatpush1.xpose.msra.mxu0 0.0
      %1600 = vmatprep.subr.mxu0 0.0
      %1601 = vmatpush1.xpose.msra.mxu0 0.0
      %1602 = vmatprep.subr.mxu0 0.0
      %1603 = vmatpush1.xpose.msra.mxu0 0.0
      %1604 = vmatprep.subr.mxu0 0.0
      %1605 = vmatpush1.xpose.msra.mxu0 0.0
      %1606 = vmatprep.subr.mxu0 0.0
      %1607 = vmatpush1.xpose.msra.mxu0 0.0
      %1608 = vmatprep.subr.mxu0 0.0
      %1609 = vmatpush1.xpose.msra.mxu0 0.0
      %1610 = vmatprep.subr.mxu0 0.0
      %1611 = vmatpush1.xpose.msra.mxu0 0.0
      %1612 = vmatprep.subr.mxu0 0.0
      %1613 = vmatpush1.xpose.msra.mxu0 0.0
      %1614 = vmatprep.subr.mxu0 0.0
      %1615 = vmatpush1.xpose.msra.mxu0 %v1596
      %1616 = vmatprep.subr.mxu0 0.0
      %1617 = vmatpush1.xpose.msra.mxu0 %v1594
      %1618 = vmatprep.subr.mxu0 0.0
      %1619 = vmatpush1.xpose.msra.mxu0 %v1592
      %1620 = vmatprep.subr.mxu0 0.0
      %1621 = vmatpush1.xpose.msra.mxu0 %v1590
      %1622 = vmatprep.subr.mxu0 0.0
      %1623 = vmatpush1.xpose.msra.mxu0 %v1588
      %1624 = vmatprep.subr.mxu0 0.0
      %1625 = vmatpush1.xpose.msra.mxu0 %v1586
      %1626 = vmatprep.subr.mxu0 0.0
      %1627 = vmatpush1.xpose.msra.mxu0 %v1584
      %1628 = vmatprep.subr.mxu0 0.0
      %1629 = vmatpush1.xpose.msra.mxu0 %v1582
      %1630 = vmatprep.subr.mxu0 0.0
      %1631 = vmatpush2.xpose.msra.mxu0 0.0
      %1632 = vmatprep.subr.mxu0 0.0
      %1633 = vmatpush2.xpose.msra.mxu0 0.0
      %1634 = vmatprep.subr.mxu0 0.0
      %1635 = vmatpush2.xpose.msra.mxu0 0.0
      %1636 = vmatprep.subr.mxu0 0.0
      %1637 = vmatpush2.xpose.msra.mxu0 0.0
      %1638 = vmatprep.subr.mxu0 0.0
      %1639 = vmatpush2.xpose.msra.mxu0 0.0
      %1640 = vmatprep.subr.mxu0 0.0
      %1641 = vmatpush2.xpose.msra.mxu0 0.0
      %1642 = vmatprep.subr.mxu0 0.0
      %1643 = vmatpush2.xpose.msra.mxu0 0.0
      %1644 = vmatprep.subr.mxu0 0.0
      %1645 = vmatpush2.xpose.msra.mxu0 0.0
      %1646 = vmatprep.subr.mxu0 0.0
      %1647 = vmatpush2.xpose.msra.mxu0 0.0
      %1648 = vmatprep.subr.mxu0 0.0
      %1649 = vmatpush2.xpose.msra.mxu0 0.0
      %1650 = vmatprep.subr.mxu0 0.0
      %1651 = vmatpush2.xpose.msra.mxu0 0.0
      %1652 = vmatprep.subr.mxu0 0.0
      %1653 = vmatpush2.xpose.msra.mxu0 0.0
      %1654 = vmatprep.subr.mxu0 0.0
      %1655 = vmatpush2.xpose.msra.mxu0 0.0
      %1656 = vmatprep.subr.mxu0 0.0
      %1657 = vmatpush2.xpose.msra.mxu0 0.0
      %1658 = vmatprep.subr.mxu0 0.0
      %1659 = vmatpush2.xpose.msra.mxu0 0.0
      %1660 = vmatprep.subr.mxu0 0.0
      %1661 = vmatpush2.xpose.msra.mxu0 0.0
      %1662 = vmatprep.mubr.f32.mxu0 0.0
      %1663 = vmatmul.mubr.f32.gmra.mxu0 %v1566
      %v1664 = vpop.f32.mrf.mxu0
      %v1665 = vadd.f32 %v1528, %v1664
      %v1666 = vpop.f32.mrf.mxu0
      %1667 = vmatprep.mubr.f32.mxu0 0.0
      %1668 = vmatmul.mubr.f32.gmra.mxu0 %v1568
      %v1669 = vpop.f32.mrf.mxu0
      %v1670 = vadd.f32 %v1533, %v1669
      %v1671 = vpop.f32.mrf.mxu0
      %1672 = vmatprep.mubr.f32.mxu0 0.0
      %1673 = vmatmul.mubr.f32.gmra.mxu0 %v1570
      %v1674 = vpop.f32.mrf.mxu0
      %v1675 = vadd.f32 %v1538, %v1674
      %v1676 = vpop.f32.mrf.mxu0
      %1677 = vmatprep.mubr.f32.mxu0 0.0
      %1678 = vmatmul.mubr.f32.gmra.mxu0 %v1572
      %v1679 = vpop.f32.mrf.mxu0
      %v1680 = vadd.f32 %v1543, %v1679
      %v1681 = vpop.f32.mrf.mxu0
      %1682 = vmatprep.mubr.f32.mxu0 0.0
      %1683 = vmatmul.mubr.f32.gmra.mxu0 %v1574
      %v1684 = vpop.f32.mrf.mxu0
      %v1685 = vadd.f32 %v1548, %v1684
      %v1686 = vpop.f32.mrf.mxu0
      %1687 = vmatprep.mubr.f32.mxu0 0.0
      %1688 = vmatmul.mubr.f32.gmra.mxu0 %v1576
      %v1689 = vpop.f32.mrf.mxu0
      %v1690 = vadd.f32 %v1553, %v1689
      %v1691 = vpop.f32.mrf.mxu0
      %1692 = vmatprep.mubr.f32.mxu0 0.0
      %1693 = vmatmul.mubr.f32.gmra.mxu0 %v1578
      %v1694 = vpop.f32.mrf.mxu0
      %v1695 = vadd.f32 %v1558, %v1694
      %v1696 = vpop.f32.mrf.mxu0
      %1697 = vmatprep.mubr.f32.mxu0 0.0
      %1698 = vmatmul.mubr.f32.gmra.mxu0 %v1580
      %v1699 = vpop.f32.mrf.mxu0
      %v1700 = vadd.f32 %v1563, %v1699
      %v1701 = vpop.f32.mrf.mxu0
      %1702 = vdwg.mxu0
      %v1703 = vsel %vm794, %v1665, -inf
      %1704 = vmax.xlane.f32.xlu0 %v1703
      %v1705 = vpop.xlane.xlu0 %1704
      %v1706 = vsel %vm794, %v1670, -inf
      %1707 = vmax.xlane.f32.xlu0 %v1706
      %v1708 = vpop.xlane.xlu0 %1707
      %v1709 = vsel %vm794, %v1675, -inf
      %1710 = vmax.xlane.f32.xlu0 %v1709
      %v1711 = vpop.xlane.xlu0 %1710
      %v1712 = vsel %vm794, %v1680, -inf
      %1713 = vmax.xlane.f32.xlu0 %v1712
      %v1714 = vpop.xlane.xlu0 %1713
      %v1715 = vsel %vm794, %v1685, -inf
      %1716 = vmax.xlane.f32.xlu0 %v1715
      %v1717 = vpop.xlane.xlu0 %1716
      %v1718 = vsel %vm794, %v1690, -inf
      %1719 = vmax.xlane.f32.xlu0 %v1718
      %v1720 = vpop.xlane.xlu0 %1719
      %v1721 = vsel %vm794, %v1695, -inf
      %1722 = vmax.xlane.f32.xlu0 %v1721
      %v1723 = vpop.xlane.xlu0 %1722
      %v1724 = vsel %vm794, %v1700, -inf
      %1725 = vmax.xlane.f32.xlu0 %v1724
      %v1726 = vpop.xlane.xlu0 %1725
      %v1727 = vsub.f32 %v1665, %v1705
      %v1728 = vsub.f32 %v1670, %v1708
      %v1729 = vsub.f32 %v1675, %v1711
      %v1730 = vsub.f32 %v1680, %v1714
      %v1731 = vsub.f32 %v1685, %v1717
      %v1732 = vsub.f32 %v1690, %v1720
      %v1733 = vsub.f32 %v1695, %v1723
      %v1734 = vsub.f32 %v1700, %v1726
      %v1735 = vmul.f32 %v1727, 1.442695
      %v1736 = vpow.pop %v1735
      %v1737 = vmul.f32 %v1728, 1.442695
      %v1738 = vpow.pop %v1737
      %v1739 = vmul.f32 %v1729, 1.442695
      %v1740 = vpow.pop %v1739
      %v1741 = vmul.f32 %v1730, 1.442695
      %v1742 = vpow.pop %v1741
      %v1743 = vmul.f32 %v1731, 1.442695
      %v1744 = vpow.pop %v1743
      %v1745 = vmul.f32 %v1732, 1.442695
      %v1746 = vpow.pop %v1745
      %v1747 = vmul.f32 %v1733, 1.442695
      %v1748 = vpow.pop %v1747
      %v1749 = vmul.f32 %v1734, 1.442695
      %v1750 = vpow.pop %v1749
      %v1751 = vsel %vm794, %v1736, 0.0
      %1752 = vadd.xlane.f32.xlu0 %v1751
      %v1753 = vpop.xlane.xlu0 %1752
      %v1754 = vsel %vm794, %v1738, 0.0
      %1755 = vadd.xlane.f32.xlu0 %v1754
      %v1756 = vpop.xlane.xlu0 %1755
      %v1757 = vsel %vm794, %v1740, 0.0
      %1758 = vadd.xlane.f32.xlu0 %v1757
      %v1759 = vpop.xlane.xlu0 %1758
      %v1760 = vsel %vm794, %v1742, 0.0
      %1761 = vadd.xlane.f32.xlu0 %v1760
      %v1762 = vpop.xlane.xlu0 %1761
      %v1763 = vsel %vm794, %v1744, 0.0
      %1764 = vadd.xlane.f32.xlu0 %v1763
      %v1765 = vpop.xlane.xlu0 %1764
      %v1766 = vsel %vm794, %v1746, 0.0
      %1767 = vadd.xlane.f32.xlu0 %v1766
      %v1768 = vpop.xlane.xlu0 %1767
      %v1769 = vsel %vm794, %v1748, 0.0
      %1770 = vadd.xlane.f32.xlu0 %v1769
      %v1771 = vpop.xlane.xlu0 %1770
      %v1772 = vsel %vm794, %v1750, 0.0
      %1773 = vadd.xlane.f32.xlu0 %v1772
      %v1774 = vpop.xlane.xlu0 %1773
      %v1775 = vrcp.pop %v1753
      %v1776 = vrcp.pop %v1756
      %v1777 = vrcp.pop %v1759
      %v1778 = vrcp.pop %v1762
      %v1779 = vrcp.pop %v1765
      %v1780 = vrcp.pop %v1768
      %v1781 = vrcp.pop %v1771
      %v1782 = vrcp.pop %v1774
      %v1783 = vmul.f32 %v1736, %v1775
      %v1784 = vmul.f32 %v1738, %v1776
      %v1785 = vmul.f32 %v1740, %v1777
      %v1786 = vmul.f32 %v1742, %v1778
      %v1787 = vmul.f32 %v1744, %v1779
      %v1788 = vmul.f32 %v1746, %v1780
      %v1789 = vmul.f32 %v1748, %v1781
      %v1790 = vmul.f32 %v1750, %v1782
      %v1792 = vsel %vm794, %v1783, 0
      %v1795 = vsel %vm794, %v1784, 0
      %v1798 = vsel %vm794, %v1785, 0
      %v1801 = vsel %vm794, %v1786, 0
      %v1804 = vsel %vm794, %v1787, 0
      %v1807 = vsel %vm794, %v1788, 0
      %v1810 = vsel %vm794, %v1789, 0
      %v1813 = vsel %vm794, %v1790, 0
      %1815 = vmatprep.subr.mxu0 0.0
      %1816 = vmatpush1.msra.mxu0 0.0
      %1817 = vmatprep.subr.mxu0 0.0
      %1818 = vmatpush1.msra.mxu0 0.0
      %1819 = vmatprep.subr.mxu0 0.0
      %1820 = vmatpush1.msra.mxu0 0.0
      %1821 = vmatprep.subr.mxu0 0.0
      %1822 = vmatpush1.msra.mxu0 0.0
      %1823 = vmatprep.subr.mxu0 0.0
      %1824 = vmatpush1.msra.mxu0 0.0
      %1825 = vmatprep.subr.mxu0 0.0
      %1826 = vmatpush1.msra.mxu0 0.0
      %1827 = vmatprep.subr.mxu0 0.0
      %1828 = vmatpush1.msra.mxu0 0.0
      %1829 = vmatprep.subr.mxu0 0.0
      %1830 = vmatpush1.msra.mxu0 0.0
      %1831 = vmatprep.subr.mxu0 0.0
      %1832 = vmatpush1.msra.mxu0 %v531
      %1833 = vmatprep.subr.mxu0 0.0
      %1834 = vmatpush1.msra.mxu0 %v529
      %1835 = vmatprep.subr.mxu0 0.0
      %1836 = vmatpush1.msra.mxu0 %v527
      %1837 = vmatprep.subr.mxu0 0.0
      %1838 = vmatpush1.msra.mxu0 %v525
      %1839 = vmatprep.subr.mxu0 0.0
      %1840 = vmatpush1.msra.mxu0 %v523
      %1841 = vmatprep.subr.mxu0 0.0
      %1842 = vmatpush1.msra.mxu0 %v521
      %1843 = vmatprep.subr.mxu0 0.0
      %1844 = vmatpush1.msra.mxu0 %v519
      %1845 = vmatprep.subr.mxu0 0.0
      %1846 = vmatpush1.msra.mxu0 %v517
      %1847 = vmatprep.subr.mxu0 0.0
      %1848 = vmatpush2.msra.mxu0 0.0
      %1849 = vmatprep.subr.mxu0 0.0
      %1850 = vmatpush2.msra.mxu0 0.0
      %1851 = vmatprep.subr.mxu0 0.0
      %1852 = vmatpush2.msra.mxu0 0.0
      %1853 = vmatprep.subr.mxu0 0.0
      %1854 = vmatpush2.msra.mxu0 0.0
      %1855 = vmatprep.subr.mxu0 0.0
      %1856 = vmatpush2.msra.mxu0 0.0
      %1857 = vmatprep.subr.mxu0 0.0
      %1858 = vmatpush2.msra.mxu0 0.0
      %1859 = vmatprep.subr.mxu0 0.0
      %1860 = vmatpush2.msra.mxu0 0.0
      %1861 = vmatprep.subr.mxu0 0.0
      %1862 = vmatpush2.msra.mxu0 0.0
      %1863 = vmatprep.subr.mxu0 0.0
      %1864 = vmatpush2.msra.mxu0 0.0
      %1865 = vmatprep.subr.mxu0 0.0
      %1866 = vmatpush2.msra.mxu0 0.0
      %1867 = vmatprep.subr.mxu0 0.0
      %1868 = vmatpush2.msra.mxu0 0.0
      %1869 = vmatprep.subr.mxu0 0.0
      %1870 = vmatpush2.msra.mxu0 0.0
      %1871 = vmatprep.subr.mxu0 0.0
      %1872 = vmatpush2.msra.mxu0 0.0
      %1873 = vmatprep.subr.mxu0 0.0
      %1874 = vmatpush2.msra.mxu0 0.0
      %1875 = vmatprep.subr.mxu0 0.0
      %1876 = vmatpush2.msra.mxu0 0.0
      %1877 = vmatprep.subr.mxu0 0.0
      %1878 = vmatpush2.msra.mxu0 0.0
      %1879 = vmatprep.mubr.f32.mxu0 0.0
      %1880 = vmatmul.mubr.f32.gmra.mxu0 %v1792
      %v1881 = vpop.f32.mrf.mxu0
      %v1882 = vadd.f32 0.0, %v1881
      %v1883 = vpop.f32.mrf.mxu0
      %1884 = vmatprep.mubr.f32.mxu0 0.0
      %1885 = vmatmul.mubr.f32.gmra.mxu0 %v1795
      %v1886 = vpop.f32.mrf.mxu0
      %v1887 = vadd.f32 0.0, %v1886
      %v1888 = vpop.f32.mrf.mxu0
      %1889 = vmatprep.mubr.f32.mxu0 0.0
      %1890 = vmatmul.mubr.f32.gmra.mxu0 %v1798
      %v1891 = vpop.f32.mrf.mxu0
      %v1892 = vadd.f32 0.0, %v1891
      %v1893 = vpop.f32.mrf.mxu0
      %1894 = vmatprep.mubr.f32.mxu0 0.0
      %1895 = vmatmul.mubr.f32.gmra.mxu0 %v1801
      %v1896 = vpop.f32.mrf.mxu0
      %v1897 = vadd.f32 0.0, %v1896
      %v1898 = vpop.f32.mrf.mxu0
      %1899 = vmatprep.mubr.f32.mxu0 0.0
      %1900 = vmatmul.mubr.f32.gmra.mxu0 %v1804
      %v1901 = vpop.f32.mrf.mxu0
      %v1902 = vadd.f32 0.0, %v1901
      %v1903 = vpop.f32.mrf.mxu0
      %1904 = vmatprep.mubr.f32.mxu0 0.0
      %1905 = vmatmul.mubr.f32.gmra.mxu0 %v1807
      %v1906 = vpop.f32.mrf.mxu0
      %v1907 = vadd.f32 0.0, %v1906
      %v1908 = vpop.f32.mrf.mxu0
      %1909 = vmatprep.mubr.f32.mxu0 0.0
      %1910 = vmatmul.mubr.f32.gmra.mxu0 %v1810
      %v1911 = vpop.f32.mrf.mxu0
      %v1912 = vadd.f32 0.0, %v1911
      %v1913 = vpop.f32.mrf.mxu0
      %1914 = vmatprep.mubr.f32.mxu0 0.0
      %1915 = vmatmul.mubr.f32.gmra.mxu0 %v1813
      %v1916 = vpop.f32.mrf.mxu0
      %v1917 = vadd.f32 0.0, %v1916
      %v1918 = vpop.f32.mrf.mxu0
      %1919 = vdwg.mxu0
      %v1920 = vsel %vm732, %v685, %v709
      %v1921 = vsel %vm732, %v687, %v711
      %v1922 = vsel %vm732, %v689, %v713
      %v1923 = vsel %vm732, %v691, %v715
      %v1924 = vsel %vm732, %v693, %v717
      %v1925 = vsel %vm732, %v695, %v719
      %v1926 = vsel %vm732, %v697, %v721
      %v1927 = vsel %vm732, %v699, %v723
      %v1928 = vsel %vm741, %v1920, %v302
      %v1929 = vsel %vm741, %v1921, %v307
      %v1930 = vsel %vm741, %v1922, %v312
      %v1931 = vsel %vm741, %v1923, %v317
      %v1932 = vsel %vm741, %v1924, %v322
      %v1933 = vsel %vm741, %v1925, %v327
      %v1934 = vsel %vm741, %v1926, %v332
      %v1935 = vsel %vm741, %v1927, %v337
      %v1936 = vsel %vm750, %v1928, %v373
      %v1937 = vsel %vm750, %v1929, %v375
      %v1938 = vsel %vm750, %v1930, %v377
      %v1939 = vsel %vm750, %v1931, %v379
      %v1940 = vsel %vm750, %v1932, %v381
      %v1941 = vsel %vm750, %v1933, %v383
      %v1942 = vsel %vm750, %v1934, %v385
      %v1943 = vsel %vm750, %v1935, %v387
      %v1944 = vsel %vm210, %v1936, %v397
      %v1945 = vsel %vm210, %v1937, %v399
      %v1946 = vsel %vm210, %v1938, %v401
      %v1947 = vsel %vm210, %v1939, %v403
      %v1948 = vsel %vm210, %v1940, %v405
      %v1949 = vsel %vm210, %v1941, %v407
      %v1950 = vsel %vm210, %v1942, %v409
      %v1951 = vsel %vm210, %v1943, %v411
      %v1952 = vsel %vm767, %v1944, %v421
      %v1953 = vsel %vm767, %v1945, %v423
      %v1954 = vsel %vm767, %v1946, %v425
      %v1955 = vsel %vm767, %v1947, %v427
      %v1956 = vsel %vm767, %v1948, %v429
      %v1957 = vsel %vm767, %v1949, %v431
      %v1958 = vsel %vm767, %v1950, %v433
      %v1959 = vsel %vm767, %v1951, %v435
      %v1960 = vsel %vm776, %v1952, %v445
      %v1961 = vsel %vm776, %v1953, %v447
      %v1962 = vsel %vm776, %v1954, %v449
      %v1963 = vsel %vm776, %v1955, %v451
      %v1964 = vsel %vm776, %v1956, %v453
      %v1965 = vsel %vm776, %v1957, %v455
      %v1966 = vsel %vm776, %v1958, %v457
      %v1967 = vsel %vm776, %v1959, %v459
      %v1968 = vsel %vm785, %v1960, %v469
      %v1969 = vsel %vm785, %v1961, %v471
      %v1970 = vsel %vm785, %v1962, %v473
      %v1971 = vsel %vm785, %v1963, %v475
      %v1972 = vsel %vm785, %v1964, %v477
      %v1973 = vsel %vm785, %v1965, %v479
      %v1974 = vsel %vm785, %v1966, %v481
      %v1975 = vsel %vm785, %v1967, %v483
      %v1976 = vsel %vm794, %v1968, %v493
      %v1977 = vsel %vm794, %v1969, %v495
      %v1978 = vsel %vm794, %v1970, %v497
      %v1979 = vsel %vm794, %v1971, %v499
      %v1980 = vsel %vm794, %v1972, %v501
      %v1981 = vsel %vm794, %v1973, %v503
      %v1982 = vsel %vm794, %v1974, %v505
      %v1983 = vsel %vm794, %v1975, %v507
      %v1984 = vsel %vm803, %v1976, %v517
      %v1985 = vsel %vm803, %v1977, %v519
      %v1986 = vsel %vm803, %v1978, %v521
      %v1987 = vsel %vm803, %v1979, %v523
      %v1988 = vsel %vm803, %v1980, %v525
      %v1989 = vsel %vm803, %v1981, %v527
      %v1990 = vsel %vm803, %v1982, %v529
      %v1991 = vsel %vm803, %v1983, %v531
      %v1992 = vsel %vm812, %v1984, %v541
      %v1993 = vsel %vm812, %v1985, %v543
      %v1994 = vsel %vm812, %v1986, %v545
      %v1995 = vsel %vm812, %v1987, %v547
      %v1996 = vsel %vm812, %v1988, %v549
      %v1997 = vsel %vm812, %v1989, %v551
      %v1998 = vsel %vm812, %v1990, %v553
      %v1999 = vsel %vm812, %v1991, %v555
      %v2000 = vsel %vm821, %v1992, %v565
      %v2001 = vsel %vm821, %v1993, %v567
      %v2002 = vsel %vm821, %v1994, %v569
      %v2003 = vsel %vm821, %v1995, %v571
      %v2004 = vsel %vm821, %v1996, %v573
      %v2005 = vsel %vm821, %v1997, %v575
      %v2006 = vsel %vm821, %v1998, %v577
      %v2007 = vsel %vm821, %v1999, %v579
      %v2008 = vsel %vm830, %v2000, %v589
      %v2009 = vsel %vm830, %v2001, %v591
      %v2010 = vsel %vm830, %v2002, %v593
      %v2011 = vsel %vm830, %v2003, %v595
      %v2012 = vsel %vm830, %v2004, %v597
      %v2013 = vsel %vm830, %v2005, %v599
      %v2014 = vsel %vm830, %v2006, %v601
      %v2015 = vsel %vm830, %v2007, %v603
      %v2016 = vsel %vm839, %v2008, %v613
      %v2017 = vsel %vm839, %v2009, %v615
      %v2018 = vsel %vm839, %v2010, %v617
      %v2019 = vsel %vm839, %v2011, %v619
      %v2020 = vsel %vm839, %v2012, %v621
      %v2021 = vsel %vm839, %v2013, %v623
      %v2022 = vsel %vm839, %v2014, %v625
      %v2023 = vsel %vm839, %v2015, %v627
      %v2024 = vsel %vm848, %v2016, %v637
      %v2025 = vsel %vm848, %v2017, %v639
      %v2026 = vsel %vm848, %v2018, %v641
      %v2027 = vsel %vm848, %v2019, %v643
      %v2028 = vsel %vm848, %v2020, %v645
      %v2029 = vsel %vm848, %v2021, %v647
      %v2030 = vsel %vm848, %v2022, %v649
      %v2031 = vsel %vm848, %v2023, %v651
      %v2032 = vsel %vm857, %v2024, %v661
      %v2033 = vsel %vm857, %v2025, %v663
      %v2034 = vsel %vm857, %v2026, %v665
      %v2035 = vsel %vm857, %v2027, %v667
      %v2036 = vsel %vm857, %v2028, %v669
      %v2037 = vsel %vm857, %v2029, %v671
      %v2038 = vsel %vm857, %v2030, %v673
      %v2039 = vsel %vm857, %v2031, %v675
      %v2040 = vmul.f32 %v2032, %v340
      %v2041 = vmul.f32 %v2033, %v341
      %v2042 = vmul.f32 %v2034, %v342
      %v2043 = vmul.f32 %v2035, %v343
      %v2044 = vmul.f32 %v2036, %v344
      %v2045 = vmul.f32 %v2037, %v345
      %v2046 = vmul.f32 %v2038, %v346
      %v2047 = vmul.f32 %v2039, %v347
      %2048 = vmatprep.subr.mxu0 0.0
      %2049 = vmatpush1.msra.mxu0 %v363
      %2050 = vmatprep.subr.mxu0 0.0
      %2051 = vmatpush1.msra.mxu0 %v362
      %2052 = vmatprep.subr.mxu0 0.0
      %2053 = vmatpush1.msra.mxu0 %v361
      %2054 = vmatprep.subr.mxu0 0.0
      %2055 = vmatpush1.msra.mxu0 %v360
      %2056 = vmatprep.subr.mxu0 0.0
      %2057 = vmatpush1.msra.mxu0 %v359
      %2058 = vmatprep.subr.mxu0 0.0
      %2059 = vmatpush1.msra.mxu0 %v358
      %2060 = vmatprep.subr.mxu0 0.0
      %2061 = vmatpush1.msra.mxu0 %v357
      %2062 = vmatprep.subr.mxu0 0.0
      %2063 = vmatpush1.msra.mxu0 %v356
      %2064 = vmatprep.subr.mxu0 0.0
      %2065 = vmatpush1.msra.mxu0 %v355
      %2066 = vmatprep.subr.mxu0 0.0
      %2067 = vmatpush1.msra.mxu0 %v354
      %2068 = vmatprep.subr.mxu0 0.0
      %2069 = vmatpush1.msra.mxu0 %v353
      %2070 = vmatprep.subr.mxu0 0.0
      %2071 = vmatpush1.msra.mxu0 %v352
      %2072 = vmatprep.subr.mxu0 0.0
      %2073 = vmatpush1.msra.mxu0 %v351
      %2074 = vmatprep.subr.mxu0 0.0
      %2075 = vmatpush1.msra.mxu0 %v350
      %2076 = vmatprep.subr.mxu0 0.0
      %2077 = vmatpush1.msra.mxu0 %v349
      %2078 = vmatprep.subr.mxu0 0.0
      %2079 = vmatpush1.msra.mxu0 %v348
      %2080 = vmatprep.subr.mxu0 0.0
      %2081 = vmatpush2.msra.mxu0 0.0
      %2082 = vmatprep.subr.mxu0 0.0
      %2083 = vmatpush2.msra.mxu0 0.0
      %2084 = vmatprep.subr.mxu0 0.0
      %2085 = vmatpush2.msra.mxu0 0.0
      %2086 = vmatprep.subr.mxu0 0.0
      %2087 = vmatpush2.msra.mxu0 0.0
      %2088 = vmatprep.subr.mxu0 0.0
      %2089 = vmatpush2.msra.mxu0 0.0
      %2090 = vmatprep.subr.mxu0 0.0
      %2091 = vmatpush2.msra.mxu0 0.0
      %2092 = vmatprep.subr.mxu0 0.0
      %2093 = vmatpush2.msra.mxu0 0.0
      %2094 = vmatprep.subr.mxu0 0.0
      %2095 = vmatpush2.msra.mxu0 0.0
      %2096 = vmatprep.subr.mxu0 0.0
      %2097 = vmatpush2.msra.mxu0 0.0
      %2098 = vmatprep.subr.mxu0 0.0
      %2099 = vmatpush2.msra.mxu0 0.0
      %2100 = vmatprep.subr.mxu0 0.0
      %2101 = vmatpush2.msra.mxu0 0.0
      %2102 = vmatprep.subr.mxu0 0.0
      %2103 = vmatpush2.msra.mxu0 0.0
      %2104 = vmatprep.subr.mxu0 0.0
      %2105 = vmatpush2.msra.mxu0 0.0
      %2106 = vmatprep.subr.mxu0 0.0
      %2107 = vmatpush2.msra.mxu0 0.0
      %2108 = vmatprep.subr.mxu0 0.0
      %2109 = vmatpush2.msra.mxu0 0.0
      %2110 = vmatprep.subr.mxu0 0.0
      %2111 = vmatpush2.msra.mxu0 0.0
      %2112 = vmatprep.mubr.f32.mxu0 0.0
      %2113 = vmatmul.mubr.f32.gmra.mxu0 %v2040
      %v2114 = vpop.f32.mrf.mxu0
      %v2115 = vadd.f32 0.0, %v2114
      %v2116 = vpop.f32.mrf.mxu0
      %2117 = vmatprep.mubr.f32.mxu0 0.0
      %2118 = vmatmul.mubr.f32.gmra.mxu0 %v2041
      %v2119 = vpop.f32.mrf.mxu0
      %v2120 = vadd.f32 0.0, %v2119
      %v2121 = vpop.f32.mrf.mxu0
      %2122 = vmatprep.mubr.f32.mxu0 0.0
      %2123 = vmatmul.mubr.f32.gmra.mxu0 %v2042
      %v2124 = vpop.f32.mrf.mxu0
      %v2125 = vadd.f32 0.0, %v2124
      %v2126 = vpop.f32.mrf.mxu0
      %2127 = vmatprep.mubr.f32.mxu0 0.0
      %2128 = vmatmul.mubr.f32.gmra.mxu0 %v2043
      %v2129 = vpop.f32.mrf.mxu0
      %v2130 = vadd.f32 0.0, %v2129
      %v2131 = vpop.f32.mrf.mxu0
      %2132 = vmatprep.mubr.f32.mxu0 0.0
      %2133 = vmatmul.mubr.f32.gmra.mxu0 %v2044
      %v2134 = vpop.f32.mrf.mxu0
      %v2135 = vadd.f32 0.0, %v2134
      %v2136 = vpop.f32.mrf.mxu0
      %2137 = vmatprep.mubr.f32.mxu0 0.0
      %2138 = vmatmul.mubr.f32.gmra.mxu0 %v2045
      %v2139 = vpop.f32.mrf.mxu0
      %v2140 = vadd.f32 0.0, %v2139
      %v2141 = vpop.f32.mrf.mxu0
      %2142 = vmatprep.mubr.f32.mxu0 0.0
      %2143 = vmatmul.mubr.f32.gmra.mxu0 %v2046
      %v2144 = vpop.f32.mrf.mxu0
      %v2145 = vadd.f32 0.0, %v2144
      %v2146 = vpop.f32.mrf.mxu0
      %2147 = vmatprep.mubr.f32.mxu0 0.0
      %2148 = vmatmul.mubr.f32.gmra.mxu0 %v2047
      %v2149 = vpop.f32.mrf.mxu0
      %v2150 = vadd.f32 0.0, %v2149
      %v2151 = vpop.f32.mrf.mxu0
      %2152 = vdwg.mxu0
      %v2153 = vsel %vm732, %v685, 0
      %v2155 = vsel %vm732, %v687, 0
      %v2157 = vsel %vm732, %v689, 0
      %v2159 = vsel %vm732, %v691, 0
      %v2161 = vsel %vm732, %v693, 0
      %v2163 = vsel %vm732, %v695, 0
      %v2165 = vsel %vm732, %v697, 0
      %v2167 = vsel %vm732, %v699, 0
      %v2169 = vsel %vm732, %v589, 0
      %v2171 = vsel %vm732, %v591, 0
      %v2173 = vsel %vm732, %v593, 0
      %v2175 = vsel %vm732, %v595, 0
      %v2177 = vsel %vm732, %v597, 0
      %v2179 = vsel %vm732, %v599, 0
      %v2181 = vsel %vm732, %v601, 0
      %v2183 = vsel %vm732, %v603, 0
      %2185 = vmatprep.subr.mxu0 0.0
      %2186 = vmatpush1.xpose.msra.mxu0 0.0
      %2187 = vmatprep.subr.mxu0 0.0
      %2188 = vmatpush1.xpose.msra.mxu0 0.0
      %2189 = vmatprep.subr.mxu0 0.0
      %2190 = vmatpush1.xpose.msra.mxu0 0.0
      %2191 = vmatprep.subr.mxu0 0.0
      %2192 = vmatpush1.xpose.msra.mxu0 0.0
      %2193 = vmatprep.subr.mxu0 0.0
      %2194 = vmatpush1.xpose.msra.mxu0 0.0
      %2195 = vmatprep.subr.mxu0 0.0
      %2196 = vmatpush1.xpose.msra.mxu0 0.0
      %2197 = vmatprep.subr.mxu0 0.0
      %2198 = vmatpush1.xpose.msra.mxu0 0.0
      %2199 = vmatprep.subr.mxu0 0.0
      %2200 = vmatpush1.xpose.msra.mxu0 0.0
      %2201 = vmatprep.subr.mxu0 0.0
      %2202 = vmatpush1.xpose.msra.mxu0 %v2183
      %2203 = vmatprep.subr.mxu0 0.0
      %2204 = vmatpush1.xpose.msra.mxu0 %v2181
      %2205 = vmatprep.subr.mxu0 0.0
      %2206 = vmatpush1.xpose.msra.mxu0 %v2179
      %2207 = vmatprep.subr.mxu0 0.0
      %2208 = vmatpush1.xpose.msra.mxu0 %v2177
      %2209 = vmatprep.subr.mxu0 0.0
      %2210 = vmatpush1.xpose.msra.mxu0 %v2175
      %2211 = vmatprep.subr.mxu0 0.0
      %2212 = vmatpush1.xpose.msra.mxu0 %v2173
      %2213 = vmatprep.subr.mxu0 0.0
      %2214 = vmatpush1.xpose.msra.mxu0 %v2171
      %2215 = vmatprep.subr.mxu0 0.0
      %2216 = vmatpush1.xpose.msra.mxu0 %v2169
      %2217 = vmatprep.subr.mxu0 0.0
      %2218 = vmatpush2.xpose.msra.mxu0 0.0
      %2219 = vmatprep.subr.mxu0 0.0
      %2220 = vmatpush2.xpose.msra.mxu0 0.0
      %2221 = vmatprep.subr.mxu0 0.0
      %2222 = vmatpush2.xpose.msra.mxu0 0.0
      %2223 = vmatprep.subr.mxu0 0.0
      %2224 = vmatpush2.xpose.msra.mxu0 0.0
      %2225 = vmatprep.subr.mxu0 0.0
      %2226 = vmatpush2.xpose.msra.mxu0 0.0
      %2227 = vmatprep.subr.mxu0 0.0
      %2228 = vmatpush2.xpose.msra.mxu0 0.0
      %2229 = vmatprep.subr.mxu0 0.0
      %2230 = vmatpush2.xpose.msra.mxu0 0.0
      %2231 = vmatprep.subr.mxu0 0.0
      %2232 = vmatpush2.xpose.msra.mxu0 0.0
      %2233 = vmatprep.subr.mxu0 0.0
      %2234 = vmatpush2.xpose.msra.mxu0 0.0
      %2235 = vmatprep.subr.mxu0 0.0
      %2236 = vmatpush2.xpose.msra.mxu0 0.0
      %2237 = vmatprep.subr.mxu0 0.0
      %2238 = vmatpush2.xpose.msra.mxu0 0.0
      %2239 = vmatprep.subr.mxu0 0.0
      %2240 = vmatpush2.xpose.msra.mxu0 0.0
      %2241 = vmatprep.subr.mxu0 0.0
      %2242 = vmatpush2.xpose.msra.mxu0 0.0
      %2243 = vmatprep.subr.mxu0 0.0
      %2244 = vmatpush2.xpose.msra.mxu0 0.0
      %2245 = vmatprep.subr.mxu0 0.0
      %2246 = vmatpush2.xpose.msra.mxu0 0.0
      %2247 = vmatprep.subr.mxu0 0.0
      %2248 = vmatpush2.xpose.msra.mxu0 0.0
      %2249 = vmatprep.mubr.f32.mxu0 0.0
      %2250 = vmatmul.mubr.f32.gmra.mxu0 %v2153
      %v2251 = vpop.f32.mrf.mxu0
      %v2252 = vadd.f32 %v2115, %v2251
      %v2253 = vpop.f32.mrf.mxu0
      %2254 = vmatprep.mubr.f32.mxu0 0.0
      %2255 = vmatmul.mubr.f32.gmra.mxu0 %v2155
      %v2256 = vpop.f32.mrf.mxu0
      %v2257 = vadd.f32 %v2120, %v2256
      %v2258 = vpop.f32.mrf.mxu0
      %2259 = vmatprep.mubr.f32.mxu0 0.0
      %2260 = vmatmul.mubr.f32.gmra.mxu0 %v2157
      %v2261 = vpop.f32.mrf.mxu0
      %v2262 = vadd.f32 %v2125, %v2261
      %v2263 = vpop.f32.mrf.mxu0
      %2264 = vmatprep.mubr.f32.mxu0 0.0
      %2265 = vmatmul.mubr.f32.gmra.mxu0 %v2159
      %v2266 = vpop.f32.mrf.mxu0
      %v2267 = vadd.f32 %v2130, %v2266
      %v2268 = vpop.f32.mrf.mxu0
      %2269 = vmatprep.mubr.f32.mxu0 0.0
      %2270 = vmatmul.mubr.f32.gmra.mxu0 %v2161
      %v2271 = vpop.f32.mrf.mxu0
      %v2272 = vadd.f32 %v2135, %v2271
      %v2273 = vpop.f32.mrf.mxu0
      %2274 = vmatprep.mubr.f32.mxu0 0.0
      %2275 = vmatmul.mubr.f32.gmra.mxu0 %v2163
      %v2276 = vpop.f32.mrf.mxu0
      %v2277 = vadd.f32 %v2140, %v2276
      %v2278 = vpop.f32.mrf.mxu0
      %2279 = vmatprep.mubr.f32.mxu0 0.0
      %2280 = vmatmul.mubr.f32.gmra.mxu0 %v2165
      %v2281 = vpop.f32.mrf.mxu0
      %v2282 = vadd.f32 %v2145, %v2281
      %v2283 = vpop.f32.mrf.mxu0
      %2284 = vmatprep.mubr.f32.mxu0 0.0
      %2285 = vmatmul.mubr.f32.gmra.mxu0 %v2167
      %v2286 = vpop.f32.mrf.mxu0
      %v2287 = vadd.f32 %v2150, %v2286
      %v2288 = vpop.f32.mrf.mxu0
      %2289 = vdwg.mxu0
      %v2290 = vsel %vm794, %v2252, -inf
      %2291 = vmax.xlane.f32.xlu0 %v2290
      %v2292 = vpop.xlane.xlu0 %2291
      %v2293 = vsel %vm794, %v2257, -inf
      %2294 = vmax.xlane.f32.xlu0 %v2293
      %v2295 = vpop.xlane.xlu0 %2294
      %v2296 = vsel %vm794, %v2262, -inf
      %2297 = vmax.xlane.f32.xlu0 %v2296
      %v2298 = vpop.xlane.xlu0 %2297
      %v2299 = vsel %vm794, %v2267, -inf
      %2300 = vmax.xlane.f32.xlu0 %v2299
      %v2301 = vpop.xlane.xlu0 %2300
      %v2302 = vsel %vm794, %v2272, -inf
      %2303 = vmax.xlane.f32.xlu0 %v2302
      %v2304 = vpop.xlane.xlu0 %2303
      %v2305 = vsel %vm794, %v2277, -inf
      %2306 = vmax.xlane.f32.xlu0 %v2305
      %v2307 = vpop.xlane.xlu0 %2306
      %v2308 = vsel %vm794, %v2282, -inf
      %2309 = vmax.xlane.f32.xlu0 %v2308
      %v2310 = vpop.xlane.xlu0 %2309
      %v2311 = vsel %vm794, %v2287, -inf
      %2312 = vmax.xlane.f32.xlu0 %v2311
      %v2313 = vpop.xlane.xlu0 %2312
      %v2314 = vsub.f32 %v2252, %v2292
      %v2315 = vsub.f32 %v2257, %v2295
      %v2316 = vsub.f32 %v2262, %v2298
      %v2317 = vsub.f32 %v2267, %v2301
      %v2318 = vsub.f32 %v2272, %v2304
      %v2319 = vsub.f32 %v2277, %v2307
      %v2320 = vsub.f32 %v2282, %v2310
      %v2321 = vsub.f32 %v2287, %v2313
      %v2322 = vmul.f32 %v2314, 1.442695
      %v2323 = vpow.pop %v2322
      %v2324 = vmul.f32 %v2315, 1.442695
      %v2325 = vpow.pop %v2324
      %v2326 = vmul.f32 %v2316, 1.442695
      %v2327 = vpow.pop %v2326
      %v2328 = vmul.f32 %v2317, 1.442695
      %v2329 = vpow.pop %v2328
      %v2330 = vmul.f32 %v2318, 1.442695
      %v2331 = vpow.pop %v2330
      %v2332 = vmul.f32 %v2319, 1.442695
      %v2333 = vpow.pop %v2332
      %v2334 = vmul.f32 %v2320, 1.442695
      %v2335 = vpow.pop %v2334
      %v2336 = vmul.f32 %v2321, 1.442695
      %v2337 = vpow.pop %v2336
      %v2338 = vsel %vm794, %v2323, 0.0
      %2339 = vadd.xlane.f32.xlu0 %v2338
      %v2340 = vpop.xlane.xlu0 %2339
      %v2341 = vsel %vm794, %v2325, 0.0
      %2342 = vadd.xlane.f32.xlu0 %v2341
      %v2343 = vpop.xlane.xlu0 %2342
      %v2344 = vsel %vm794, %v2327, 0.0
      %2345 = vadd.xlane.f32.xlu0 %v2344
      %v2346 = vpop.xlane.xlu0 %2345
      %v2347 = vsel %vm794, %v2329, 0.0
      %2348 = vadd.xlane.f32.xlu0 %v2347
      %v2349 = vpop.xlane.xlu0 %2348
      %v2350 = vsel %vm794, %v2331, 0.0
      %2351 = vadd.xlane.f32.xlu0 %v2350
      %v2352 = vpop.xlane.xlu0 %2351
      %v2353 = vsel %vm794, %v2333, 0.0
      %2354 = vadd.xlane.f32.xlu0 %v2353
      %v2355 = vpop.xlane.xlu0 %2354
      %v2356 = vsel %vm794, %v2335, 0.0
      %2357 = vadd.xlane.f32.xlu0 %v2356
      %v2358 = vpop.xlane.xlu0 %2357
      %v2359 = vsel %vm794, %v2337, 0.0
      %2360 = vadd.xlane.f32.xlu0 %v2359
      %v2361 = vpop.xlane.xlu0 %2360
      %v2362 = vrcp.pop %v2340
      %v2363 = vrcp.pop %v2343
      %v2364 = vrcp.pop %v2346
      %v2365 = vrcp.pop %v2349
      %v2366 = vrcp.pop %v2352
      %v2367 = vrcp.pop %v2355
      %v2368 = vrcp.pop %v2358
      %v2369 = vrcp.pop %v2361
      %v2370 = vmul.f32 %v2323, %v2362
      %v2371 = vmul.f32 %v2325, %v2363
      %v2372 = vmul.f32 %v2327, %v2364
      %v2373 = vmul.f32 %v2329, %v2365
      %v2374 = vmul.f32 %v2331, %v2366
      %v2375 = vmul.f32 %v2333, %v2367
      %v2376 = vmul.f32 %v2335, %v2368
      %v2377 = vmul.f32 %v2337, %v2369
      %v2379 = vsel %vm794, %v2370, 0
      %v2382 = vsel %vm794, %v2371, 0
      %v2385 = vsel %vm794, %v2372, 0
      %v2388 = vsel %vm794, %v2373, 0
      %v2391 = vsel %vm794, %v2374, 0
      %v2394 = vsel %vm794, %v2375, 0
      %v2397 = vsel %vm794, %v2376, 0
      %v2400 = vsel %vm794, %v2377, 0
      %2402 = vmatprep.subr.mxu0 0.0
      %2403 = vmatpush1.msra.mxu0 0.0
      %2404 = vmatprep.subr.mxu0 0.0
      %2405 = vmatpush1.msra.mxu0 0.0
      %2406 = vmatprep.subr.mxu0 0.0
      %2407 = vmatpush1.msra.mxu0 0.0
      %2408 = vmatprep.subr.mxu0 0.0
      %2409 = vmatpush1.msra.mxu0 0.0
      %2410 = vmatprep.subr.mxu0 0.0
      %2411 = vmatpush1.msra.mxu0 0.0
      %2412 = vmatprep.subr.mxu0 0.0
      %2413 = vmatpush1.msra.mxu0 0.0
      %2414 = vmatprep.subr.mxu0 0.0
      %2415 = vmatpush1.msra.mxu0 0.0
      %2416 = vmatprep.subr.mxu0 0.0
      %2417 = vmatpush1.msra.mxu0 0.0
      %2418 = vmatprep.subr.mxu0 0.0
      %2419 = vmatpush1.msra.mxu0 %v507
      %2420 = vmatprep.subr.mxu0 0.0
      %2421 = vmatpush1.msra.mxu0 %v505
      %2422 = vmatprep.subr.mxu0 0.0
      %2423 = vmatpush1.msra.mxu0 %v503
      %2424 = vmatprep.subr.mxu0 0.0
      %2425 = vmatpush1.msra.mxu0 %v501
      %2426 = vmatprep.subr.mxu0 0.0
      %2427 = vmatpush1.msra.mxu0 %v499
      %2428 = vmatprep.subr.mxu0 0.0
      %2429 = vmatpush1.msra.mxu0 %v497
      %2430 = vmatprep.subr.mxu0 0.0
      %2431 = vmatpush1.msra.mxu0 %v495
      %2432 = vmatprep.subr.mxu0 0.0
      %2433 = vmatpush1.msra.mxu0 %v493
      %2434 = vmatprep.subr.mxu0 0.0
      %2435 = vmatpush2.msra.mxu0 0.0
      %2436 = vmatprep.subr.mxu0 0.0
      %2437 = vmatpush2.msra.mxu0 0.0
      %2438 = vmatprep.subr.mxu0 0.0
      %2439 = vmatpush2.msra.mxu0 0.0
      %2440 = vmatprep.subr.mxu0 0.0
      %2441 = vmatpush2.msra.mxu0 0.0
      %2442 = vmatprep.subr.mxu0 0.0
      %2443 = vmatpush2.msra.mxu0 0.0
      %2444 = vmatprep.subr.mxu0 0.0
      %2445 = vmatpush2.msra.mxu0 0.0
      %2446 = vmatprep.subr.mxu0 0.0
      %2447 = vmatpush2.msra.mxu0 0.0
      %2448 = vmatprep.subr.mxu0 0.0
      %2449 = vmatpush2.msra.mxu0 0.0
      %2450 = vmatprep.subr.mxu0 0.0
      %2451 = vmatpush2.msra.mxu0 0.0
      %2452 = vmatprep.subr.mxu0 0.0
      %2453 = vmatpush2.msra.mxu0 0.0
      %2454 = vmatprep.subr.mxu0 0.0
      %2455 = vmatpush2.msra.mxu0 0.0
      %2456 = vmatprep.subr.mxu0 0.0
      %2457 = vmatpush2.msra.mxu0 0.0
      %2458 = vmatprep.subr.mxu0 0.0
      %2459 = vmatpush2.msra.mxu0 0.0
      %2460 = vmatprep.subr.mxu0 0.0
      %2461 = vmatpush2.msra.mxu0 0.0
      %2462 = vmatprep.subr.mxu0 0.0
      %2463 = vmatpush2.msra.mxu0 0.0
      %2464 = vmatprep.subr.mxu0 0.0
      %2465 = vmatpush2.msra.mxu0 0.0
      %2466 = vmatprep.mubr.f32.mxu0 0.0
      %2467 = vmatmul.mubr.f32.gmra.mxu0 %v2379
      %v2468 = vpop.f32.mrf.mxu0
      %v2469 = vadd.f32 0.0, %v2468
      %v2470 = vpop.f32.mrf.mxu0
      %2471 = vmatprep.mubr.f32.mxu0 0.0
      %2472 = vmatmul.mubr.f32.gmra.mxu0 %v2382
      %v2473 = vpop.f32.mrf.mxu0
      %v2474 = vadd.f32 0.0, %v2473
      %v2475 = vpop.f32.mrf.mxu0
      %2476 = vmatprep.mubr.f32.mxu0 0.0
      %2477 = vmatmul.mubr.f32.gmra.mxu0 %v2385
      %v2478 = vpop.f32.mrf.mxu0
      %v2479 = vadd.f32 0.0, %v2478
      %v2480 = vpop.f32.mrf.mxu0
      %2481 = vmatprep.mubr.f32.mxu0 0.0
      %2482 = vmatmul.mubr.f32.gmra.mxu0 %v2388
      %v2483 = vpop.f32.mrf.mxu0
      %v2484 = vadd.f32 0.0, %v2483
      %v2485 = vpop.f32.mrf.mxu0
      %2486 = vmatprep.mubr.f32.mxu0 0.0
      %2487 = vmatmul.mubr.f32.gmra.mxu0 %v2391
      %v2488 = vpop.f32.mrf.mxu0
      %v2489 = vadd.f32 0.0, %v2488
      %v2490 = vpop.f32.mrf.mxu0
      %2491 = vmatprep.mubr.f32.mxu0 0.0
      %2492 = vmatmul.mubr.f32.gmra.mxu0 %v2394
      %v2493 = vpop.f32.mrf.mxu0
      %v2494 = vadd.f32 0.0, %v2493
      %v2495 = vpop.f32.mrf.mxu0
      %2496 = vmatprep.mubr.f32.mxu0 0.0
      %2497 = vmatmul.mubr.f32.gmra.mxu0 %v2397
      %v2498 = vpop.f32.mrf.mxu0
      %v2499 = vadd.f32 0.0, %v2498
      %v2500 = vpop.f32.mrf.mxu0
      %2501 = vmatprep.mubr.f32.mxu0 0.0
      %2502 = vmatmul.mubr.f32.gmra.mxu0 %v2400
      %v2503 = vpop.f32.mrf.mxu0
      %v2504 = vadd.f32 0.0, %v2503
      %v2505 = vpop.f32.mrf.mxu0
      %2506 = vdwg.mxu0
      %v2507 = vsel %vm732, %v661, %v685
      %v2508 = vsel %vm732, %v663, %v687
      %v2509 = vsel %vm732, %v665, %v689
      %v2510 = vsel %vm732, %v667, %v691
      %v2511 = vsel %vm732, %v669, %v693
      %v2512 = vsel %vm732, %v671, %v695
      %v2513 = vsel %vm732, %v673, %v697
      %v2514 = vsel %vm732, %v675, %v699
      %v2515 = vsel %vm741, %v2507, %v709
      %v2516 = vsel %vm741, %v2508, %v711
      %v2517 = vsel %vm741, %v2509, %v713
      %v2518 = vsel %vm741, %v2510, %v715
      %v2519 = vsel %vm741, %v2511, %v717
      %v2520 = vsel %vm741, %v2512, %v719
      %v2521 = vsel %vm741, %v2513, %v721
      %v2522 = vsel %vm741, %v2514, %v723
      %v2523 = vsel %vm750, %v2515, %v302
      %v2524 = vsel %vm750, %v2516, %v307
      %v2525 = vsel %vm750, %v2517, %v312
      %v2526 = vsel %vm750, %v2518, %v317
      %v2527 = vsel %vm750, %v2519, %v322
      %v2528 = vsel %vm750, %v2520, %v327
      %v2529 = vsel %vm750, %v2521, %v332
      %v2530 = vsel %vm750, %v2522, %v337
      %v2531 = vsel %vm210, %v2523, %v373
      %v2532 = vsel %vm210, %v2524, %v375
      %v2533 = vsel %vm210, %v2525, %v377
      %v2534 = vsel %vm210, %v2526, %v379
      %v2535 = vsel %vm210, %v2527, %v381
      %v2536 = vsel %vm210, %v2528, %v383
      %v2537 = vsel %vm210, %v2529, %v385
      %v2538 = vsel %vm210, %v2530, %v387
      %v2539 = vsel %vm767, %v2531, %v397
      %v2540 = vsel %vm767, %v2532, %v399
      %v2541 = vsel %vm767, %v2533, %v401
      %v2542 = vsel %vm767, %v2534, %v403
      %v2543 = vsel %vm767, %v2535, %v405
      %v2544 = vsel %vm767, %v2536, %v407
      %v2545 = vsel %vm767, %v2537, %v409
      %v2546 = vsel %vm767, %v2538, %v411
      %v2547 = vsel %vm776, %v2539, %v421
      %v2548 = vsel %vm776, %v2540, %v423
      %v2549 = vsel %vm776, %v2541, %v425
      %v2550 = vsel %vm776, %v2542, %v427
      %v2551 = vsel %vm776, %v2543, %v429
      %v2552 = vsel %vm776, %v2544, %v431
      %v2553 = vsel %vm776, %v2545, %v433
      %v2554 = vsel %vm776, %v2546, %v435
      %v2555 = vsel %vm785, %v2547, %v445
      %v2556 = vsel %vm785, %v2548, %v447
      %v2557 = vsel %vm785, %v2549, %v449
      %v2558 = vsel %vm785, %v2550, %v451
      %v2559 = vsel %vm785, %v2551, %v453
      %v2560 = vsel %vm785, %v2552, %v455
      %v2561 = vsel %vm785, %v2553, %v457
      %v2562 = vsel %vm785, %v2554, %v459
      %v2563 = vsel %vm794, %v2555, %v469
      %v2564 = vsel %vm794, %v2556, %v471
      %v2565 = vsel %vm794, %v2557, %v473
      %v2566 = vsel %vm794, %v2558, %v475
      %v2567 = vsel %vm794, %v2559, %v477
      %v2568 = vsel %vm794, %v2560, %v479
      %v2569 = vsel %vm794, %v2561, %v481
      %v2570 = vsel %vm794, %v2562, %v483
      %v2571 = vsel %vm803, %v2563, %v493
      %v2572 = vsel %vm803, %v2564, %v495
      %v2573 = vsel %vm803, %v2565, %v497
      %v2574 = vsel %vm803, %v2566, %v499
      %v2575 = vsel %vm803, %v2567, %v501
      %v2576 = vsel %vm803, %v2568, %v503
      %v2577 = vsel %vm803, %v2569, %v505
      %v2578 = vsel %vm803, %v2570, %v507
      %v2579 = vsel %vm812, %v2571, %v517
      %v2580 = vsel %vm812, %v2572, %v519
      %v2581 = vsel %vm812, %v2573, %v521
      %v2582 = vsel %vm812, %v2574, %v523
      %v2583 = vsel %vm812, %v2575, %v525
      %v2584 = vsel %vm812, %v2576, %v527
      %v2585 = vsel %vm812, %v2577, %v529
      %v2586 = vsel %vm812, %v2578, %v531
      %v2587 = vsel %vm821, %v2579, %v541
      %v2588 = vsel %vm821, %v2580, %v543
      %v2589 = vsel %vm821, %v2581, %v545
      %v2590 = vsel %vm821, %v2582, %v547
      %v2591 = vsel %vm821, %v2583, %v549
      %v2592 = vsel %vm821, %v2584, %v551
      %v2593 = vsel %vm821, %v2585, %v553
      %v2594 = vsel %vm821, %v2586, %v555
      %v2595 = vsel %vm830, %v2587, %v565
      %v2596 = vsel %vm830, %v2588, %v567
      %v2597 = vsel %vm830, %v2589, %v569
      %v2598 = vsel %vm830, %v2590, %v571
      %v2599 = vsel %vm830, %v2591, %v573
      %v2600 = vsel %vm830, %v2592, %v575
      %v2601 = vsel %vm830, %v2593, %v577
      %v2602 = vsel %vm830, %v2594, %v579
      %v2603 = vsel %vm839, %v2595, %v589
      %v2604 = vsel %vm839, %v2596, %v591
      %v2605 = vsel %vm839, %v2597, %v593
      %v2606 = vsel %vm839, %v2598, %v595
      %v2607 = vsel %vm839, %v2599, %v597
      %v2608 = vsel %vm839, %v2600, %v599
      %v2609 = vsel %vm839, %v2601, %v601
      %v2610 = vsel %vm839, %v2602, %v603
      %v2611 = vsel %vm848, %v2603, %v613
      %v2612 = vsel %vm848, %v2604, %v615
      %v2613 = vsel %vm848, %v2605, %v617
      %v2614 = vsel %vm848, %v2606, %v619
      %v2615 = vsel %vm848, %v2607, %v621
      %v2616 = vsel %vm848, %v2608, %v623
      %v2617 = vsel %vm848, %v2609, %v625
      %v2618 = vsel %vm848, %v2610, %v627
      %v2619 = vsel %vm857, %v2611, %v637
      %v2620 = vsel %vm857, %v2612, %v639
      %v2621 = vsel %vm857, %v2613, %v641
      %v2622 = vsel %vm857, %v2614, %v643
      %v2623 = vsel %vm857, %v2615, %v645
      %v2624 = vsel %vm857, %v2616, %v647
      %v2625 = vsel %vm857, %v2617, %v649
      %v2626 = vsel %vm857, %v2618, %v651
      %v2627 = vmul.f32 %v2619, %v340
      %v2628 = vmul.f32 %v2620, %v341
      %v2629 = vmul.f32 %v2621, %v342
      %v2630 = vmul.f32 %v2622, %v343
      %v2631 = vmul.f32 %v2623, %v344
      %v2632 = vmul.f32 %v2624, %v345
      %v2633 = vmul.f32 %v2625, %v346
      %v2634 = vmul.f32 %v2626, %v347
      %2635 = vmatprep.subr.mxu0 0.0
      %2636 = vmatpush1.msra.mxu0 %v363
      %2637 = vmatprep.subr.mxu0 0.0
      %2638 = vmatpush1.msra.mxu0 %v362
      %2639 = vmatprep.subr.mxu0 0.0
      %2640 = vmatpush1.msra.mxu0 %v361
      %2641 = vmatprep.subr.mxu0 0.0
      %2642 = vmatpush1.msra.mxu0 %v360
      %2643 = vmatprep.subr.mxu0 0.0
      %2644 = vmatpush1.msra.mxu0 %v359
      %2645 = vmatprep.subr.mxu0 0.0
      %2646 = vmatpush1.msra.mxu0 %v358
      %2647 = vmatprep.subr.mxu0 0.0
      %2648 = vmatpush1.msra.mxu0 %v357
      %2649 = vmatprep.subr.mxu0 0.0
      %2650 = vmatpush1.msra.mxu0 %v356
      %2651 = vmatprep.subr.mxu0 0.0
      %2652 = vmatpush1.msra.mxu0 %v355
      %2653 = vmatprep.subr.mxu0 0.0
      %2654 = vmatpush1.msra.mxu0 %v354
      %2655 = vmatprep.subr.mxu0 0.0
      %2656 = vmatpush1.msra.mxu0 %v353
      %2657 = vmatprep.subr.mxu0 0.0
      %2658 = vmatpush1.msra.mxu0 %v352
      %2659 = vmatprep.subr.mxu0 0.0
      %2660 = vmatpush1.msra.mxu0 %v351
      %2661 = vmatprep.subr.mxu0 0.0
      %2662 = vmatpush1.msra.mxu0 %v350
      %2663 = vmatprep.subr.mxu0 0.0
      %2664 = vmatpush1.msra.mxu0 %v349
      %2665 = vmatprep.subr.mxu0 0.0
      %2666 = vmatpush1.msra.mxu0 %v348
      %2667 = vmatprep.subr.mxu0 0.0
      %2668 = vmatpush2.msra.mxu0 0.0
      %2669 = vmatprep.subr.mxu0 0.0
      %2670 = vmatpush2.msra.mxu0 0.0
      %2671 = vmatprep.subr.mxu0 0.0
      %2672 = vmatpush2.msra.mxu0 0.0
      %2673 = vmatprep.subr.mxu0 0.0
      %2674 = vmatpush2.msra.mxu0 0.0
      %2675 = vmatprep.subr.mxu0 0.0
      %2676 = vmatpush2.msra.mxu0 0.0
      %2677 = vmatprep.subr.mxu0 0.0
      %2678 = vmatpush2.msra.mxu0 0.0
      %2679 = vmatprep.subr.mxu0 0.0
      %2680 = vmatpush2.msra.mxu0 0.0
      %2681 = vmatprep.subr.mxu0 0.0
      %2682 = vmatpush2.msra.mxu0 0.0
      %2683 = vmatprep.subr.mxu0 0.0
      %2684 = vmatpush2.msra.mxu0 0.0
      %2685 = vmatprep.subr.mxu0 0.0
      %2686 = vmatpush2.msra.mxu0 0.0
      %2687 = vmatprep.subr.mxu0 0.0
      %2688 = vmatpush2.msra.mxu0 0.0
      %2689 = vmatprep.subr.mxu0 0.0
      %2690 = vmatpush2.msra.mxu0 0.0
      %2691 = vmatprep.subr.mxu0 0.0
      %2692 = vmatpush2.msra.mxu0 0.0
      %2693 = vmatprep.subr.mxu0 0.0
      %2694 = vmatpush2.msra.mxu0 0.0
      %2695 = vmatprep.subr.mxu0 0.0
      %2696 = vmatpush2.msra.mxu0 0.0
      %2697 = vmatprep.subr.mxu0 0.0
      %2698 = vmatpush2.msra.mxu0 0.0
      %2699 = vmatprep.mubr.f32.mxu0 0.0
      %2700 = vmatmul.mubr.f32.gmra.mxu0 %v2627
      %v2701 = vpop.f32.mrf.mxu0
      %v2702 = vadd.f32 0.0, %v2701
      %v2703 = vpop.f32.mrf.mxu0
      %2704 = vmatprep.mubr.f32.mxu0 0.0
      %2705 = vmatmul.mubr.f32.gmra.mxu0 %v2628
      %v2706 = vpop.f32.mrf.mxu0
      %v2707 = vadd.f32 0.0, %v2706
      %v2708 = vpop.f32.mrf.mxu0
      %2709 = vmatprep.mubr.f32.mxu0 0.0
      %2710 = vmatmul.mubr.f32.gmra.mxu0 %v2629
      %v2711 = vpop.f32.mrf.mxu0
      %v2712 = vadd.f32 0.0, %v2711
      %v2713 = vpop.f32.mrf.mxu0
      %2714 = vmatprep.mubr.f32.mxu0 0.0
      %2715 = vmatmul.mubr.f32.gmra.mxu0 %v2630
      %v2716 = vpop.f32.mrf.mxu0
      %v2717 = vadd.f32 0.0, %v2716
      %v2718 = vpop.f32.mrf.mxu0
      %2719 = vmatprep.mubr.f32.mxu0 0.0
      %2720 = vmatmul.mubr.f32.gmra.mxu0 %v2631
      %v2721 = vpop.f32.mrf.mxu0
      %v2722 = vadd.f32 0.0, %v2721
      %v2723 = vpop.f32.mrf.mxu0
      %2724 = vmatprep.mubr.f32.mxu0 0.0
      %2725 = vmatmul.mubr.f32.gmra.mxu0 %v2632
      %v2726 = vpop.f32.mrf.mxu0
      %v2727 = vadd.f32 0.0, %v2726
      %v2728 = vpop.f32.mrf.mxu0
      %2729 = vmatprep.mubr.f32.mxu0 0.0
      %2730 = vmatmul.mubr.f32.gmra.mxu0 %v2633
      %v2731 = vpop.f32.mrf.mxu0
      %v2732 = vadd.f32 0.0, %v2731
      %v2733 = vpop.f32.mrf.mxu0
      %2734 = vmatprep.mubr.f32.mxu0 0.0
      %2735 = vmatmul.mubr.f32.gmra.mxu0 %v2634
      %v2736 = vpop.f32.mrf.mxu0
      %v2737 = vadd.f32 0.0, %v2736
      %v2738 = vpop.f32.mrf.mxu0
      %2739 = vdwg.mxu0
      %v2740 = vsel %vm732, %v661, 0
      %v2742 = vsel %vm732, %v663, 0
      %v2744 = vsel %vm732, %v665, 0
      %v2746 = vsel %vm732, %v667, 0
      %v2748 = vsel %vm732, %v669, 0
      %v2750 = vsel %vm732, %v671, 0
      %v2752 = vsel %vm732, %v673, 0
      %v2754 = vsel %vm732, %v675, 0
      %v2756 = vsel %vm732, %v565, 0
      %v2758 = vsel %vm732, %v567, 0
      %v2760 = vsel %vm732, %v569, 0
      %v2762 = vsel %vm732, %v571, 0
      %v2764 = vsel %vm732, %v573, 0
      %v2766 = vsel %vm732, %v575, 0
      %v2768 = vsel %vm732, %v577, 0
      %v2770 = vsel %vm732, %v579, 0
      %2772 = vmatprep.subr.mxu0 0.0
      %2773 = vmatpush1.xpose.msra.mxu0 0.0
      %2774 = vmatprep.subr.mxu0 0.0
      %2775 = vmatpush1.xpose.msra.mxu0 0.0
      %2776 = vmatprep.subr.mxu0 0.0
      %2777 = vmatpush1.xpose.msra.mxu0 0.0
      %2778 = vmatprep.subr.mxu0 0.0
      %2779 = vmatpush1.xpose.msra.mxu0 0.0
      %2780 = vmatprep.subr.mxu0 0.0
      %2781 = vmatpush1.xpose.msra.mxu0 0.0
      %2782 = vmatprep.subr.mxu0 0.0
      %2783 = vmatpush1.xpose.msra.mxu0 0.0
      %2784 = vmatprep.subr.mxu0 0.0
      %2785 = vmatpush1.xpose.msra.mxu0 0.0
      %2786 = vmatprep.subr.mxu0 0.0
      %2787 = vmatpush1.xpose.msra.mxu0 0.0
      %2788 = vmatprep.subr.mxu0 0.0
      %2789 = vmatpush1.xpose.msra.mxu0 %v2770
      %2790 = vmatprep.subr.mxu0 0.0
      %2791 = vmatpush1.xpose.msra.mxu0 %v2768
      %2792 = vmatprep.subr.mxu0 0.0
      %2793 = vmatpush1.xpose.msra.mxu0 %v2766
      %2794 = vmatprep.subr.mxu0 0.0
      %2795 = vmatpush1.xpose.msra.mxu0 %v2764
      %2796 = vmatprep.subr.mxu0 0.0
      %2797 = vmatpush1.xpose.msra.mxu0 %v2762
      %2798 = vmatprep.subr.mxu0 0.0
      %2799 = vmatpush1.xpose.msra.mxu0 %v2760
      %2800 = vmatprep.subr.mxu0 0.0
      %2801 = vmatpush1.xpose.msra.mxu0 %v2758
      %2802 = vmatprep.subr.mxu0 0.0
      %2803 = vmatpush1.xpose.msra.mxu0 %v2756
      %2804 = vmatprep.subr.mxu0 0.0
      %2805 = vmatpush2.xpose.msra.mxu0 0.0
      %2806 = vmatprep.subr.mxu0 0.0
      %2807 = vmatpush2.xpose.msra.mxu0 0.0
      %2808 = vmatprep.subr.mxu0 0.0
      %2809 = vmatpush2.xpose.msra.mxu0 0.0
      %2810 = vmatprep.subr.mxu0 0.0
      %2811 = vmatpush2.xpose.msra.mxu0 0.0
      %2812 = vmatprep.subr.mxu0 0.0
      %2813 = vmatpush2.xpose.msra.mxu0 0.0
      %2814 = vmatprep.subr.mxu0 0.0
      %2815 = vmatpush2.xpose.msra.mxu0 0.0
      %2816 = vmatprep.subr.mxu0 0.0
      %2817 = vmatpush2.xpose.msra.mxu0 0.0
      %2818 = vmatprep.subr.mxu0 0.0
      %2819 = vmatpush2.xpose.msra.mxu0 0.0
      %2820 = vmatprep.subr.mxu0 0.0
      %2821 = vmatpush2.xpose.msra.mxu0 0.0
      %2822 = vmatprep.subr.mxu0 0.0
      %2823 = vmatpush2.xpose.msra.mxu0 0.0
      %2824 = vmatprep.subr.mxu0 0.0
      %2825 = vmatpush2.xpose.msra.mxu0 0.0
      %2826 = vmatprep.subr.mxu0 0.0
      %2827 = vmatpush2.xpose.msra.mxu0 0.0
      %2828 = vmatprep.subr.mxu0 0.0
      %2829 = vmatpush2.xpose.msra.mxu0 0.0
      %2830 = vmatprep.subr.mxu0 0.0
      %2831 = vmatpush2.xpose.msra.mxu0 0.0
      %2832 = vmatprep.subr.mxu0 0.0
      %2833 = vmatpush2.xpose.msra.mxu0 0.0
      %2834 = vmatprep.subr.mxu0 0.0
      %2835 = vmatpush2.xpose.msra.mxu0 0.0
      %2836 = vmatprep.mubr.f32.mxu0 0.0
      %2837 = vmatmul.mubr.f32.gmra.mxu0 %v2740
      %v2838 = vpop.f32.mrf.mxu0
      %v2839 = vadd.f32 %v2702, %v2838
      %v2840 = vpop.f32.mrf.mxu0
      %2841 = vmatprep.mubr.f32.mxu0 0.0
      %2842 = vmatmul.mubr.f32.gmra.mxu0 %v2742
      %v2843 = vpop.f32.mrf.mxu0
      %v2844 = vadd.f32 %v2707, %v2843
      %v2845 = vpop.f32.mrf.mxu0
      %2846 = vmatprep.mubr.f32.mxu0 0.0
      %2847 = vmatmul.mubr.f32.gmra.mxu0 %v2744
      %v2848 = vpop.f32.mrf.mxu0
      %v2849 = vadd.f32 %v2712, %v2848
      %v2850 = vpop.f32.mrf.mxu0
      %2851 = vmatprep.mubr.f32.mxu0 0.0
      %2852 = vmatmul.mubr.f32.gmra.mxu0 %v2746
      %v2853 = vpop.f32.mrf.mxu0
      %v2854 = vadd.f32 %v2717, %v2853
      %v2855 = vpop.f32.mrf.mxu0
      %2856 = vmatprep.mubr.f32.mxu0 0.0
      %2857 = vmatmul.mubr.f32.gmra.mxu0 %v2748
      %v2858 = vpop.f32.mrf.mxu0
      %v2859 = vadd.f32 %v2722, %v2858
      %v2860 = vpop.f32.mrf.mxu0
      %2861 = vmatprep.mubr.f32.mxu0 0.0
      %2862 = vmatmul.mubr.f32.gmra.mxu0 %v2750
      %v2863 = vpop.f32.mrf.mxu0
      %v2864 = vadd.f32 %v2727, %v2863
      %v2865 = vpop.f32.mrf.mxu0
      %2866 = vmatprep.mubr.f32.mxu0 0.0
      %2867 = vmatmul.mubr.f32.gmra.mxu0 %v2752
      %v2868 = vpop.f32.mrf.mxu0
      %v2869 = vadd.f32 %v2732, %v2868
      %v2870 = vpop.f32.mrf.mxu0
      %2871 = vmatprep.mubr.f32.mxu0 0.0
      %2872 = vmatmul.mubr.f32.gmra.mxu0 %v2754
      %v2873 = vpop.f32.mrf.mxu0
      %v2874 = vadd.f32 %v2737, %v2873
      %v2875 = vpop.f32.mrf.mxu0
      %2876 = vdwg.mxu0
      %v2877 = vsel %vm794, %v2839, -inf
      %2878 = vmax.xlane.f32.xlu0 %v2877
      %v2879 = vpop.xlane.xlu0 %2878
      %v2880 = vsel %vm794, %v2844, -inf
      %2881 = vmax.xlane.f32.xlu0 %v2880
      %v2882 = vpop.xlane.xlu0 %2881
      %v2883 = vsel %vm794, %v2849, -inf
      %2884 = vmax.xlane.f32.xlu0 %v2883
      %v2885 = vpop.xlane.xlu0 %2884
      %v2886 = vsel %vm794, %v2854, -inf
      %2887 = vmax.xlane.f32.xlu0 %v2886
      %v2888 = vpop.xlane.xlu0 %2887
      %v2889 = vsel %vm794, %v2859, -inf
      %2890 = vmax.xlane.f32.xlu0 %v2889
      %v2891 = vpop.xlane.xlu0 %2890
      %v2892 = vsel %vm794, %v2864, -inf
      %2893 = vmax.xlane.f32.xlu0 %v2892
      %v2894 = vpop.xlane.xlu0 %2893
      %v2895 = vsel %vm794, %v2869, -inf
      %2896 = vmax.xlane.f32.xlu0 %v2895
      %v2897 = vpop.xlane.xlu0 %2896
      %v2898 = vsel %vm794, %v2874, -inf
      %2899 = vmax.xlane.f32.xlu0 %v2898
      %v2900 = vpop.xlane.xlu0 %2899
      %v2901 = vsub.f32 %v2839, %v2879
      %v2902 = vsub.f32 %v2844, %v2882
      %v2903 = vsub.f32 %v2849, %v2885
      %v2904 = vsub.f32 %v2854, %v2888
      %v2905 = vsub.f32 %v2859, %v2891
      %v2906 = vsub.f32 %v2864, %v2894
      %v2907 = vsub.f32 %v2869, %v2897
      %v2908 = vsub.f32 %v2874, %v2900
      %v2909 = vmul.f32 %v2901, 1.442695
      %v2910 = vpow.pop %v2909
      %v2911 = vmul.f32 %v2902, 1.442695
      %v2912 = vpow.pop %v2911
      %v2913 = vmul.f32 %v2903, 1.442695
      %v2914 = vpow.pop %v2913
      %v2915 = vmul.f32 %v2904, 1.442695
      %v2916 = vpow.pop %v2915
      %v2917 = vmul.f32 %v2905, 1.442695
      %v2918 = vpow.pop %v2917
      %v2919 = vmul.f32 %v2906, 1.442695
      %v2920 = vpow.pop %v2919
      %v2921 = vmul.f32 %v2907, 1.442695
      %v2922 = vpow.pop %v2921
      %v2923 = vmul.f32 %v2908, 1.442695
      %v2924 = vpow.pop %v2923
      %v2925 = vsel %vm794, %v2910, 0.0
      %2926 = vadd.xlane.f32.xlu0 %v2925
      %v2927 = vpop.xlane.xlu0 %2926
      %v2928 = vsel %vm794, %v2912, 0.0
      %2929 = vadd.xlane.f32.xlu0 %v2928
      %v2930 = vpop.xlane.xlu0 %2929
      %v2931 = vsel %vm794, %v2914, 0.0
      %2932 = vadd.xlane.f32.xlu0 %v2931
      %v2933 = vpop.xlane.xlu0 %2932
      %v2934 = vsel %vm794, %v2916, 0.0
      %2935 = vadd.xlane.f32.xlu0 %v2934
      %v2936 = vpop.xlane.xlu0 %2935
      %v2937 = vsel %vm794, %v2918, 0.0
      %2938 = vadd.xlane.f32.xlu0 %v2937
      %v2939 = vpop.xlane.xlu0 %2938
      %v2940 = vsel %vm794, %v2920, 0.0
      %2941 = vadd.xlane.f32.xlu0 %v2940
      %v2942 = vpop.xlane.xlu0 %2941
      %v2943 = vsel %vm794, %v2922, 0.0
      %2944 = vadd.xlane.f32.xlu0 %v2943
      %v2945 = vpop.xlane.xlu0 %2944
      %v2946 = vsel %vm794, %v2924, 0.0
      %2947 = vadd.xlane.f32.xlu0 %v2946
      %v2948 = vpop.xlane.xlu0 %2947
      %v2949 = vrcp.pop %v2927
      %v2950 = vrcp.pop %v2930
      %v2951 = vrcp.pop %v2933
      %v2952 = vrcp.pop %v2936
      %v2953 = vrcp.pop %v2939
      %v2954 = vrcp.pop %v2942
      %v2955 = vrcp.pop %v2945
      %v2956 = vrcp.pop %v2948
      %v2957 = vmul.f32 %v2910, %v2949
      %v2958 = vmul.f32 %v2912, %v2950
      %v2959 = vmul.f32 %v2914, %v2951
      %v2960 = vmul.f32 %v2916, %v2952
      %v2961 = vmul.f32 %v2918, %v2953
      %v2962 = vmul.f32 %v2920, %v2954
      %v2963 = vmul.f32 %v2922, %v2955
      %v2964 = vmul.f32 %v2924, %v2956
      %v2966 = vsel %vm794, %v2957, 0
      %v2969 = vsel %vm794, %v2958, 0
      %v2972 = vsel %vm794, %v2959, 0
      %v2975 = vsel %vm794, %v2960, 0
      %v2978 = vsel %vm794, %v2961, 0
      %v2981 = vsel %vm794, %v2962, 0
      %v2984 = vsel %vm794, %v2963, 0
      %v2987 = vsel %vm794, %v2964, 0
      %2989 = vmatprep.subr.mxu0 0.0
      %2990 = vmatpush1.msra.mxu0 0.0
      %2991 = vmatprep.subr.mxu0 0.0
      %2992 = vmatpush1.msra.mxu0 0.0
      %2993 = vmatprep.subr.mxu0 0.0
      %2994 = vmatpush1.msra.mxu0 0.0
      %2995 = vmatprep.subr.mxu0 0.0
      %2996 = vmatpush1.msra.mxu0 0.0
      %2997 = vmatprep.subr.mxu0 0.0
      %2998 = vmatpush1.msra.mxu0 0.0
      %2999 = vmatprep.subr.mxu0 0.0
      %3000 = vmatpush1.msra.mxu0 0.0
      %3001 = vmatprep.subr.mxu0 0.0
      %3002 = vmatpush1.msra.mxu0 0.0
      %3003 = vmatprep.subr.mxu0 0.0
      %3004 = vmatpush1.msra.mxu0 0.0
      %3005 = vmatprep.subr.mxu0 0.0
      %3006 = vmatpush1.msra.mxu0 %v483
      %3007 = vmatprep.subr.mxu0 0.0
      %3008 = vmatpush1.msra.mxu0 %v481
      %3009 = vmatprep.subr.mxu0 0.0
      %3010 = vmatpush1.msra.mxu0 %v479
      %3011 = vmatprep.subr.mxu0 0.0
      %3012 = vmatpush1.msra.mxu0 %v477
      %3013 = vmatprep.subr.mxu0 0.0
      %3014 = vmatpush1.msra.mxu0 %v475
      %3015 = vmatprep.subr.mxu0 0.0
      %3016 = vmatpush1.msra.mxu0 %v473
      %3017 = vmatprep.subr.mxu0 0.0
      %3018 = vmatpush1.msra.mxu0 %v471
      %3019 = vmatprep.subr.mxu0 0.0
      %3020 = vmatpush1.msra.mxu0 %v469
      %3021 = vmatprep.subr.mxu0 0.0
      %3022 = vmatpush2.msra.mxu0 0.0
      %3023 = vmatprep.subr.mxu0 0.0
      %3024 = vmatpush2.msra.mxu0 0.0
      %3025 = vmatprep.subr.mxu0 0.0
      %3026 = vmatpush2.msra.mxu0 0.0
      %3027 = vmatprep.subr.mxu0 0.0
      %3028 = vmatpush2.msra.mxu0 0.0
      %3029 = vmatprep.subr.mxu0 0.0
      %3030 = vmatpush2.msra.mxu0 0.0
      %3031 = vmatprep.subr.mxu0 0.0
      %3032 = vmatpush2.msra.mxu0 0.0
      %3033 = vmatprep.subr.mxu0 0.0
      %3034 = vmatpush2.msra.mxu0 0.0
      %3035 = vmatprep.subr.mxu0 0.0
      %3036 = vmatpush2.msra.mxu0 0.0
      %3037 = vmatprep.subr.mxu0 0.0
      %3038 = vmatpush2.msra.mxu0 0.0
      %3039 = vmatprep.subr.mxu0 0.0
      %3040 = vmatpush2.msra.mxu0 0.0
      %3041 = vmatprep.subr.mxu0 0.0
      %3042 = vmatpush2.msra.mxu0 0.0
      %3043 = vmatprep.subr.mxu0 0.0
      %3044 = vmatpush2.msra.mxu0 0.0
      %3045 = vmatprep.subr.mxu0 0.0
      %3046 = vmatpush2.msra.mxu0 0.0
      %3047 = vmatprep.subr.mxu0 0.0
      %3048 = vmatpush2.msra.mxu0 0.0
      %3049 = vmatprep.subr.mxu0 0.0
      %3050 = vmatpush2.msra.mxu0 0.0
      %3051 = vmatprep.subr.mxu0 0.0
      %3052 = vmatpush2.msra.mxu0 0.0
      %3053 = vmatprep.mubr.f32.mxu0 0.0
      %3054 = vmatmul.mubr.f32.gmra.mxu0 %v2966
      %v3055 = vpop.f32.mrf.mxu0
      %v3056 = vadd.f32 0.0, %v3055
      %v3057 = vpop.f32.mrf.mxu0
      %3058 = vmatprep.mubr.f32.mxu0 0.0
      %3059 = vmatmul.mubr.f32.gmra.mxu0 %v2969
      %v3060 = vpop.f32.mrf.mxu0
      %v3061 = vadd.f32 0.0, %v3060
      %v3062 = vpop.f32.mrf.mxu0
      %3063 = vmatprep.mubr.f32.mxu0 0.0
      %3064 = vmatmul.mubr.f32.gmra.mxu0 %v2972
      %v3065 = vpop.f32.mrf.mxu0
      %v3066 = vadd.f32 0.0, %v3065
      %v3067 = vpop.f32.mrf.mxu0
      %3068 = vmatprep.mubr.f32.mxu0 0.0
      %3069 = vmatmul.mubr.f32.gmra.mxu0 %v2975
      %v3070 = vpop.f32.mrf.mxu0
      %v3071 = vadd.f32 0.0, %v3070
      %v3072 = vpop.f32.mrf.mxu0
      %3073 = vmatprep.mubr.f32.mxu0 0.0
      %3074 = vmatmul.mubr.f32.gmra.mxu0 %v2978
      %v3075 = vpop.f32.mrf.mxu0
      %v3076 = vadd.f32 0.0, %v3075
      %v3077 = vpop.f32.mrf.mxu0
      %3078 = vmatprep.mubr.f32.mxu0 0.0
      %3079 = vmatmul.mubr.f32.gmra.mxu0 %v2981
      %v3080 = vpop.f32.mrf.mxu0
      %v3081 = vadd.f32 0.0, %v3080
      %v3082 = vpop.f32.mrf.mxu0
      %3083 = vmatprep.mubr.f32.mxu0 0.0
      %3084 = vmatmul.mubr.f32.gmra.mxu0 %v2984
      %v3085 = vpop.f32.mrf.mxu0
      %v3086 = vadd.f32 0.0, %v3085
      %v3087 = vpop.f32.mrf.mxu0
      %3088 = vmatprep.mubr.f32.mxu0 0.0
      %3089 = vmatmul.mubr.f32.gmra.mxu0 %v2987
      %v3090 = vpop.f32.mrf.mxu0
      %v3091 = vadd.f32 0.0, %v3090
      %v3092 = vpop.f32.mrf.mxu0
      %3093 = vdwg.mxu0
      %3102 = vrot.lane.b32.xlu0 %v1882, 8
      %v3103 = vpop.permute.xlu0 %3102
      %3104 = vrot.lane.b32.xlu0 %v1887, 8
      %v3105 = vpop.permute.xlu0 %3104
      %3106 = vrot.lane.b32.xlu0 %v1892, 8
      %v3107 = vpop.permute.xlu0 %3106
      %3108 = vrot.lane.b32.xlu0 %v1897, 8
      %v3109 = vpop.permute.xlu0 %3108
      %3110 = vrot.lane.b32.xlu0 %v1902, 8
      %v3111 = vpop.permute.xlu0 %3110
      %3112 = vrot.lane.b32.xlu0 %v1907, 8
      %v3113 = vpop.permute.xlu0 %3112
      %3114 = vrot.lane.b32.xlu0 %v1912, 8
      %v3115 = vpop.permute.xlu0 %3114
      %3116 = vrot.lane.b32.xlu0 %v1917, 8
      %v3117 = vpop.permute.xlu0 %3116
      %3134 = vrot.lane.b32.xlu0 %v2469, 16
      %v3135 = vpop.permute.xlu0 %3134
      %3136 = vrot.lane.b32.xlu0 %v2474, 16
      %v3137 = vpop.permute.xlu0 %3136
      %3138 = vrot.lane.b32.xlu0 %v2479, 16
      %v3139 = vpop.permute.xlu0 %3138
      %3140 = vrot.lane.b32.xlu0 %v2484, 16
      %v3141 = vpop.permute.xlu0 %3140
      %3142 = vrot.lane.b32.xlu0 %v2489, 16
      %v3143 = vpop.permute.xlu0 %3142
      %3144 = vrot.lane.b32.xlu0 %v2494, 16
      %v3145 = vpop.permute.xlu0 %3144
      %3146 = vrot.lane.b32.xlu0 %v2499, 16
      %v3147 = vpop.permute.xlu0 %3146
      %3148 = vrot.lane.b32.xlu0 %v2504, 16
      %v3149 = vpop.permute.xlu0 %3148
      %3166 = vrot.lane.b32.xlu0 %v3056, 24
      %v3167 = vpop.permute.xlu0 %3166
      %3168 = vrot.lane.b32.xlu0 %v3061, 24
      %v3169 = vpop.permute.xlu0 %3168
      %3170 = vrot.lane.b32.xlu0 %v3066, 24
      %v3171 = vpop.permute.xlu0 %3170
      %3172 = vrot.lane.b32.xlu0 %v3071, 24
      %v3173 = vpop.permute.xlu0 %3172
      %3174 = vrot.lane.b32.xlu0 %v3076, 24
      %v3175 = vpop.permute.xlu0 %3174
      %3176 = vrot.lane.b32.xlu0 %v3081, 24
      %v3177 = vpop.permute.xlu0 %3176
      %3178 = vrot.lane.b32.xlu0 %v3086, 24
      %v3179 = vpop.permute.xlu0 %3178
      %3180 = vrot.lane.b32.xlu0 %v3091, 24
      %v3181 = vpop.permute.xlu0 %3180
      %v3190 = vsel %vm732, %v1295, %v3103
      %v3191 = vsel %vm732, %v1300, %v3105
      %v3192 = vsel %vm732, %v1305, %v3107
      %v3193 = vsel %vm732, %v1310, %v3109
      %v3194 = vsel %vm732, %v1315, %v3111
      %v3195 = vsel %vm732, %v1320, %v3113
      %v3196 = vsel %vm732, %v1325, %v3115
      %v3197 = vsel %vm732, %v1330, %v3117
      %v3198 = vsel %vm741, %v3190, %v3135
      %v3199 = vsel %vm741, %v3191, %v3137
      %v3200 = vsel %vm741, %v3192, %v3139
      %v3201 = vsel %vm741, %v3193, %v3141
      %v3202 = vsel %vm741, %v3194, %v3143
      %v3203 = vsel %vm741, %v3195, %v3145
      %v3204 = vsel %vm741, %v3196, %v3147
      %v3205 = vsel %vm741, %v3197, %v3149
      %v3206 = vsel %vm750, %v3198, %v3167
      %v3207 = vsel %vm750, %v3199, %v3169
      %v3208 = vsel %vm750, %v3200, %v3171
      %v3209 = vsel %vm750, %v3201, %v3173
      %v3210 = vsel %vm750, %v3202, %v3175
      %v3211 = vsel %vm750, %v3203, %v3177
      %v3212 = vsel %vm750, %v3204, %v3179
      %v3213 = vsel %vm750, %v3205, %v3181
      %3214 = vst.msk [vmem:[%s197] sm:$0xff] %vm210, %v3206
      %3215 = vst.msk [vmem:[%s197 + $0x8] sm:$0xff] %vm210, %v3207
      %3216 = vst.msk [vmem:[%s197 + $0x10] sm:$0xff] %vm210, %v3208
      %3217 = vst.msk [vmem:[%s197 + $0x18] sm:$0xff] %vm210, %v3209
      %3218 = vst.msk [vmem:[%s197 + $0x20] sm:$0xff] %vm210, %v3210
      %3219 = vst.msk [vmem:[%s197 + $0x28] sm:$0xff] %vm210, %v3211
      %3220 = vst.msk [vmem:[%s197 + $0x30] sm:$0xff] %vm210, %v3212
      %3221 = vst.msk [vmem:[%s197 + $0x38] sm:$0xff] %vm210, %v3213
      %p3222 = scmp.lt.s32.totalorder %s15, 1
      %s3223 = scalar_select %p3222, %s15, 1
      %s3224 = smul.addr %s3223, 8
      %s3225 = smul.addr %s3224, 8
      %s3226 = scalar_lea.vmem %s4, %s3225
      // Predicated region
      $region37: #{tpu_custom_call.1} parent=35 // pred_check
        %p3227 = pneg %p122
      $region38: #{tpu_custom_call.1} parent=35 // pred_check_branch
        %3229 = sbr.rel (%p3227) target = $region40
      $region39: #{tpu_custom_call.1} parent=35 // pred_region
        _
      $region40: #{tpu_custom_call.1} parent=35 // pred_fallthru
        _
    $region36: #{tpu_custom_call.1} parent=5 // pred_fallthru
      _
    %p3230 = scmp.le.s32.totalorder 2, %s10
    // Predicated region
    $region41: #{tpu_custom_call.1} parent=5 // pred_check
      %p3231 = pneg %p3230
    $region42: #{tpu_custom_call.1} parent=5 // pred_check_branch
      %3233 = sbr.rel (%p3231) target = $region44
    $region43: #{tpu_custom_call.1} parent=5 // pred_region
      %s3234 = ssub.s32 %s10, 2
      // Predicated region
      $region45: #{tpu_custom_call.1} parent=43 // pred_check
        %p3235 = pneg %p128
      $region46: #{tpu_custom_call.1} parent=43 // pred_check_branch
        %3237 = sbr.rel (%p3235) target = $region48
      $region47: #{tpu_custom_call.1} parent=43 // pred_region
        %p3238 = scmp.lt.s32.totalorder %s16, 1
        %s3239 = scalar_select %p3238, %s16, 1
        %s3240 = smul.addr %s3239, 8
        %s3241 = smul.addr %s3240, 8
        %s3242 = scalar_lea.vmem %s4, %s3241
      $region48: #{tpu_custom_call.1} parent=43 // pred_fallthru
        _
    $region44: #{tpu_custom_call.1} parent=5 // pred_fallthru
      _
  $region6: #{tpu_custom_call.1} parent=0 // loop_footer
    %s14 = sadd.s32 1, %s10
  $region7: #{tpu_custom_call.1} parent=0 // loop_footer_branch
    %9 = sbr.rel target = $region3
  $region8: #{tpu_custom_call.1} parent=0 // loop_exit
    _

</llo_original>
